<compile_context>
chip_gen: v7x
topology: tpu7x:2x2x1
jax: 0.10.0
libtpu: 0.0.40
codegen_flags: <defaults>
</compile_context>

<pallas_src>
import math
import functools
import jax
import jax.numpy as jnp
from jax.experimental import pallas as pl
from jax.experimental.pallas import tpu as pltpu

F32 = jnp.float32
PARAM_DTYPE = jnp.bfloat16  # weights / activations; accumulation stays f32
APPROX_RECIP = True         # softmax normalizer via EUP vrcp (fine for inference)


# ---------------------------------------------------------------------------
# hardware-gated tiling / VMEM limits
# ---------------------------------------------------------------------------

@functools.lru_cache(maxsize=None)
def _hw():
    try:
        cap = pltpu.get_tpu_info().vmem_capacity_bytes
    except Exception:  # pragma: no cover - conservative fallback
        cap = 64 * 1024 * 1024
    if cap > 64 * 1024 * 1024:        # v5e / v6e: 128 MiB physical VMEM
        return dict(row_tile=512, vmem_limit=64 * 1024 * 1024)
    return dict(row_tile=512, vmem_limit=32 * 1024 * 1024)  # v7x-class (64 MiB/TC)


def _row_tile(M):
    rt = _hw()['row_tile']
    return M if M <= rt else rt  # ragged last block fine (row-independent work)


def _seq_tile(T, desired=256):
    if T <= desired:
        return T
    t = desired
    while t >= 16:
        if T % t == 0:
            return t
        t -= 16
    return T  # no aligned divisor: one full-sequence tile


def _hidden_tile(Hd, desired=512):
    # must divide Hd exactly (it is a contraction dim of the 2nd MLP matmul)
    if Hd <= desired:
        return Hd
    t = desired
    while t >= 128:
        if Hd % t == 0:
            return t
        t -= 128
    return Hd


def _cparams(*sems):
    return pltpu.CompilerParams(dimension_semantics=sems,
                                vmem_limit_bytes=_hw()['vmem_limit'])


def _ln_f32(x, g, b):
    mean = jnp.mean(x, axis=-1, keepdims=True)
    var = jnp.mean(jnp.square(x - mean), axis=-1, keepdims=True)
    xn = (x - mean) * jax.lax.rsqrt(var + 1e-5)
    return xn * g + b


# ---------------------------------------------------------------------------
# fused LayerNorm + QKV projection -> (3, B*T, C) (attention-ready, no XLA split)
# ---------------------------------------------------------------------------

def _ln_qkv_kernel(x_ref, g_ref, b_ref, w_ref, bias_ref, o_ref):
    C = x_ref.shape[1]
    xn = _ln_f32(x_ref[...].astype(F32), g_ref[...].astype(F32),
                 b_ref[...].astype(F32))
    acc = jnp.dot(xn.astype(w_ref.dtype), w_ref[...],
                  preferred_element_type=F32) + bias_ref[...].astype(F32)
    for s in range(3):                       # split Q|K|V in VMEM (static slices)
        o_ref[s] = acc[:, s * C:(s + 1) * C].astype(o_ref.dtype)


def ln_qkv(x2d, gamma, beta, w, b):
    # TODO(synk): for very large C (GPT-2 XL+) also tile the 3C output dim.
    M, C = x2d.shape
    tm = _row_tile(M)
    return pl.pallas_call(
        _ln_qkv_kernel,
        out_shape=jax.ShapeDtypeStruct((3, M, C), x2d.dtype),
        grid=(pl.cdiv(M, tm),),
        in_specs=[pl.BlockSpec((tm, C), lambda i: (i, 0)),
                  pl.BlockSpec((1, C), lambda i: (0, 0)),
                  pl.BlockSpec((1, C), lambda i: (0, 0)),
                  pl.BlockSpec((C, 3 * C), lambda i: (0, 0)),
                  pl.BlockSpec((1, 3 * C), lambda i: (0, 0))],
        out_specs=pl.BlockSpec((3, tm, C), lambda i: (0, i, 0)),
        compiler_params=_cparams("parallel"),
    )(x2d, gamma.reshape(1, C), beta.reshape(1, C), w, b.reshape(1, 3 * C))


# ---------------------------------------------------------------------------
# Linear + residual-add epilogue  (attention output projection)
# ---------------------------------------------------------------------------

def _linear_residual_kernel(x_ref, w_ref, bias_ref, r_ref, o_ref):
    acc = jnp.dot(x_ref[...], w_ref[...], preferred_element_type=F32)
    o_ref[...] = (acc + bias_ref[...].astype(F32)
                  + r_ref[...].astype(F32)).astype(o_ref.dtype)


def linear_residual(x2d, w, b, resid2d):
    M, K = x2d.shape
    N = w.shape[1]
    tm = _row_tile(M)
    return pl.pallas_call(
        _linear_residual_kernel,
        out_shape=jax.ShapeDtypeStruct((M, N), resid2d.dtype),
        grid=(pl.cdiv(M, tm),),
        in_specs=[pl.BlockSpec((tm, K), lambda i: (i, 0)),
                  pl.BlockSpec((K, N), lambda i: (0, 0)),
                  pl.BlockSpec((1, N), lambda i: (0, 0)),
                  pl.BlockSpec((tm, N), lambda i: (i, 0))],
        out_specs=pl.BlockSpec((tm, N), lambda i: (i, 0)),
        compiler_params=_cparams("parallel"),
    )(x2d, w, b.reshape(1, N), resid2d)


# ---------------------------------------------------------------------------
# fused LayerNorm + MLP (gelu-tanh) + residual-add, hidden dim tiled
# ---------------------------------------------------------------------------

def _ln_mlp_residual_kernel(x_ref, g_ref, b_ref, w1_ref, b1_ref, w2_ref, b2_ref,
                            o_ref, xn_ref, acc_ref):
    j = pl.program_id(1)

    @pl.when(j == 0)
    def _init():
        xn = _ln_f32(x_ref[...].astype(F32), g_ref[...].astype(F32),
                     b_ref[...].astype(F32))
        xn_ref[...] = xn.astype(xn_ref.dtype)
        acc_ref[...] = jnp.zeros_like(acc_ref)

    h = jnp.dot(xn_ref[...], w1_ref[...],
                preferred_element_type=F32) + b1_ref[...].astype(F32)
    c = math.sqrt(2.0 / math.pi)
    h = 0.5 * h * (1.0 + jnp.tanh(c * (h + 0.044715 * h * h * h)))  # EUP tanh
    acc_ref[...] += jnp.dot(h.astype(w2_ref.dtype), w2_ref[...],
                            preferred_element_type=F32)

    @pl.when(j == pl.num_programs(1) - 1)
    def _finalize():
        o_ref[...] = (x_ref[...].astype(F32) + acc_ref[...]
                      + b2_ref[...].astype(F32)).astype(o_ref.dtype)


def ln_mlp_residual(x2d, gamma, beta, w1, b1, w2, b2):
    M, C = x2d.shape
    Hd = w1.shape[1]
    tm = _row_tile(M)
    thd = _hidden_tile(Hd)
    return pl.pallas_call(
        _ln_mlp_residual_kernel,
        out_shape=jax.ShapeDtypeStruct((M, C), x2d.dtype),
        grid=(pl.cdiv(M, tm), Hd // thd),
        in_specs=[pl.BlockSpec((tm, C), lambda i, j: (i, 0)),
                  pl.BlockSpec((1, C), lambda i, j: (0, 0)),
                  pl.BlockSpec((1, C), lambda i, j: (0, 0)),
                  pl.BlockSpec((C, thd), lambda i, j: (0, j)),
                  pl.BlockSpec((1, thd), lambda i, j: (0, j)),
                  pl.BlockSpec((thd, C), lambda i, j: (j, 0)),
                  pl.BlockSpec((1, C), lambda i, j: (0, 0))],
        out_specs=pl.BlockSpec((tm, C), lambda i, j: (i, 0)),
        scratch_shapes=[pltpu.VMEM((tm, C), w1.dtype),   # cached ln(x)
                        pltpu.VMEM((tm, C), F32)],       # f32 accumulator
        compiler_params=_cparams("parallel", "arbitrary"),
    )(x2d, gamma.reshape(1, C), beta.reshape(1, C),
      w1, b1.reshape(1, Hd), w2, b2.reshape(1, C))


# ---------------------------------------------------------------------------
# Flash-style causal self-attention over (3, B, T, C), heads looped in-kernel
# ---------------------------------------------------------------------------

def _flash_attn_kernel(q_ref, k_ref, v_ref, o_ref, m_ref, l_ref, acc_ref, *,
                       n_head, scale):
    qi = pl.program_id(1)
    ki = pl.program_id(2)
    tq = q_ref.shape[2]
    tk = k_ref.shape[2]
    C = q_ref.shape[3]
    Dh = C // n_head

    @pl.when(ki == 0)
    def _init():
        m_ref[...] = jnp.full_like(m_ref, -1e30)  # large finite, not -inf
        l_ref[...] = jnp.zeros_like(l_ref)
        acc_ref[...] = jnp.zeros_like(acc_ref)

    def _attend(masked):
        # fold 1/sqrt(Dh) into q once per step instead of scaling s per head
        q = q_ref[...][0, 0] * jnp.asarray(scale, q_ref.dtype)   # (tq, C)
        k = k_ref[...][0, 0]
        v = v_ref[...][0, 0]
        if masked:  # causal mask only needed on the diagonal tile
            row = jax.lax.broadcasted_iota(jnp.int32, (tq, tk), 0)
            col = jax.lax.broadcasted_iota(jnp.int32, (tq, tk), 1)
            bias = jnp.where(col <= row, 0.0, -1e30)
        for h in range(n_head):
            hs = slice(h * Dh, (h + 1) * Dh)
            s = jax.lax.dot_general(q[:, hs], k[:, hs], (((1,), (1,)), ((), ())),
                                    preferred_element_type=F32)
            if masked:
                s = s + bias
            m_prev = m_ref[:, h:h + 1]
            m_new = jnp.maximum(m_prev, jnp.max(s, axis=-1, keepdims=True))
            alpha = jnp.exp(m_prev - m_new)
            p = jnp.exp(s - m_new)
            l_ref[:, h:h + 1] = alpha * l_ref[:, h:h + 1] + jnp.sum(
                p, axis=-1, keepdims=True)
            acc_ref[:, hs] = alpha * acc_ref[:, hs] + jnp.dot(
                p.astype(v.dtype), v[:, hs], preferred_element_type=F32)
            m_ref[:, h:h + 1] = m_new

    @pl.when(ki < qi)       # fully visible kv tile: no mask work
    def _off_diag():
        _attend(False)

    @pl.when(ki == qi)      # diagonal tile: apply causal mask
    def _diag():
        _attend(True)

    @pl.when(ki == pl.num_programs(2) - 1)
    def _finalize():
        cols = []
        for h in range(n_head):
            hs = slice(h * Dh, (h + 1) * Dh)
            inv = pl.reciprocal(l_ref[:, h:h + 1], approx=APPROX_RECIP)
            cols.append(acc_ref[:, hs] * inv)
        o_ref[0] = jnp.concatenate(cols, axis=-1).astype(o_ref.dtype)


def flash_causal_attention(qkv, *, n_head):
    # qkv: (3, B, T, C) -> output (B, T, C); no head transposes in XLA.
    _, B, T, C = qkv.shape
    Dh = C // n_head
    t = _seq_tile(T)
    nt = pl.cdiv(T, t)
    kernel = functools.partial(_flash_attn_kernel, n_head=n_head,
                               scale=1.0 / math.sqrt(Dh))
    return pl.pallas_call(
        kernel,
        out_shape=jax.ShapeDtypeStruct((B, T, C), qkv.dtype),
        grid=(B, nt, nt),
        in_specs=[
            pl.BlockSpec((1, 1, t, C), lambda b, qi, ki: (0, b, qi, 0)),
            # clamp kv block index: causally-skipped tiles reuse resident block
            pl.BlockSpec((1, 1, t, C),
                         lambda b, qi, ki: (1, b, jnp.minimum(ki, qi), 0)),
            pl.BlockSpec((1, 1, t, C),
                         lambda b, qi, ki: (2, b, jnp.minimum(ki, qi), 0))],
        out_specs=pl.BlockSpec((1, t, C), lambda b, qi, ki: (b, qi, 0)),
        scratch_shapes=[pltpu.VMEM((t, n_head), F32),   # running max per head
                        pltpu.VMEM((t, n_head), F32),   # running denom per head
                        pltpu.VMEM((t, C), F32)],       # accumulator (all heads)
        compiler_params=_cparams("parallel", "parallel", "arbitrary"),
    )(qkv, qkv, qkv)


# ---------------------------------------------------------------------------
# fused final LayerNorm + weight-tied lm_head (logits = ln_f(x) @ wte^T)
# ---------------------------------------------------------------------------

def _ln_lmhead_kernel(x_ref, g_ref, b_ref, w_ref, o_ref):
    xn = _ln_f32(x_ref[...].astype(F32), g_ref[...].astype(F32),
                 b_ref[...].astype(F32))
    # wte tile is (tv, C); contract on C of both -> no transposed copy in HBM.
    o_ref[...] = jax.lax.dot_general(
        xn.astype(w_ref.dtype), w_ref[...], (((1,), (1,)), ((), ())),
        preferred_element_type=F32).astype(o_ref.dtype)


def ln_lm_head(x2d, gamma, beta, wte, *, tile_v=512, tile_m=1024):
    M, C = x2d.shape
    V = wte.shape[0]
    tm = min(tile_m, M)            # large row tile: fewer full wte re-streams
    tv = min(tile_v, V)
    return pl.pallas_call(
        _ln_lmhead_kernel,
        out_shape=jax.ShapeDtypeStruct((M, V), jnp.float32),
        grid=(pl.cdiv(M, tm), pl.cdiv(V, tv)),   # ragged vocab tile handled
        in_specs=[pl.BlockSpec((tm, C), lambda i, j: (i, 0)),
                  pl.BlockSpec((1, C), lambda i, j: (0, 0)),
                  pl.BlockSpec((1, C), lambda i, j: (0, 0)),
                  pl.BlockSpec((tv, C), lambda i, j: (j, 0))],
        out_specs=pl.BlockSpec((tm, tv), lambda i, j: (i, j)),
        compiler_params=_cparams("parallel", "parallel"),
    )(x2d, gamma.reshape(1, C), beta.reshape(1, C), wte)


# ---------------------------------------------------------------------------
# Parameter init (deterministic, matches torch shapes / init std); bf16 weights
# ---------------------------------------------------------------------------

def init_params(key, cfg, dtype=PARAM_DTYPE):
    C, V, BS, L = cfg['n_embd'], cfg['vocab_size'], cfg['block_size'], cfg['n_layer']
    std = 0.02
    proj_std = 0.02 * (2 * L) ** -0.5
    keys = iter(jax.random.split(key, 2 + 4 * L))

    def nrm(shape, s):
        return (jax.random.normal(next(keys), shape, F32) * s).astype(dtype)

    params = {
        'wte': nrm((V, C), std),
        'wpe': nrm((BS, C), std),
        'ln_f_g': jnp.ones((C,), F32), 'ln_f_b': jnp.zeros((C,), F32),
        'blocks': [],
    }
    for _ in range(L):
        blk = {
            'ln1_g': jnp.ones((C,), F32), 'ln1_b': jnp.zeros((C,), F32),
            'attn_w': nrm((C, 3 * C), std),
            'attn_b': jnp.zeros((3 * C,), F32),
            'attn_proj_w': nrm((C, C), proj_std),
            'attn_proj_b': jnp.zeros((C,), F32),
            'ln2_g': jnp.ones((C,), F32), 'ln2_b': jnp.zeros((C,), F32),
            'fc_w': nrm((C, 4 * C), std),
            'fc_b': jnp.zeros((4 * C,), F32),
            'proj_w': nrm((4 * C, C), proj_std),
            'proj_b': jnp.zeros((C,), F32),
        }
        params['blocks'].append(blk)
    return params


# ---------------------------------------------------------------------------
# GPT forward (embedding gather in XLA, everything else in Pallas kernels)
# ---------------------------------------------------------------------------

def gpt_forward(idx, params, cfg):
    B, T = idx.shape
    C, H = cfg['n_embd'], cfg['n_head']
    V = cfg['vocab_size']
    assert T <= cfg['block_size']

    tok_emb = jnp.take(params['wte'], idx, axis=0)            # (B, T, C)
    pos_emb = params['wpe'][:T][None, :, :]                    # (1, T, C)
    x = (tok_emb + pos_emb).reshape(B * T, C)

    for blk in params['blocks']:
        # --- attention sub-block: x = x + proj(attn(ln1(x))) ---
        qkv = ln_qkv(x, blk['ln1_g'], blk['ln1_b'],
                     blk['attn_w'], blk['attn_b'])             # (3, B*T, C)
        y = flash_causal_attention(qkv.reshape(3, B, T, C), n_head=H)  # (B, T, C)
        x = linear_residual(y.reshape(B * T, C),
                            blk['attn_proj_w'], blk['attn_proj_b'], x)

        # --- MLP sub-block: x = x + mlp(ln2(x)) ---
        x = ln_mlp_residual(x, blk['ln2_g'], blk['ln2_b'],
                            blk['fc_w'], blk['fc_b'],
                            blk['proj_w'], blk['proj_b'])

    logits = ln_lm_head(x, params['ln_f_g'], params['ln_f_b'], params['wte'])
    return logits.reshape(B, T, V)
    # TODO(synk): cross-entropy loss path (targets is not None) not implemented.


# ---------------------------------------------------------------------------
if __name__ == "__main__":
    cfg = dict(block_size=16, vocab_size=256, n_layer=2, n_head=4, n_embd=32)
    key = jax.random.PRNGKey(0)
    k_param, k_idx = jax.random.split(key)
    params = init_params(k_param, cfg)

    B, T = 2, 8
    idx = jax.random.randint(k_idx, (B, T), 0, cfg['vocab_size'], dtype=jnp.int32)

    fwd = jax.jit(lambda i, p: gpt_forward(i, p, cfg))
    logits = jax.block_until_ready(fwd(idx, params))
    assert logits.shape == (B, T, cfg['vocab_size'])
    assert bool(jnp.all(jnp.isfinite(logits.astype(jnp.float32))))
    print("KERNEL_OK")
</pallas_src>

<mosaic_0001>
module attributes {stable_mosaic.version = 11 : i64} {
  func.func @_linear_residual_kernel(%arg0: i32, %arg1: memref<16x32xbf16, #tpu.memory_space<vmem>>, %arg2: memref<32x32xbf16, #tpu.memory_space<vmem>>, %arg3: memref<1x32xf32, #tpu.memory_space<vmem>>, %arg4: memref<16x32xbf16, #tpu.memory_space<vmem>>, %arg5: memref<16x32xbf16, #tpu.memory_space<vmem>>) attributes {dimension_semantics = [#tpu.dimension_semantics<parallel>], iteration_bounds = array<i64: 1>, scalar_prefetch = 0 : i64, scratch_operands = 0 : i64, tpu.core_type = #tpu.core_type<tc>, window_params = [{transform_indices = @transform_0, window_bounds = array<i64: 16, 32>}, {pipeline_mode = #tpu.pipeline_mode<synchronous>, transform_indices = @transform_1, window_bounds = array<i64: 32, 32>}, {pipeline_mode = #tpu.pipeline_mode<synchronous>, transform_indices = @transform_2, window_bounds = array<i64: 1, 32>}, {transform_indices = @transform_3, window_bounds = array<i64: 16, 32>}, {transform_indices = @transform_4, window_bounds = array<i64: 16, 32>}]} {
    %c0 = arith.constant 0 : index
    %c0_0 = arith.constant 0 : index
    %0 = vector.load %arg1[%c0, %c0_0] : memref<16x32xbf16, #tpu.memory_space<vmem>>, vector<16x32xbf16>
    %c0_1 = arith.constant 0 : index
    %c0_2 = arith.constant 0 : index
    %1 = vector.load %arg2[%c0_1, %c0_2] : memref<32x32xbf16, #tpu.memory_space<vmem>>, vector<32x32xbf16>
    %cst = arith.constant dense<0.000000e+00> : vector<16x32xf32>
    %2 = tpu.matmul %0, %1, %cst {dimension_numbers = #tpu.dot_dimension_numbers<[1], [0], [0], [1], [0, 0, 1, 1], [], []>} : vector<16x32xbf16>, vector<32x32xbf16>, vector<16x32xf32> -> vector<16x32xf32>
    %c0_3 = arith.constant 0 : index
    %c0_4 = arith.constant 0 : index
    %3 = vector.load %arg3[%c0_3, %c0_4] : memref<1x32xf32, #tpu.memory_space<vmem>>, vector<1x32xf32>
    %4 = vector.broadcast %3 : vector<1x32xf32> to vector<16x32xf32>
    %5 = arith.addf %2, %4 : vector<16x32xf32>
    %c0_5 = arith.constant 0 : index
    %c0_6 = arith.constant 0 : index
    %6 = vector.load %arg4[%c0_5, %c0_6] : memref<16x32xbf16, #tpu.memory_space<vmem>>, vector<16x32xbf16>
    %7 = arith.extf %6 : vector<16x32xbf16> to vector<16x32xf32>
    %8 = arith.addf %5, %7 : vector<16x32xf32>
    %9 = arith.truncf %8 : vector<16x32xf32> to vector<16x32xbf16>
    %c0_7 = arith.constant 0 : index
    %c0_8 = arith.constant 0 : index
    %10 = vector.load %arg5[%c0_7, %c0_8] : memref<16x32xbf16, #tpu.memory_space<vmem>>, vector<16x32xbf16>
    tpu.vector_store %arg5[%c0_7, %c0_8], %9 {strides = array<i32>} : memref<16x32xbf16, #tpu.memory_space<vmem>>, vector<16x32xbf16>,
    return
  }
  func.func @transform_0(%arg0: i32) -> (i32, i32) {
    %c0_i32 = arith.constant 0 : i32
    %c0_i32_0 = arith.constant 0 : i32
    return %arg0, %c0_i32 : i32, i32
  }
  func.func @transform_1(%arg0: i32) -> (i32, i32) {
    %c0_i32 = arith.constant 0 : i32
    %c0_i32_0 = arith.constant 0 : i32
    %c0_i32_1 = arith.constant 0 : i32
    return %c0_i32, %c0_i32_0 : i32, i32
  }
  func.func @transform_2(%arg0: i32) -> (i32, i32) {
    %c0_i32 = arith.constant 0 : i32
    %c0_i32_0 = arith.constant 0 : i32
    %c0_i32_1 = arith.constant 0 : i32
    return %c0_i32, %c0_i32_0 : i32, i32
  }
  func.func @transform_3(%arg0: i32) -> (i32, i32) {
    %c0_i32 = arith.constant 0 : i32
    %c0_i32_0 = arith.constant 0 : i32
    return %arg0, %c0_i32 : i32, i32
  }
  func.func @transform_4(%arg0: i32) -> (i32, i32) {
    %c0_i32 = arith.constant 0 : i32
    %c0_i32_0 = arith.constant 0 : i32
    return %arg0, %c0_i32 : i32, i32
  }
}

module attributes {stable_mosaic.version = 11 : i64} {
  func.func @_ln_qkv_kernel(%arg0: i32, %arg1: memref<16x32xbf16, #tpu.memory_space<vmem>>, %arg2: memref<1x32xf32, #tpu.memory_space<vmem>>, %arg3: memref<1x32xf32, #tpu.memory_space<vmem>>, %arg4: memref<32x96xbf16, #tpu.memory_space<vmem>>, %arg5: memref<1x96xf32, #tpu.memory_space<vmem>>, %arg6: memref<3x16x32xbf16, #tpu.memory_space<vmem>>) attributes {dimension_semantics = [#tpu.dimension_semantics<parallel>], iteration_bounds = array<i64: 1>, scalar_prefetch = 0 : i64, scratch_operands = 0 : i64, tpu.core_type = #tpu.core_type<tc>, window_params = [{transform_indices = @transform_0, window_bounds = array<i64: 16, 32>}, {pipeline_mode = #tpu.pipeline_mode<synchronous>, transform_indices = @transform_1, window_bounds = array<i64: 1, 32>}, {pipeline_mode = #tpu.pipeline_mode<synchronous>, transform_indices = @transform_2, window_bounds = array<i64: 1, 32>}, {pipeline_mode = #tpu.pipeline_mode<synchronous>, transform_indices = @transform_3, window_bounds = array<i64: 32, 96>}, {pipeline_mode = #tpu.pipeline_mode<synchronous>, transform_indices = @transform_4, window_bounds = array<i64: 1, 96>}, {transform_indices = @transform_5, window_bounds = array<i64: 3, 16, 32>}]} {
    %c0 = arith.constant 0 : index
    %c0_0 = arith.constant 0 : index
    %0 = vector.load %arg1[%c0, %c0_0] : memref<16x32xbf16, #tpu.memory_space<vmem>>, vector<16x32xbf16>
    %1 = arith.extf %0 : vector<16x32xbf16> to vector<16x32xf32>
    %c0_1 = arith.constant 0 : index
    %c0_2 = arith.constant 0 : index
    %2 = vector.load %arg2[%c0_1, %c0_2] : memref<1x32xf32, #tpu.memory_space<vmem>>, vector<1x32xf32>
    %c0_3 = arith.constant 0 : index
    %c0_4 = arith.constant 0 : index
    %3 = vector.load %arg3[%c0_3, %c0_4] : memref<1x32xf32, #tpu.memory_space<vmem>>, vector<1x32xf32>
    %cst = arith.constant dense<0.000000e+00> : vector<16xf32>
    %4 = vector.multi_reduction <add>, %1, %cst [1] : vector<16x32xf32> to vector<16xf32>
    %5 = vector.shape_cast %4 : vector<16xf32> to vector<16x1xf32>
    %cst_5 = arith.constant 3.200000e+01 : f32
    %6 = vector.broadcast %cst_5 : f32 to vector<16x1xf32>
    %7 = arith.divf %5, %6 : vector<16x1xf32>
    %8 = vector.broadcast %7 : vector<16x1xf32> to vector<16x32xf32>
    %9 = arith.subf %1, %8 : vector<16x32xf32>
    %10 = arith.mulf %9, %9 : vector<16x32xf32>
    %cst_6 = arith.constant dense<0.000000e+00> : vector<16xf32>
    %11 = vector.multi_reduction <add>, %10, %cst_6 [1] : vector<16x32xf32> to vector<16xf32>
    %12 = vector.shape_cast %11 : vector<16xf32> to vector<16x1xf32>
    %cst_7 = arith.constant 3.200000e+01 : f32
    %13 = vector.broadcast %cst_7 : f32 to vector<16x1xf32>
    %14 = arith.divf %12, %13 : vector<16x1xf32>
    %15 = vector.broadcast %7 : vector<16x1xf32> to vector<16x32xf32>
    %16 = arith.subf %1, %15 : vector<16x32xf32>
    %cst_8 = arith.constant 9.99999974E-6 : f32
    %17 = vector.broadcast %cst_8 : f32 to vector<16x1xf32>
    %18 = arith.addf %14, %17 : vector<16x1xf32>
    %19 = math.rsqrt %18 : vector<16x1xf32>
    %20 = vector.broadcast %19 : vector<16x1xf32> to vector<16x32xf32>
    %21 = arith.mulf %16, %20 : vector<16x32xf32>
    %22 = vector.broadcast %2 : vector<1x32xf32> to vector<16x32xf32>
    %23 = arith.mulf %21, %22 : vector<16x32xf32>
    %24 = vector.broadcast %3 : vector<1x32xf32> to vector<16x32xf32>
    %25 = arith.addf %23, %24 : vector<16x32xf32>
    %26 = arith.truncf %25 : vector<16x32xf32> to vector<16x32xbf16>
    %c0_9 = arith.constant 0 : index
    %c0_10 = arith.constant 0 : index
    %27 = vector.load %arg4[%c0_9, %c0_10] : memref<32x96xbf16, #tpu.memory_space<vmem>>, vector<32x96xbf16>
    %cst_11 = arith.constant dense<0.000000e+00> : vector<16x96xf32>
    %28 = tpu.matmul %26, %27, %cst_11 {dimension_numbers = #tpu.dot_dimension_numbers<[1], [0], [0], [1], [0, 0, 1, 1], [], []>} : vector<16x32xbf16>, vector<32x96xbf16>, vector<16x96xf32> -> vector<16x96xf32>
    %c0_12 = arith.constant 0 : index
    %c0_13 = arith.constant 0 : index
    %29 = vector.load %arg5[%c0_12, %c0_13] : memref<1x96xf32, #tpu.memory_space<vmem>>, vector<1x96xf32>
    %30 = vector.broadcast %29 : vector<1x96xf32> to vector<16x96xf32>
    %31 = arith.addf %28, %30 : vector<16x96xf32>
    %32 = vector.extract_strided_slice %31 {offsets = [0, 0], sizes = [16, 32], strides = [1, 1]} : vector<16x96xf32> to vector<16x32xf32>
    %33 = arith.truncf %32 : vector<16x32xf32> to vector<16x32xbf16>
    %c0_14 = arith.constant 0 : index
    %c0_15 = arith.constant 0 : index
    %c0_16 = arith.constant 0 : index
    %34 = vector.load %arg6[%c0_14, %c0_15, %c0_16] : memref<3x16x32xbf16, #tpu.memory_space<vmem>>, vector<1x16x32xbf16>
    %35 = vector.shape_cast %34 : vector<1x16x32xbf16> to vector<16x32xbf16>
    %36 = vector.shape_cast %33 : vector<16x32xbf16> to vector<1x16x32xbf16>
    tpu.vector_store %arg6[%c0_14, %c0_15, %c0_16], %36 {strides = array<i32>} : memref<3x16x32xbf16, #tpu.memory_space<vmem>>, vector<1x16x32xbf16>,
    %37 = vector.extract_strided_slice %31 {offsets = [0, 32], sizes = [16, 32], strides = [1, 1]} : vector<16x96xf32> to vector<16x32xf32>
    %38 = arith.truncf %37 : vector<16x32xf32> to vector<16x32xbf16>
    %c1 = arith.constant 1 : index
    %c0_17 = arith.constant 0 : index
    %c0_18 = arith.constant 0 : index
    %39 = vector.load %arg6[%c1, %c0_17, %c0_18] : memref<3x16x32xbf16, #tpu.memory_space<vmem>>, vector<1x16x32xbf16>
    %40 = vector.shape_cast %39 : vector<1x16x32xbf16> to vector<16x32xbf16>
    %41 = vector.shape_cast %38 : vector<16x32xbf16> to vector<1x16x32xbf16>
    tpu.vector_store %arg6[%c1, %c0_17, %c0_18], %41 {strides = array<i32>} : memref<3x16x32xbf16, #tpu.memory_space<vmem>>, vector<1x16x32xbf16>,
    %42 = vector.extract_strided_slice %31 {offsets = [0, 64], sizes = [16, 32], strides = [1, 1]} : vector<16x96xf32> to vector<16x32xf32>
    %43 = arith.truncf %42 : vector<16x32xf32> to vector<16x32xbf16>
    %c2 = arith.constant 2 : index
    %c0_19 = arith.constant 0 : index
    %c0_20 = arith.constant 0 : index
    %44 = vector.load %arg6[%c2, %c0_19, %c0_20] : memref<3x16x32xbf16, #tpu.memory_space<vmem>>, vector<1x16x32xbf16>
    %45 = vector.shape_cast %44 : vector<1x16x32xbf16> to vector<16x32xbf16>
    %46 = vector.shape_cast %43 : vector<16x32xbf16> to vector<1x16x32xbf16>
    tpu.vector_store %arg6[%c2, %c0_19, %c0_20], %46 {strides = array<i32>} : memref<3x16x32xbf16, #tpu.memory_space<vmem>>, vector<1x16x32xbf16>,
    return
  }
  func.func @transform_0(%arg0: i32) -> (i32, i32) {
    %c0_i32 = arith.constant 0 : i32
    %c0_i32_0 = arith.constant 0 : i32
    return %arg0, %c0_i32 : i32, i32
  }
  func.func @transform_1(%arg0: i32) -> (i32, i32) {
    %c0_i32 = arith.constant 0 : i32
    %c0_i32_0 = arith.constant 0 : i32
    %c0_i32_1 = arith.constant 0 : i32
    return %c0_i32, %c0_i32_0 : i32, i32
  }
  func.func @transform_2(%arg0: i32) -> (i32, i32) {
    %c0_i32 = arith.constant 0 : i32
    %c0_i32_0 = arith.constant 0 : i32
    %c0_i32_1 = arith.constant 0 : i32
    return %c0_i32, %c0_i32_0 : i32, i32
  }
  func.func @transform_3(%arg0: i32) -> (i32, i32) {
    %c0_i32 = arith.constant 0 : i32
    %c0_i32_0 = arith.constant 0 : i32
    %c0_i32_1 = arith.constant 0 : i32
    return %c0_i32, %c0_i32_0 : i32, i32
  }
  func.func @transform_4(%arg0: i32) -> (i32, i32) {
    %c0_i32 = arith.constant 0 : i32
    %c0_i32_0 = arith.constant 0 : i32
    %c0_i32_1 = arith.constant 0 : i32
    return %c0_i32, %c0_i32_0 : i32, i32
  }
  func.func @transform_5(%arg0: i32) -> (i32, i32, i32) {
    %c0_i32 = arith.constant 0 : i32
    %c0_i32_0 = arith.constant 0 : i32
    %c0_i32_1 = arith.constant 0 : i32
    return %c0_i32, %arg0, %c0_i32_0 : i32, i32, i32
  }
}

module attributes {stable_mosaic.version = 11 : i64} {
  func.func @_ln_mlp_residual_kernel(%arg0: i32, %arg1: i32, %arg2: memref<16x32xbf16, #tpu.memory_space<vmem>>, %arg3: memref<1x32xf32, #tpu.memory_space<vmem>>, %arg4: memref<1x32xf32, #tpu.memory_space<vmem>>, %arg5: memref<32x128xbf16, #tpu.memory_space<vmem>>, %arg6: memref<1x128xf32, #tpu.memory_space<vmem>>, %arg7: memref<128x32xbf16, #tpu.memory_space<vmem>>, %arg8: memref<1x32xf32, #tpu.memory_space<vmem>>, %arg9: memref<16x32xbf16, #tpu.memory_space<vmem>>, %arg10: memref<16x32xbf16, #tpu.memory_space<vmem>>, %arg11: memref<16x32xf32, #tpu.memory_space<vmem>>) attributes {dimension_semantics = [#tpu.dimension_semantics<parallel>, #tpu.dimension_semantics<arbitrary>], iteration_bounds = array<i64: 1, 1>, scalar_prefetch = 0 : i64, scratch_operands = 2 : i64, tpu.core_type = #tpu.core_type<tc>, window_params = [{transform_indices = @transform_0, window_bounds = array<i64: 16, 32>}, {pipeline_mode = #tpu.pipeline_mode<synchronous>, transform_indices = @transform_1, window_bounds = array<i64: 1, 32>}, {pipeline_mode = #tpu.pipeline_mode<synchronous>, transform_indices = @transform_2, window_bounds = array<i64: 1, 32>}, {transform_indices = @transform_3, window_bounds = array<i64: 32, 128>}, {transform_indices = @transform_4, window_bounds = array<i64: 1, 128>}, {transform_indices = @transform_5, window_bounds = array<i64: 128, 32>}, {pipeline_mode = #tpu.pipeline_mode<synchronous>, transform_indices = @transform_6, window_bounds = array<i64: 1, 32>}, {transform_indices = @transform_7, window_bounds = array<i64: 16, 32>}]} {
    %c0_i32 = arith.constant 0 : i32
    %0 = arith.cmpi eq, %arg1, %c0_i32 : i32
    %1 = arith.extui %0 : i1 to i32
    %c0_i32_0 = arith.constant 0 : i32
    %2 = arith.cmpi ne, %1, %c0_i32_0 : i32
    scf.if %2 {
      %c0_19 = arith.constant 0 : index
      %c0_20 = arith.constant 0 : index
      %31 = vector.load %arg2[%c0_19, %c0_20] : memref<16x32xbf16, #tpu.memory_space<vmem>>, vector<16x32xbf16>
      %32 = arith.extf %31 : vector<16x32xbf16> to vector<16x32xf32>
      %c0_21 = arith.constant 0 : index
      %c0_22 = arith.constant 0 : index
      %33 = vector.load %arg3[%c0_21, %c0_22] : memref<1x32xf32, #tpu.memory_space<vmem>>, vector<1x32xf32>
      %c0_23 = arith.constant 0 : index
      %c0_24 = arith.constant 0 : index
      %34 = vector.load %arg4[%c0_23, %c0_24] : memref<1x32xf32, #tpu.memory_space<vmem>>, vector<1x32xf32>
      %cst_25 = arith.constant dense<0.000000e+00> : vector<16xf32>
      %35 = vector.multi_reduction <add>, %32, %cst_25 [1] : vector<16x32xf32> to vector<16xf32>
      %36 = vector.shape_cast %35 : vector<16xf32> to vector<16x1xf32>
      %cst_26 = arith.constant 3.200000e+01 : f32
      %37 = vector.broadcast %cst_26 : f32 to vector<16x1xf32>
      %38 = arith.divf %36, %37 : vector<16x1xf32>
      %39 = vector.broadcast %38 : vector<16x1xf32> to vector<16x32xf32>
      %40 = arith.subf %32, %39 : vector<16x32xf32>
      %41 = arith.mulf %40, %40 : vector<16x32xf32>
      %cst_27 = arith.constant dense<0.000000e+00> : vector<16xf32>
      %42 = vector.multi_reduction <add>, %41, %cst_27 [1] : vector<16x32xf32> to vector<16xf32>
      %43 = vector.shape_cast %42 : vector<16xf32> to vector<16x1xf32>
      %cst_28 = arith.constant 3.200000e+01 : f32
      %44 = vector.broadcast %cst_28 : f32 to vector<16x1xf32>
      %45 = arith.divf %43, %44 : vector<16x1xf32>
      %46 = vector.broadcast %38 : vector<16x1xf32> to vector<16x32xf32>
      %47 = arith.subf %32, %46 : vector<16x32xf32>
      %cst_29 = arith.constant 9.99999974E-6 : f32
      %48 = vector.broadcast %cst_29 : f32 to vector<16x1xf32>
      %49 = arith.addf %45, %48 : vector<16x1xf32>
      %50 = math.rsqrt %49 : vector<16x1xf32>
      %51 = vector.broadcast %50 : vector<16x1xf32> to vector<16x32xf32>
      %52 = arith.mulf %47, %51 : vector<16x32xf32>
      %53 = vector.broadcast %33 : vector<1x32xf32> to vector<16x32xf32>
      %54 = arith.mulf %52, %53 : vector<16x32xf32>
      %55 = vector.broadcast %34 : vector<1x32xf32> to vector<16x32xf32>
      %56 = arith.addf %54, %55 : vector<16x32xf32>
      %57 = arith.truncf %56 : vector<16x32xf32> to vector<16x32xbf16>
      %c0_30 = arith.constant 0 : index
      %c0_31 = arith.constant 0 : index
      %58 = vector.load %arg10[%c0_30, %c0_31] : memref<16x32xbf16, #tpu.memory_space<vmem>>, vector<16x32xbf16>
      tpu.vector_store %arg10[%c0_30, %c0_31], %57 {strides = array<i32>} : memref<16x32xbf16, #tpu.memory_space<vmem>>, vector<16x32xbf16>,
      %cst_32 = arith.constant 0.000000e+00 : f32
      %59 = vector.broadcast %cst_32 : f32 to vector<16x32xf32>
      %c0_33 = arith.constant 0 : index
      %c0_34 = arith.constant 0 : index
      %60 = vector.load %arg11[%c0_33, %c0_34] : memref<16x32xf32, #tpu.memory_space<vmem>>, vector<16x32xf32>
      tpu.vector_store %arg11[%c0_33, %c0_34], %59 {strides = array<i32>} : memref<16x32xf32, #tpu.memory_space<vmem>>, vector<16x32xf32>,
    } else {
    }
    %c0 = arith.constant 0 : index
    %c0_1 = arith.constant 0 : index
    %3 = vector.load %arg10[%c0, %c0_1] : memref<16x32xbf16, #tpu.memory_space<vmem>>, vector<16x32xbf16>
    %c0_2 = arith.constant 0 : index
    %c0_3 = arith.constant 0 : index
    %4 = vector.load %arg5[%c0_2, %c0_3] : memref<32x128xbf16, #tpu.memory_space<vmem>>, vector<32x128xbf16>
    %cst = arith.constant dense<0.000000e+00> : vector<16x128xf32>
    %5 = tpu.matmul %3, %4, %cst {dimension_numbers = #tpu.dot_dimension_numbers<[1], [0], [0], [1], [0, 0, 1, 1], [], []>} : vector<16x32xbf16>, vector<32x128xbf16>, vector<16x128xf32> -> vector<16x128xf32>
    %c0_4 = arith.constant 0 : index
    %c0_5 = arith.constant 0 : index
    %6 = vector.load %arg6[%c0_4, %c0_5] : memref<1x128xf32, #tpu.memory_space<vmem>>, vector<1x128xf32>
    %7 = vector.broadcast %6 : vector<1x128xf32> to vector<16x128xf32>
    %8 = arith.addf %5, %7 : vector<16x128xf32>
    %cst_6 = arith.constant 5.000000e-01 : f32
    %9 = vector.broadcast %cst_6 : f32 to vector<16x128xf32>
    %10 = arith.mulf %9, %8 : vector<16x128xf32>
    %cst_7 = arith.constant 4.471500e-02 : f32
    %11 = vector.broadcast %cst_7 : f32 to vector<16x128xf32>
    %12 = arith.mulf %11, %8 : vector<16x128xf32>
    %13 = arith.mulf %12, %8 : vector<16x128xf32>
    %14 = arith.mulf %13, %8 : vector<16x128xf32>
    %15 = arith.addf %8, %14 : vector<16x128xf32>
    %cst_8 = arith.constant 0.797884583 : f32
    %16 = vector.broadcast %cst_8 : f32 to vector<16x128xf32>
    %17 = arith.mulf %16, %15 : vector<16x128xf32>
    %18 = math.tanh %17 : vector<16x128xf32>
    %cst_9 = arith.constant 1.000000e+00 : f32
    %19 = vector.broadcast %cst_9 : f32 to vector<16x128xf32>
    %20 = arith.addf %19, %18 : vector<16x128xf32>
    %21 = arith.mulf %10, %20 : vector<16x128xf32>
    %c0_10 = arith.constant 0 : index
    %c0_11 = arith.constant 0 : index
    %22 = vector.load %arg11[%c0_10, %c0_11] : memref<16x32xf32, #tpu.memory_space<vmem>>, vector<16x32xf32>
    %23 = arith.truncf %21 : vector<16x128xf32> to vector<16x128xbf16>
    %c0_12 = arith.constant 0 : index
    %c0_13 = arith.constant 0 : index
    %24 = vector.load %arg7[%c0_12, %c0_13] : memref<128x32xbf16, #tpu.memory_space<vmem>>, vector<128x32xbf16>
    %cst_14 = arith.constant dense<0.000000e+00> : vector<16x32xf32>
    %25 = tpu.matmul %23, %24, %cst_14 {dimension_numbers = #tpu.dot_dimension_numbers<[1], [0], [0], [1], [0, 0, 1, 1], [], []>} : vector<16x128xbf16>, vector<128x32xbf16>, vector<16x32xf32> -> vector<16x32xf32>
    %26 = arith.addf %22, %25 : vector<16x32xf32>
    %c0_15 = arith.constant 0 : index
    %c0_16 = arith.constant 0 : index
    %27 = vector.load %arg11[%c0_15, %c0_16] : memref<16x32xf32, #tpu.memory_space<vmem>>, vector<16x32xf32>
    tpu.vector_store %arg11[%c0_15, %c0_16], %26 {strides = array<i32>} : memref<16x32xf32, #tpu.memory_space<vmem>>, vector<16x32xf32>,
    %c0_i32_17 = arith.constant 0 : i32
    %28 = arith.cmpi eq, %arg1, %c0_i32_17 : i32
    %29 = arith.extui %28 : i1 to i32
    %c0_i32_18 = arith.constant 0 : i32
    %30 = arith.cmpi ne, %29, %c0_i32_18 : i32
    scf.if %30 {
      %c0_19 = arith.constant 0 : index
      %c0_20 = arith.constant 0 : index
      %31 = vector.load %arg2[%c0_19, %c0_20] : memref<16x32xbf16, #tpu.memory_space<vmem>>, vector<16x32xbf16>
      %32 = arith.extf %31 : vector<16x32xbf16> to vector<16x32xf32>
      %c0_21 = arith.constant 0 : index
      %c0_22 = arith.constant 0 : index
      %33 = vector.load %arg11[%c0_21, %c0_22] : memref<16x32xf32, #tpu.memory_space<vmem>>, vector<16x32xf32>
      %34 = arith.addf %32, %33 : vector<16x32xf32>
      %c0_23 = arith.constant 0 : index
      %c0_24 = arith.constant 0 : index
      %35 = vector.load %arg8[%c0_23, %c0_24] : memref<1x32xf32, #tpu.memory_space<vmem>>, vector<1x32xf32>
      %36 = vector.broadcast %35 : vector<1x32xf32> to vector<16x32xf32>
      %37 = arith.addf %34, %36 : vector<16x32xf32>
      %38 = arith.truncf %37 : vector<16x32xf32> to vector<16x32xbf16>
      %c0_25 = arith.constant 0 : index
      %c0_26 = arith.constant 0 : index
      %39 = vector.load %arg9[%c0_25, %c0_26] : memref<16x32xbf16, #tpu.memory_space<vmem>>, vector<16x32xbf16>
      tpu.vector_store %arg9[%c0_25, %c0_26], %38 {strides = array<i32>} : memref<16x32xbf16, #tpu.memory_space<vmem>>, vector<16x32xbf16>,
    } else {
    }
    return
  }
  func.func @transform_0(%arg0: i32, %arg1: i32) -> (i32, i32) {
    %c0_i32 = arith.constant 0 : i32
    %c0_i32_0 = arith.constant 0 : i32
    return %arg0, %c0_i32 : i32, i32
  }
  func.func @transform_1(%arg0: i32, %arg1: i32) -> (i32, i32) {
    %c0_i32 = arith.constant 0 : i32
    %c0_i32_0 = arith.constant 0 : i32
    %c0_i32_1 = arith.constant 0 : i32
    return %c0_i32, %c0_i32_0 : i32, i32
  }
  func.func @transform_2(%arg0: i32, %arg1: i32) -> (i32, i32) {
    %c0_i32 = arith.constant 0 : i32
    %c0_i32_0 = arith.constant 0 : i32
    %c0_i32_1 = arith.constant 0 : i32
    return %c0_i32, %c0_i32_0 : i32, i32
  }
  func.func @transform_3(%arg0: i32, %arg1: i32) -> (i32, i32) {
    %c0_i32 = arith.constant 0 : i32
    %c0_i32_0 = arith.constant 0 : i32
    return %c0_i32, %arg1 : i32, i32
  }
  func.func @transform_4(%arg0: i32, %arg1: i32) -> (i32, i32) {
    %c0_i32 = arith.constant 0 : i32
    %c0_i32_0 = arith.constant 0 : i32
    return %c0_i32, %arg1 : i32, i32
  }
  func.func @transform_5(%arg0: i32, %arg1: i32) -> (i32, i32) {
    %c0_i32 = arith.constant 0 : i32
    %c0_i32_0 = arith.constant 0 : i32
    return %arg1, %c0_i32 : i32, i32
  }
  func.func @transform_6(%arg0: i32, %arg1: i32) -> (i32, i32) {
    %c0_i32 = arith.constant 0 : i32
    %c0_i32_0 = arith.constant 0 : i32
    %c0_i32_1 = arith.constant 0 : i32
    return %c0_i32, %c0_i32_0 : i32, i32
  }
  func.func @transform_7(%arg0: i32, %arg1: i32) -> (i32, i32) {
    %c0_i32 = arith.constant 0 : i32
    %c0_i32_0 = arith.constant 0 : i32
    return %arg0, %c0_i32 : i32, i32
  }
}

module attributes {stable_mosaic.version = 11 : i64} {
  func.func @_flash_attn_kernel(%arg0: i32, %arg1: i32, %arg2: i32, %arg3: memref<1x1x8x32xbf16, #tpu.memory_space<vmem>>, %arg4: memref<1x1x8x32xbf16, #tpu.memory_space<vmem>>, %arg5: memref<1x1x8x32xbf16, #tpu.memory_space<vmem>>, %arg6: memref<1x8x32xbf16, #tpu.memory_space<vmem>>, %arg7: memref<8x4xf32, #tpu.memory_space<vmem>>, %arg8: memref<8x4xf32, #tpu.memory_space<vmem>>, %arg9: memref<8x32xf32, #tpu.memory_space<vmem>>) attributes {dimension_semantics = [#tpu.dimension_semantics<parallel>, #tpu.dimension_semantics<parallel>, #tpu.dimension_semantics<arbitrary>], iteration_bounds = array<i64: 2, 1, 1>, scalar_prefetch = 0 : i64, scratch_operands = 3 : i64, tpu.core_type = #tpu.core_type<tc>, window_params = [{transform_indices = @transform_0, window_bounds = array<i64: 1, 1, 8, 32>}, {transform_indices = @transform_1, window_bounds = array<i64: 1, 1, 8, 32>}, {transform_indices = @transform_2, window_bounds = array<i64: 1, 1, 8, 32>}, {transform_indices = @transform_3, window_bounds = array<i64: 1, 8, 32>}]} {
    %c0_i32 = arith.constant 0 : i32
    %0 = arith.cmpi eq, %arg2, %c0_i32 : i32
    %1 = arith.extui %0 : i1 to i32
    %c0_i32_0 = arith.constant 0 : i32
    %2 = arith.cmpi ne, %1, %c0_i32_0 : i32
    scf.if %2 {
      %cst = arith.constant -1.000000e+30 : f32
      %12 = vector.broadcast %cst : f32 to vector<8x4xf32>
      %c0 = arith.constant 0 : index
      %c0_5 = arith.constant 0 : index
      %13 = vector.load %arg7[%c0, %c0_5] : memref<8x4xf32, #tpu.memory_space<vmem>>, vector<8x4xf32>
      tpu.vector_store %arg7[%c0, %c0_5], %12 {strides = array<i32>} : memref<8x4xf32, #tpu.memory_space<vmem>>, vector<8x4xf32>,
      %cst_6 = arith.constant 0.000000e+00 : f32
      %14 = vector.broadcast %cst_6 : f32 to vector<8x4xf32>
      %c0_7 = arith.constant 0 : index
      %c0_8 = arith.constant 0 : index
      %15 = vector.load %arg8[%c0_7, %c0_8] : memref<8x4xf32, #tpu.memory_space<vmem>>, vector<8x4xf32>
      tpu.vector_store %arg8[%c0_7, %c0_8], %14 {strides = array<i32>} : memref<8x4xf32, #tpu.memory_space<vmem>>, vector<8x4xf32>,
      %cst_9 = arith.constant 0.000000e+00 : f32
      %16 = vector.broadcast %cst_9 : f32 to vector<8x32xf32>
      %c0_10 = arith.constant 0 : index
      %c0_11 = arith.constant 0 : index
      %17 = vector.load %arg9[%c0_10, %c0_11] : memref<8x32xf32, #tpu.memory_space<vmem>>, vector<8x32xf32>
      tpu.vector_store %arg9[%c0_10, %c0_11], %16 {strides = array<i32>} : memref<8x32xf32, #tpu.memory_space<vmem>>, vector<8x32xf32>,
    } else {
    }
    %3 = arith.cmpi slt, %arg2, %arg1 : i32
    %4 = arith.extui %3 : i1 to i32
    %c0_i32_1 = arith.constant 0 : i32
    %5 = arith.cmpi ne, %4, %c0_i32_1 : i32
    scf.if %5 {
      %c0 = arith.constant 0 : index
      %c0_5 = arith.constant 0 : index
      %c0_6 = arith.constant 0 : index
      %c0_7 = arith.constant 0 : index
      %12 = vector.load %arg3[%c0, %c0_5, %c0_6, %c0_7] : memref<1x1x8x32xbf16, #tpu.memory_space<vmem>>, vector<1x1x8x32xbf16>
      %13 = vector.shape_cast %12 : vector<1x1x8x32xbf16> to vector<8x32xbf16>
      %cst = arith.constant 3.535160e-01 : bf16
      %14 = vector.broadcast %cst : bf16 to vector<8x32xbf16>
      %15 = arith.mulf %13, %14 : vector<8x32xbf16>
      %c0_8 = arith.constant 0 : index
      %c0_9 = arith.constant 0 : index
      %c0_10 = arith.constant 0 : index
      %c0_11 = arith.constant 0 : index
      %16 = vector.load %arg4[%c0_8, %c0_9, %c0_10, %c0_11] : memref<1x1x8x32xbf16, #tpu.memory_space<vmem>>, vector<1x1x8x32xbf16>
      %17 = vector.shape_cast %16 : vector<1x1x8x32xbf16> to vector<8x32xbf16>
      %c0_12 = arith.constant 0 : index
      %c0_13 = arith.constant 0 : index
      %c0_14 = arith.constant 0 : index
      %c0_15 = arith.constant 0 : index
      %18 = vector.load %arg5[%c0_12, %c0_13, %c0_14, %c0_15] : memref<1x1x8x32xbf16, #tpu.memory_space<vmem>>, vector<1x1x8x32xbf16>
      %19 = vector.shape_cast %18 : vector<1x1x8x32xbf16> to vector<8x32xbf16>
      %20 = vector.extract_strided_slice %15 {offsets = [0, 0], sizes = [8, 8], strides = [1, 1]} : vector<8x32xbf16> to vector<8x8xbf16>
      %21 = vector.extract_strided_slice %17 {offsets = [0, 0], sizes = [8, 8], strides = [1, 1]} : vector<8x32xbf16> to vector<8x8xbf16>
      %cst_16 = arith.constant dense<0.000000e+00> : vector<8x8xf32>
      %22 = tpu.matmul %20, %21, %cst_16 {dimension_numbers = #tpu.dot_dimension_numbers<[1], [1], [0], [0], [0, 0, 1, 0], [], []>} : vector<8x8xbf16>, vector<8x8xbf16>, vector<8x8xf32> -> vector<8x8xf32>
      %c0_17 = arith.constant 0 : index
      %c0_18 = arith.constant 0 : index
      %23 = vector.load %arg7[%c0_17, %c0_18] : memref<8x4xf32, #tpu.memory_space<vmem>>, vector<8x1xf32>
      %cst_19 = arith.constant dense<0xFF800000> : vector<8xf32>
      %24 = vector.multi_reduction <maximumf>, %22, %cst_19 [1] : vector<8x8xf32> to vector<8xf32>
      %25 = vector.shape_cast %24 : vector<8xf32> to vector<8x1xf32>
      %26 = arith.maximumf %23, %25 : vector<8x1xf32>
      %27 = arith.subf %23, %26 : vector<8x1xf32>
      %28 = math.exp %27 : vector<8x1xf32>
      %29 = vector.broadcast %26 : vector<8x1xf32> to vector<8x8xf32>
      %30 = arith.subf %22, %29 : vector<8x8xf32>
      %31 = math.exp %30 : vector<8x8xf32>
      %c0_20 = arith.constant 0 : index
      %c0_21 = arith.constant 0 : index
      %32 = vector.load %arg8[%c0_20, %c0_21] : memref<8x4xf32, #tpu.memory_space<vmem>>, vector<8x1xf32>
      %33 = arith.mulf %28, %32 : vector<8x1xf32>
      %cst_22 = arith.constant dense<0.000000e+00> : vector<8xf32>
      %34 = vector.multi_reduction <add>, %31, %cst_22 [1] : vector<8x8xf32> to vector<8xf32>
      %35 = vector.shape_cast %34 : vector<8xf32> to vector<8x1xf32>
      %36 = arith.addf %33, %35 : vector<8x1xf32>
      %c0_23 = arith.constant 0 : index
      %c0_24 = arith.constant 0 : index
      %37 = vector.load %arg8[%c0_23, %c0_24] : memref<8x4xf32, #tpu.memory_space<vmem>>, vector<8x1xf32>
      tpu.vector_store %arg8[%c0_23, %c0_24], %36 {strides = array<i32>} : memref<8x4xf32, #tpu.memory_space<vmem>>, vector<8x1xf32>,
      %c0_25 = arith.constant 0 : index
      %c0_26 = arith.constant 0 : index
      %38 = vector.load %arg9[%c0_25, %c0_26] : memref<8x32xf32, #tpu.memory_space<vmem>>, vector<8x8xf32>
      %39 = vector.broadcast %28 : vector<8x1xf32> to vector<8x8xf32>
      %40 = arith.mulf %39, %38 : vector<8x8xf32>
      %41 = arith.truncf %31 : vector<8x8xf32> to vector<8x8xbf16>
      %42 = vector.extract_strided_slice %19 {offsets = [0, 0], sizes = [8, 8], strides = [1, 1]} : vector<8x32xbf16> to vector<8x8xbf16>
      %cst_27 = arith.constant dense<0.000000e+00> : vector<8x8xf32>
      %43 = tpu.matmul %41, %42, %cst_27 {dimension_numbers = #tpu.dot_dimension_numbers<[1], [0], [0], [1], [0, 0, 1, 1], [], []>} : vector<8x8xbf16>, vector<8x8xbf16>, vector<8x8xf32> -> vector<8x8xf32>
      %44 = arith.addf %40, %43 : vector<8x8xf32>
      %c0_28 = arith.constant 0 : index
      %c0_29 = arith.constant 0 : index
      %45 = vector.load %arg9[%c0_28, %c0_29] : memref<8x32xf32, #tpu.memory_space<vmem>>, vector<8x8xf32>
      tpu.vector_store %arg9[%c0_28, %c0_29], %44 {strides = array<i32>} : memref<8x32xf32, #tpu.memory_space<vmem>>, vector<8x8xf32>,
      %c0_30 = arith.constant 0 : index
      %c0_31 = arith.constant 0 : index
      %46 = vector.load %arg7[%c0_30, %c0_31] : memref<8x4xf32, #tpu.memory_space<vmem>>, vector<8x1xf32>
      tpu.vector_store %arg7[%c0_30, %c0_31], %26 {strides = array<i32>} : memref<8x4xf32, #tpu.memory_space<vmem>>, vector<8x1xf32>,
      %47 = vector.extract_strided_slice %15 {offsets = [0, 8], sizes = [8, 8], strides = [1, 1]} : vector<8x32xbf16> to vector<8x8xbf16>
      %48 = vector.extract_strided_slice %17 {offsets = [0, 8], sizes = [8, 8], strides = [1, 1]} : vector<8x32xbf16> to vector<8x8xbf16>
      %cst_32 = arith.constant dense<0.000000e+00> : vector<8x8xf32>
      %49 = tpu.matmul %47, %48, %cst_32 {dimension_numbers = #tpu.dot_dimension_numbers<[1], [1], [0], [0], [0, 0, 1, 0], [], []>} : vector<8x8xbf16>, vector<8x8xbf16>, vector<8x8xf32> -> vector<8x8xf32>
      %c0_33 = arith.constant 0 : index
      %c1 = arith.constant 1 : index
      %50 = vector.load %arg7[%c0_33, %c1] : memref<8x4xf32, #tpu.memory_space<vmem>>, vector<8x1xf32>
      %cst_34 = arith.constant dense<0xFF800000> : vector<8xf32>
      %51 = vector.multi_reduction <maximumf>, %49, %cst_34 [1] : vector<8x8xf32> to vector<8xf32>
      %52 = vector.shape_cast %51 : vector<8xf32> to vector<8x1xf32>
      %53 = arith.maximumf %50, %52 : vector<8x1xf32>
      %54 = arith.subf %50, %53 : vector<8x1xf32>
      %55 = math.exp %54 : vector<8x1xf32>
      %56 = vector.broadcast %53 : vector<8x1xf32> to vector<8x8xf32>
      %57 = arith.subf %49, %56 : vector<8x8xf32>
      %58 = math.exp %57 : vector<8x8xf32>
      %c0_35 = arith.constant 0 : index
      %c1_36 = arith.constant 1 : index
      %59 = vector.load %arg8[%c0_35, %c1_36] : memref<8x4xf32, #tpu.memory_space<vmem>>, vector<8x1xf32>
      %60 = arith.mulf %55, %59 : vector<8x1xf32>
      %cst_37 = arith.constant dense<0.000000e+00> : vector<8xf32>
      %61 = vector.multi_reduction <add>, %58, %cst_37 [1] : vector<8x8xf32> to vector<8xf32>
      %62 = vector.shape_cast %61 : vector<8xf32> to vector<8x1xf32>
      %63 = arith.addf %60, %62 : vector<8x1xf32>
      %c0_38 = arith.constant 0 : index
      %c1_39 = arith.constant 1 : index
      %64 = vector.load %arg8[%c0_38, %c1_39] : memref<8x4xf32, #tpu.memory_space<vmem>>, vector<8x1xf32>
      tpu.vector_store %arg8[%c0_38, %c1_39], %63 {strides = array<i32>} : memref<8x4xf32, #tpu.memory_space<vmem>>, vector<8x1xf32>,
      %c0_40 = arith.constant 0 : index
      %c8 = arith.constant 8 : index
      %65 = vector.load %arg9[%c0_40, %c8] : memref<8x32xf32, #tpu.memory_space<vmem>>, vector<8x8xf32>
      %66 = vector.broadcast %55 : vector<8x1xf32> to vector<8x8xf32>
      %67 = arith.mulf %66, %65 : vector<8x8xf32>
      %68 = arith.truncf %58 : vector<8x8xf32> to vector<8x8xbf16>
      %69 = vector.extract_strided_slice %19 {offsets = [0, 8], sizes = [8, 8], strides = [1, 1]} : vector<8x32xbf16> to vector<8x8xbf16>
      %cst_41 = arith.constant dense<0.000000e+00> : vector<8x8xf32>
      %70 = tpu.matmul %68, %69, %cst_41 {dimension_numbers = #tpu.dot_dimension_numbers<[1], [0], [0], [1], [0, 0, 1, 1], [], []>} : vector<8x8xbf16>, vector<8x8xbf16>, vector<8x8xf32> -> vector<8x8xf32>
      %71 = arith.addf %67, %70 : vector<8x8xf32>
      %c0_42 = arith.constant 0 : index
      %c8_43 = arith.constant 8 : index
      %72 = vector.load %arg9[%c0_42, %c8_43] : memref<8x32xf32, #tpu.memory_space<vmem>>, vector<8x8xf32>
      tpu.vector_store %arg9[%c0_42, %c8_43], %71 {strides = array<i32>} : memref<8x32xf32, #tpu.memory_space<vmem>>, vector<8x8xf32>,
      %c0_44 = arith.constant 0 : index
      %c1_45 = arith.constant 1 : index
      %73 = vector.load %arg7[%c0_44, %c1_45] : memref<8x4xf32, #tpu.memory_space<vmem>>, vector<8x1xf32>
      tpu.vector_store %arg7[%c0_44, %c1_45], %53 {strides = array<i32>} : memref<8x4xf32, #tpu.memory_space<vmem>>, vector<8x1xf32>,
      %74 = vector.extract_strided_slice %15 {offsets = [0, 16], sizes = [8, 8], strides = [1, 1]} : vector<8x32xbf16> to vector<8x8xbf16>
      %75 = vector.extract_strided_slice %17 {offsets = [0, 16], sizes = [8, 8], strides = [1, 1]} : vector<8x32xbf16> to vector<8x8xbf16>
      %cst_46 = arith.constant dense<0.000000e+00> : vector<8x8xf32>
      %76 = tpu.matmul %74, %75, %cst_46 {dimension_numbers = #tpu.dot_dimension_numbers<[1], [1], [0], [0], [0, 0, 1, 0], [], []>} : vector<8x8xbf16>, vector<8x8xbf16>, vector<8x8xf32> -> vector<8x8xf32>
      %c0_47 = arith.constant 0 : index
      %c2 = arith.constant 2 : index
      %77 = vector.load %arg7[%c0_47, %c2] : memref<8x4xf32, #tpu.memory_space<vmem>>, vector<8x1xf32>
      %cst_48 = arith.constant dense<0xFF800000> : vector<8xf32>
      %78 = vector.multi_reduction <maximumf>, %76, %cst_48 [1] : vector<8x8xf32> to vector<8xf32>
      %79 = vector.shape_cast %78 : vector<8xf32> to vector<8x1xf32>
      %80 = arith.maximumf %77, %79 : vector<8x1xf32>
      %81 = arith.subf %77, %80 : vector<8x1xf32>
      %82 = math.exp %81 : vector<8x1xf32>
      %83 = vector.broadcast %80 : vector<8x1xf32> to vector<8x8xf32>
      %84 = arith.subf %76, %83 : vector<8x8xf32>
      %85 = math.exp %84 : vector<8x8xf32>
      %c0_49 = arith.constant 0 : index
      %c2_50 = arith.constant 2 : index
      %86 = vector.load %arg8[%c0_49, %c2_50] : memref<8x4xf32, #tpu.memory_space<vmem>>, vector<8x1xf32>
      %87 = arith.mulf %82, %86 : vector<8x1xf32>
      %cst_51 = arith.constant dense<0.000000e+00> : vector<8xf32>
      %88 = vector.multi_reduction <add>, %85, %cst_51 [1] : vector<8x8xf32> to vector<8xf32>
      %89 = vector.shape_cast %88 : vector<8xf32> to vector<8x1xf32>
      %90 = arith.addf %87, %89 : vector<8x1xf32>
      %c0_52 = arith.constant 0 : index
      %c2_53 = arith.constant 2 : index
      %91 = vector.load %arg8[%c0_52, %c2_53] : memref<8x4xf32, #tpu.memory_space<vmem>>, vector<8x1xf32>
      tpu.vector_store %arg8[%c0_52, %c2_53], %90 {strides = array<i32>} : memref<8x4xf32, #tpu.memory_space<vmem>>, vector<8x1xf32>,
      %c0_54 = arith.constant 0 : index
      %c16 = arith.constant 16 : index
      %92 = vector.load %arg9[%c0_54, %c16] : memref<8x32xf32, #tpu.memory_space<vmem>>, vector<8x8xf32>
      %93 = vector.broadcast %82 : vector<8x1xf32> to vector<8x8xf32>
      %94 = arith.mulf %93, %92 : vector<8x8xf32>
      %95 = arith.truncf %85 : vector<8x8xf32> to vector<8x8xbf16>
      %96 = vector.extract_strided_slice %19 {offsets = [0, 16], sizes = [8, 8], strides = [1, 1]} : vector<8x32xbf16> to vector<8x8xbf16>
      %cst_55 = arith.constant dense<0.000000e+00> : vector<8x8xf32>
      %97 = tpu.matmul %95, %96, %cst_55 {dimension_numbers = #tpu.dot_dimension_numbers<[1], [0], [0], [1], [0, 0, 1, 1], [], []>} : vector<8x8xbf16>, vector<8x8xbf16>, vector<8x8xf32> -> vector<8x8xf32>
      %98 = arith.addf %94, %97 : vector<8x8xf32>
      %c0_56 = arith.constant 0 : index
      %c16_57 = arith.constant 16 : index
      %99 = vector.load %arg9[%c0_56, %c16_57] : memref<8x32xf32, #tpu.memory_space<vmem>>, vector<8x8xf32>
      tpu.vector_store %arg9[%c0_56, %c16_57], %98 {strides = array<i32>} : memref<8x32xf32, #tpu.memory_space<vmem>>, vector<8x8xf32>,
      %c0_58 = arith.constant 0 : index
      %c2_59 = arith.constant 2 : index
      %100 = vector.load %arg7[%c0_58, %c2_59] : memref<8x4xf32, #tpu.memory_space<vmem>>, vector<8x1xf32>
      tpu.vector_store %arg7[%c0_58, %c2_59], %80 {strides = array<i32>} : memref<8x4xf32, #tpu.memory_space<vmem>>, vector<8x1xf32>,
      %101 = vector.extract_strided_slice %15 {offsets = [0, 24], sizes = [8, 8], strides = [1, 1]} : vector<8x32xbf16> to vector<8x8xbf16>
      %102 = vector.extract_strided_slice %17 {offsets = [0, 24], sizes = [8, 8], strides = [1, 1]} : vector<8x32xbf16> to vector<8x8xbf16>
      %cst_60 = arith.constant dense<0.000000e+00> : vector<8x8xf32>
      %103 = tpu.matmul %101, %102, %cst_60 {dimension_numbers = #tpu.dot_dimension_numbers<[1], [1], [0], [0], [0, 0, 1, 0], [], []>} : vector<8x8xbf16>, vector<8x8xbf16>, vector<8x8xf32> -> vector<8x8xf32>
      %c0_61 = arith.constant 0 : index
      %c3 = arith.constant 3 : index
      %104 = vector.load %arg7[%c0_61, %c3] : memref<8x4xf32, #tpu.memory_space<vmem>>, vector<8x1xf32>
      %cst_62 = arith.constant dense<0xFF800000> : vector<8xf32>
      %105 = vector.multi_reduction <maximumf>, %103, %cst_62 [1] : vector<8x8xf32> to vector<8xf32>
      %106 = vector.shape_cast %105 : vector<8xf32> to vector<8x1xf32>
      %107 = arith.maximumf %104, %106 : vector<8x1xf32>
      %108 = arith.subf %104, %107 : vector<8x1xf32>
      %109 = math.exp %108 : vector<8x1xf32>
      %110 = vector.broadcast %107 : vector<8x1xf32> to vector<8x8xf32>
      %111 = arith.subf %103, %110 : vector<8x8xf32>
      %112 = math.exp %111 : vector<8x8xf32>
      %c0_63 = arith.constant 0 : index
      %c3_64 = arith.constant 3 : index
      %113 = vector.load %arg8[%c0_63, %c3_64] : memref<8x4xf32, #tpu.memory_space<vmem>>, vector<8x1xf32>
      %114 = arith.mulf %109, %113 : vector<8x1xf32>
      %cst_65 = arith.constant dense<0.000000e+00> : vector<8xf32>
      %115 = vector.multi_reduction <add>, %112, %cst_65 [1] : vector<8x8xf32> to vector<8xf32>
      %116 = vector.shape_cast %115 : vector<8xf32> to vector<8x1xf32>
      %117 = arith.addf %114, %116 : vector<8x1xf32>
      %c0_66 = arith.constant 0 : index
      %c3_67 = arith.constant 3 : index
      %118 = vector.load %arg8[%c0_66, %c3_67] : memref<8x4xf32, #tpu.memory_space<vmem>>, vector<8x1xf32>
      tpu.vector_store %arg8[%c0_66, %c3_67], %117 {strides = array<i32>} : memref<8x4xf32, #tpu.memory_space<vmem>>, vector<8x1xf32>,
      %c0_68 = arith.constant 0 : index
      %c24 = arith.constant 24 : index
      %119 = vector.load %arg9[%c0_68, %c24] : memref<8x32xf32, #tpu.memory_space<vmem>>, vector<8x8xf32>
      %120 = vector.broadcast %109 : vector<8x1xf32> to vector<8x8xf32>
      %121 = arith.mulf %120, %119 : vector<8x8xf32>
      %122 = arith.truncf %112 : vector<8x8xf32> to vector<8x8xbf16>
      %123 = vector.extract_strided_slice %19 {offsets = [0, 24], sizes = [8, 8], strides = [1, 1]} : vector<8x32xbf16> to vector<8x8xbf16>
      %cst_69 = arith.constant dense<0.000000e+00> : vector<8x8xf32>
      %124 = tpu.matmul %122, %123, %cst_69 {dimension_numbers = #tpu.dot_dimension_numbers<[1], [0], [0], [1], [0, 0, 1, 1], [], []>} : vector<8x8xbf16>, vector<8x8xbf16>, vector<8x8xf32> -> vector<8x8xf32>
      %125 = arith.addf %121, %124 : vector<8x8xf32>
      %c0_70 = arith.constant 0 : index
      %c24_71 = arith.constant 24 : index
      %126 = vector.load %arg9[%c0_70, %c24_71] : memref<8x32xf32, #tpu.memory_space<vmem>>, vector<8x8xf32>
      tpu.vector_store %arg9[%c0_70, %c24_71], %125 {strides = array<i32>} : memref<8x32xf32, #tpu.memory_space<vmem>>, vector<8x8xf32>,
      %c0_72 = arith.constant 0 : index
      %c3_73 = arith.constant 3 : index
      %127 = vector.load %arg7[%c0_72, %c3_73] : memref<8x4xf32, #tpu.memory_space<vmem>>, vector<8x1xf32>
      tpu.vector_store %arg7[%c0_72, %c3_73], %107 {strides = array<i32>} : memref<8x4xf32, #tpu.memory_space<vmem>>, vector<8x1xf32>,
    } else {
    }
    %6 = arith.cmpi eq, %arg2, %arg1 : i32
    %7 = arith.extui %6 : i1 to i32
    %c0_i32_2 = arith.constant 0 : i32
    %8 = arith.cmpi ne, %7, %c0_i32_2 : i32
    scf.if %8 {
      %c0 = arith.constant 0 : index
      %c0_5 = arith.constant 0 : index
      %c0_6 = arith.constant 0 : index
      %c0_7 = arith.constant 0 : index
      %12 = vector.load %arg3[%c0, %c0_5, %c0_6, %c0_7] : memref<1x1x8x32xbf16, #tpu.memory_space<vmem>>, vector<1x1x8x32xbf16>
      %13 = vector.shape_cast %12 : vector<1x1x8x32xbf16> to vector<8x32xbf16>
      %cst = arith.constant 3.535160e-01 : bf16
      %14 = vector.broadcast %cst : bf16 to vector<8x32xbf16>
      %15 = arith.mulf %13, %14 : vector<8x32xbf16>
      %c0_8 = arith.constant 0 : index
      %c0_9 = arith.constant 0 : index
      %c0_10 = arith.constant 0 : index
      %c0_11 = arith.constant 0 : index
      %16 = vector.load %arg4[%c0_8, %c0_9, %c0_10, %c0_11] : memref<1x1x8x32xbf16, #tpu.memory_space<vmem>>, vector<1x1x8x32xbf16>
      %17 = vector.shape_cast %16 : vector<1x1x8x32xbf16> to vector<8x32xbf16>
      %c0_12 = arith.constant 0 : index
      %c0_13 = arith.constant 0 : index
      %c0_14 = arith.constant 0 : index
      %c0_15 = arith.constant 0 : index
      %18 = vector.load %arg5[%c0_12, %c0_13, %c0_14, %c0_15] : memref<1x1x8x32xbf16, #tpu.memory_space<vmem>>, vector<1x1x8x32xbf16>
      %19 = vector.shape_cast %18 : vector<1x1x8x32xbf16> to vector<8x32xbf16>
      %20 = tpu.iota {dimensions = array<i32: 0>} : vector<8x8xi32>
      %21 = tpu.iota {dimensions = array<i32: 1>} : vector<8x8xi32>
      %22 = arith.cmpi sle, %21, %20 : vector<8x8xi32>
      %cst_16 = arith.constant 0.000000e+00 : f32
      %cst_17 = arith.constant -1.000000e+30 : f32
      %23 = vector.broadcast %cst_16 : f32 to vector<8x8xf32>
      %24 = vector.broadcast %cst_17 : f32 to vector<8x8xf32>
      %25 = arith.select %22, %23, %24 : vector<8x8xi1>, vector<8x8xf32>
      %26 = vector.extract_strided_slice %15 {offsets = [0, 0], sizes = [8, 8], strides = [1, 1]} : vector<8x32xbf16> to vector<8x8xbf16>
      %27 = vector.extract_strided_slice %17 {offsets = [0, 0], sizes = [8, 8], strides = [1, 1]} : vector<8x32xbf16> to vector<8x8xbf16>
      %cst_18 = arith.constant dense<0.000000e+00> : vector<8x8xf32>
      %28 = tpu.matmul %26, %27, %cst_18 {dimension_numbers = #tpu.dot_dimension_numbers<[1], [1], [0], [0], [0, 0, 1, 0], [], []>} : vector<8x8xbf16>, vector<8x8xbf16>, vector<8x8xf32> -> vector<8x8xf32>
      %29 = arith.addf %28, %25 : vector<8x8xf32>
      %c0_19 = arith.constant 0 : index
      %c0_20 = arith.constant 0 : index
      %30 = vector.load %arg7[%c0_19, %c0_20] : memref<8x4xf32, #tpu.memory_space<vmem>>, vector<8x1xf32>
      %cst_21 = arith.constant dense<0xFF800000> : vector<8xf32>
      %31 = vector.multi_reduction <maximumf>, %29, %cst_21 [1] : vector<8x8xf32> to vector<8xf32>
      %32 = vector.shape_cast %31 : vector<8xf32> to vector<8x1xf32>
      %33 = arith.maximumf %30, %32 : vector<8x1xf32>
      %34 = arith.subf %30, %33 : vector<8x1xf32>
      %35 = math.exp %34 : vector<8x1xf32>
      %36 = vector.broadcast %33 : vector<8x1xf32> to vector<8x8xf32>
      %37 = arith.subf %29, %36 : vector<8x8xf32>
      %38 = math.exp %37 : vector<8x8xf32>
      %c0_22 = arith.constant 0 : index
      %c0_23 = arith.constant 0 : index
      %39 = vector.load %arg8[%c0_22, %c0_23] : memref<8x4xf32, #tpu.memory_space<vmem>>, vector<8x1xf32>
      %40 = arith.mulf %35, %39 : vector<8x1xf32>
      %cst_24 = arith.constant dense<0.000000e+00> : vector<8xf32>
      %41 = vector.multi_reduction <add>, %38, %cst_24 [1] : vector<8x8xf32> to vector<8xf32>
      %42 = vector.shape_cast %41 : vector<8xf32> to vector<8x1xf32>
      %43 = arith.addf %40, %42 : vector<8x1xf32>
      %c0_25 = arith.constant 0 : index
      %c0_26 = arith.constant 0 : index
      %44 = vector.load %arg8[%c0_25, %c0_26] : memref<8x4xf32, #tpu.memory_space<vmem>>, vector<8x1xf32>
      tpu.vector_store %arg8[%c0_25, %c0_26], %43 {strides = array<i32>} : memref<8x4xf32, #tpu.memory_space<vmem>>, vector<8x1xf32>,
      %c0_27 = arith.constant 0 : index
      %c0_28 = arith.constant 0 : index
      %45 = vector.load %arg9[%c0_27, %c0_28] : memref<8x32xf32, #tpu.memory_space<vmem>>, vector<8x8xf32>
      %46 = vector.broadcast %35 : vector<8x1xf32> to vector<8x8xf32>
      %47 = arith.mulf %46, %45 : vector<8x8xf32>
      %48 = arith.truncf %38 : vector<8x8xf32> to vector<8x8xbf16>
      %49 = vector.extract_strided_slice %19 {offsets = [0, 0], sizes = [8, 8], strides = [1, 1]} : vector<8x32xbf16> to vector<8x8xbf16>
      %cst_29 = arith.constant dense<0.000000e+00> : vector<8x8xf32>
      %50 = tpu.matmul %48, %49, %cst_29 {dimension_numbers = #tpu.dot_dimension_numbers<[1], [0], [0], [1], [0, 0, 1, 1], [], []>} : vector<8x8xbf16>, vector<8x8xbf16>, vector<8x8xf32> -> vector<8x8xf32>
      %51 = arith.addf %47, %50 : vector<8x8xf32>
      %c0_30 = arith.constant 0 : index
      %c0_31 = arith.constant 0 : index
      %52 = vector.load %arg9[%c0_30, %c0_31] : memref<8x32xf32, #tpu.memory_space<vmem>>, vector<8x8xf32>
      tpu.vector_store %arg9[%c0_30, %c0_31], %51 {strides = array<i32>} : memref<8x32xf32, #tpu.memory_space<vmem>>, vector<8x8xf32>,
      %c0_32 = arith.constant 0 : index
      %c0_33 = arith.constant 0 : index
      %53 = vector.load %arg7[%c0_32, %c0_33] : memref<8x4xf32, #tpu.memory_space<vmem>>, vector<8x1xf32>
      tpu.vector_store %arg7[%c0_32, %c0_33], %33 {strides = array<i32>} : memref<8x4xf32, #tpu.memory_space<vmem>>, vector<8x1xf32>,
      %54 = vector.extract_strided_slice %15 {offsets = [0, 8], sizes = [8, 8], strides = [1, 1]} : vector<8x32xbf16> to vector<8x8xbf16>
      %55 = vector.extract_strided_slice %17 {offsets = [0, 8], sizes = [8, 8], strides = [1, 1]} : vector<8x32xbf16> to vector<8x8xbf16>
      %cst_34 = arith.constant dense<0.000000e+00> : vector<8x8xf32>
      %56 = tpu.matmul %54, %55, %cst_34 {dimension_numbers = #tpu.dot_dimension_numbers<[1], [1], [0], [0], [0, 0, 1, 0], [], []>} : vector<8x8xbf16>, vector<8x8xbf16>, vector<8x8xf32> -> vector<8x8xf32>
      %57 = arith.addf %56, %25 : vector<8x8xf32>
      %c0_35 = arith.constant 0 : index
      %c1 = arith.constant 1 : index
      %58 = vector.load %arg7[%c0_35, %c1] : memref<8x4xf32, #tpu.memory_space<vmem>>, vector<8x1xf32>
      %cst_36 = arith.constant dense<0xFF800000> : vector<8xf32>
      %59 = vector.multi_reduction <maximumf>, %57, %cst_36 [1] : vector<8x8xf32> to vector<8xf32>
      %60 = vector.shape_cast %59 : vector<8xf32> to vector<8x1xf32>
      %61 = arith.maximumf %58, %60 : vector<8x1xf32>
      %62 = arith.subf %58, %61 : vector<8x1xf32>
      %63 = math.exp %62 : vector<8x1xf32>
      %64 = vector.broadcast %61 : vector<8x1xf32> to vector<8x8xf32>
      %65 = arith.subf %57, %64 : vector<8x8xf32>
      %66 = math.exp %65 : vector<8x8xf32>
      %c0_37 = arith.constant 0 : index
      %c1_38 = arith.constant 1 : index
      %67 = vector.load %arg8[%c0_37, %c1_38] : memref<8x4xf32, #tpu.memory_space<vmem>>, vector<8x1xf32>
      %68 = arith.mulf %63, %67 : vector<8x1xf32>
      %cst_39 = arith.constant dense<0.000000e+00> : vector<8xf32>
      %69 = vector.multi_reduction <add>, %66, %cst_39 [1] : vector<8x8xf32> to vector<8xf32>
      %70 = vector.shape_cast %69 : vector<8xf32> to vector<8x1xf32>
      %71 = arith.addf %68, %70 : vector<8x1xf32>
      %c0_40 = arith.constant 0 : index
      %c1_41 = arith.constant 1 : index
      %72 = vector.load %arg8[%c0_40, %c1_41] : memref<8x4xf32, #tpu.memory_space<vmem>>, vector<8x1xf32>
      tpu.vector_store %arg8[%c0_40, %c1_41], %71 {strides = array<i32>} : memref<8x4xf32, #tpu.memory_space<vmem>>, vector<8x1xf32>,
      %c0_42 = arith.constant 0 : index
      %c8 = arith.constant 8 : index
      %73 = vector.load %arg9[%c0_42, %c8] : memref<8x32xf32, #tpu.memory_space<vmem>>, vector<8x8xf32>
      %74 = vector.broadcast %63 : vector<8x1xf32> to vector<8x8xf32>
      %75 = arith.mulf %74, %73 : vector<8x8xf32>
      %76 = arith.truncf %66 : vector<8x8xf32> to vector<8x8xbf16>
      %77 = vector.extract_strided_slice %19 {offsets = [0, 8], sizes = [8, 8], strides = [1, 1]} : vector<8x32xbf16> to vector<8x8xbf16>
      %cst_43 = arith.constant dense<0.000000e+00> : vector<8x8xf32>
      %78 = tpu.matmul %76, %77, %cst_43 {dimension_numbers = #tpu.dot_dimension_numbers<[1], [0], [0], [1], [0, 0, 1, 1], [], []>} : vector<8x8xbf16>, vector<8x8xbf16>, vector<8x8xf32> -> vector<8x8xf32>
      %79 = arith.addf %75, %78 : vector<8x8xf32>
      %c0_44 = arith.constant 0 : index
      %c8_45 = arith.constant 8 : index
      %80 = vector.load %arg9[%c0_44, %c8_45] : memref<8x32xf32, #tpu.memory_space<vmem>>, vector<8x8xf32>
      tpu.vector_store %arg9[%c0_44, %c8_45], %79 {strides = array<i32>} : memref<8x32xf32, #tpu.memory_space<vmem>>, vector<8x8xf32>,
      %c0_46 = arith.constant 0 : index
      %c1_47 = arith.constant 1 : index
      %81 = vector.load %arg7[%c0_46, %c1_47] : memref<8x4xf32, #tpu.memory_space<vmem>>, vector<8x1xf32>
      tpu.vector_store %arg7[%c0_46, %c1_47], %61 {strides = array<i32>} : memref<8x4xf32, #tpu.memory_space<vmem>>, vector<8x1xf32>,
      %82 = vector.extract_strided_slice %15 {offsets = [0, 16], sizes = [8, 8], strides = [1, 1]} : vector<8x32xbf16> to vector<8x8xbf16>
      %83 = vector.extract_strided_slice %17 {offsets = [0, 16], sizes = [8, 8], strides = [1, 1]} : vector<8x32xbf16> to vector<8x8xbf16>
      %cst_48 = arith.constant dense<0.000000e+00> : vector<8x8xf32>
      %84 = tpu.matmul %82, %83, %cst_48 {dimension_numbers = #tpu.dot_dimension_numbers<[1], [1], [0], [0], [0, 0, 1, 0], [], []>} : vector<8x8xbf16>, vector<8x8xbf16>, vector<8x8xf32> -> vector<8x8xf32>
      %85 = arith.addf %84, %25 : vector<8x8xf32>
      %c0_49 = arith.constant 0 : index
      %c2 = arith.constant 2 : index
      %86 = vector.load %arg7[%c0_49, %c2] : memref<8x4xf32, #tpu.memory_space<vmem>>, vector<8x1xf32>
      %cst_50 = arith.constant dense<0xFF800000> : vector<8xf32>
      %87 = vector.multi_reduction <maximumf>, %85, %cst_50 [1] : vector<8x8xf32> to vector<8xf32>
      %88 = vector.shape_cast %87 : vector<8xf32> to vector<8x1xf32>
      %89 = arith.maximumf %86, %88 : vector<8x1xf32>
      %90 = arith.subf %86, %89 : vector<8x1xf32>
      %91 = math.exp %90 : vector<8x1xf32>
      %92 = vector.broadcast %89 : vector<8x1xf32> to vector<8x8xf32>
      %93 = arith.subf %85, %92 : vector<8x8xf32>
      %94 = math.exp %93 : vector<8x8xf32>
      %c0_51 = arith.constant 0 : index
      %c2_52 = arith.constant 2 : index
      %95 = vector.load %arg8[%c0_51, %c2_52] : memref<8x4xf32, #tpu.memory_space<vmem>>, vector<8x1xf32>
      %96 = arith.mulf %91, %95 : vector<8x1xf32>
      %cst_53 = arith.constant dense<0.000000e+00> : vector<8xf32>
      %97 = vector.multi_reduction <add>, %94, %cst_53 [1] : vector<8x8xf32> to vector<8xf32>
      %98 = vector.shape_cast %97 : vector<8xf32> to vector<8x1xf32>
      %99 = arith.addf %96, %98 : vector<8x1xf32>
      %c0_54 = arith.constant 0 : index
      %c2_55 = arith.constant 2 : index
      %100 = vector.load %arg8[%c0_54, %c2_55] : memref<8x4xf32, #tpu.memory_space<vmem>>, vector<8x1xf32>
      tpu.vector_store %arg8[%c0_54, %c2_55], %99 {strides = array<i32>} : memref<8x4xf32, #tpu.memory_space<vmem>>, vector<8x1xf32>,
      %c0_56 = arith.constant 0 : index
      %c16 = arith.constant 16 : index
      %101 = vector.load %arg9[%c0_56, %c16] : memref<8x32xf32, #tpu.memory_space<vmem>>, vector<8x8xf32>
      %102 = vector.broadcast %91 : vector<8x1xf32> to vector<8x8xf32>
      %103 = arith.mulf %102, %101 : vector<8x8xf32>
      %104 = arith.truncf %94 : vector<8x8xf32> to vector<8x8xbf16>
      %105 = vector.extract_strided_slice %19 {offsets = [0, 16], sizes = [8, 8], strides = [1, 1]} : vector<8x32xbf16> to vector<8x8xbf16>
      %cst_57 = arith.constant dense<0.000000e+00> : vector<8x8xf32>
      %106 = tpu.matmul %104, %105, %cst_57 {dimension_numbers = #tpu.dot_dimension_numbers<[1], [0], [0], [1], [0, 0, 1, 1], [], []>} : vector<8x8xbf16>, vector<8x8xbf16>, vector<8x8xf32> -> vector<8x8xf32>
      %107 = arith.addf %103, %106 : vector<8x8xf32>
      %c0_58 = arith.constant 0 : index
      %c16_59 = arith.constant 16 : index
      %108 = vector.load %arg9[%c0_58, %c16_59] : memref<8x32xf32, #tpu.memory_space<vmem>>, vector<8x8xf32>
      tpu.vector_store %arg9[%c0_58, %c16_59], %107 {strides = array<i32>} : memref<8x32xf32, #tpu.memory_space<vmem>>, vector<8x8xf32>,
      %c0_60 = arith.constant 0 : index
      %c2_61 = arith.constant 2 : index
      %109 = vector.load %arg7[%c0_60, %c2_61] : memref<8x4xf32, #tpu.memory_space<vmem>>, vector<8x1xf32>
      tpu.vector_store %arg7[%c0_60, %c2_61], %89 {strides = array<i32>} : memref<8x4xf32, #tpu.memory_space<vmem>>, vector<8x1xf32>,
      %110 = vector.extract_strided_slice %15 {offsets = [0, 24], sizes = [8, 8], strides = [1, 1]} : vector<8x32xbf16> to vector<8x8xbf16>
      %111 = vector.extract_strided_slice %17 {offsets = [0, 24], sizes = [8, 8], strides = [1, 1]} : vector<8x32xbf16> to vector<8x8xbf16>
      %cst_62 = arith.constant dense<0.000000e+00> : vector<8x8xf32>
      %112 = tpu.matmul %110, %111, %cst_62 {dimension_numbers = #tpu.dot_dimension_numbers<[1], [1], [0], [0], [0, 0, 1, 0], [], []>} : vector<8x8xbf16>, vector<8x8xbf16>, vector<8x8xf32> -> vector<8x8xf32>
      %113 = arith.addf %112, %25 : vector<8x8xf32>
      %c0_63 = arith.constant 0 : index
      %c3 = arith.constant 3 : index
      %114 = vector.load %arg7[%c0_63, %c3] : memref<8x4xf32, #tpu.memory_space<vmem>>, vector<8x1xf32>
      %cst_64 = arith.constant dense<0xFF800000> : vector<8xf32>
      %115 = vector.multi_reduction <maximumf>, %113, %cst_64 [1] : vector<8x8xf32> to vector<8xf32>
      %116 = vector.shape_cast %115 : vector<8xf32> to vector<8x1xf32>
      %117 = arith.maximumf %114, %116 : vector<8x1xf32>
      %118 = arith.subf %114, %117 : vector<8x1xf32>
      %119 = math.exp %118 : vector<8x1xf32>
      %120 = vector.broadcast %117 : vector<8x1xf32> to vector<8x8xf32>
      %121 = arith.subf %113, %120 : vector<8x8xf32>
      %122 = math.exp %121 : vector<8x8xf32>
      %c0_65 = arith.constant 0 : index
      %c3_66 = arith.constant 3 : index
      %123 = vector.load %arg8[%c0_65, %c3_66] : memref<8x4xf32, #tpu.memory_space<vmem>>, vector<8x1xf32>
      %124 = arith.mulf %119, %123 : vector<8x1xf32>
      %cst_67 = arith.constant dense<0.000000e+00> : vector<8xf32>
      %125 = vector.multi_reduction <add>, %122, %cst_67 [1] : vector<8x8xf32> to vector<8xf32>
      %126 = vector.shape_cast %125 : vector<8xf32> to vector<8x1xf32>
      %127 = arith.addf %124, %126 : vector<8x1xf32>
      %c0_68 = arith.constant 0 : index
      %c3_69 = arith.constant 3 : index
      %128 = vector.load %arg8[%c0_68, %c3_69] : memref<8x4xf32, #tpu.memory_space<vmem>>, vector<8x1xf32>
      tpu.vector_store %arg8[%c0_68, %c3_69], %127 {strides = array<i32>} : memref<8x4xf32, #tpu.memory_space<vmem>>, vector<8x1xf32>,
      %c0_70 = arith.constant 0 : index
      %c24 = arith.constant 24 : index
      %129 = vector.load %arg9[%c0_70, %c24] : memref<8x32xf32, #tpu.memory_space<vmem>>, vector<8x8xf32>
      %130 = vector.broadcast %119 : vector<8x1xf32> to vector<8x8xf32>
      %131 = arith.mulf %130, %129 : vector<8x8xf32>
      %132 = arith.truncf %122 : vector<8x8xf32> to vector<8x8xbf16>
      %133 = vector.extract_strided_slice %19 {offsets = [0, 24], sizes = [8, 8], strides = [1, 1]} : vector<8x32xbf16> to vector<8x8xbf16>
      %cst_71 = arith.constant dense<0.000000e+00> : vector<8x8xf32>
      %134 = tpu.matmul %132, %133, %cst_71 {dimension_numbers = #tpu.dot_dimension_numbers<[1], [0], [0], [1], [0, 0, 1, 1], [], []>} : vector<8x8xbf16>, vector<8x8xbf16>, vector<8x8xf32> -> vector<8x8xf32>
      %135 = arith.addf %131, %134 : vector<8x8xf32>
      %c0_72 = arith.constant 0 : index
      %c24_73 = arith.constant 24 : index
      %136 = vector.load %arg9[%c0_72, %c24_73] : memref<8x32xf32, #tpu.memory_space<vmem>>, vector<8x8xf32>
      tpu.vector_store %arg9[%c0_72, %c24_73], %135 {strides = array<i32>} : memref<8x32xf32, #tpu.memory_space<vmem>>, vector<8x8xf32>,
      %c0_74 = arith.constant 0 : index
      %c3_75 = arith.constant 3 : index
      %137 = vector.load %arg7[%c0_74, %c3_75] : memref<8x4xf32, #tpu.memory_space<vmem>>, vector<8x1xf32>
      tpu.vector_store %arg7[%c0_74, %c3_75], %117 {strides = array<i32>} : memref<8x4xf32, #tpu.memory_space<vmem>>, vector<8x1xf32>,
    } else {
    }
    %c0_i32_3 = arith.constant 0 : i32
    %9 = arith.cmpi eq, %arg2, %c0_i32_3 : i32
    %10 = arith.extui %9 : i1 to i32
    %c0_i32_4 = arith.constant 0 : i32
    %11 = arith.cmpi ne, %10, %c0_i32_4 : i32
    scf.if %11 {
      %c0 = arith.constant 0 : index
      %c0_5 = arith.constant 0 : index
      %12 = vector.load %arg8[%c0, %c0_5] : memref<8x4xf32, #tpu.memory_space<vmem>>, vector<8x1xf32>
      %13 = tpu.reciprocal %12 {approx = true} : vector<8x1xf32> -> vector<8x1xf32>
      %c0_6 = arith.constant 0 : index
      %c0_7 = arith.constant 0 : index
      %14 = vector.load %arg9[%c0_6, %c0_7] : memref<8x32xf32, #tpu.memory_space<vmem>>, vector<8x8xf32>
      %15 = vector.broadcast %13 : vector<8x1xf32> to vector<8x8xf32>
      %16 = arith.mulf %14, %15 : vector<8x8xf32>
      %c0_8 = arith.constant 0 : index
      %c1 = arith.constant 1 : index
      %17 = vector.load %arg8[%c0_8, %c1] : memref<8x4xf32, #tpu.memory_space<vmem>>, vector<8x1xf32>
      %18 = tpu.reciprocal %17 {approx = true} : vector<8x1xf32> -> vector<8x1xf32>
      %c0_9 = arith.constant 0 : index
      %c8 = arith.constant 8 : index
      %19 = vector.load %arg9[%c0_9, %c8] : memref<8x32xf32, #tpu.memory_space<vmem>>, vector<8x8xf32>
      %20 = vector.broadcast %18 : vector<8x1xf32> to vector<8x8xf32>
      %21 = arith.mulf %19, %20 : vector<8x8xf32>
      %c0_10 = arith.constant 0 : index
      %c2 = arith.constant 2 : index
      %22 = vector.load %arg8[%c0_10, %c2] : memref<8x4xf32, #tpu.memory_space<vmem>>, vector<8x1xf32>
      %23 = tpu.reciprocal %22 {approx = true} : vector<8x1xf32> -> vector<8x1xf32>
      %c0_11 = arith.constant 0 : index
      %c16 = arith.constant 16 : index
      %24 = vector.load %arg9[%c0_11, %c16] : memref<8x32xf32, #tpu.memory_space<vmem>>, vector<8x8xf32>
      %25 = vector.broadcast %23 : vector<8x1xf32> to vector<8x8xf32>
      %26 = arith.mulf %24, %25 : vector<8x8xf32>
      %c0_12 = arith.constant 0 : index
      %c3 = arith.constant 3 : index
      %27 = vector.load %arg8[%c0_12, %c3] : memref<8x4xf32, #tpu.memory_space<vmem>>, vector<8x1xf32>
      %28 = tpu.reciprocal %27 {approx = true} : vector<8x1xf32> -> vector<8x1xf32>
      %c0_13 = arith.constant 0 : index
      %c24 = arith.constant 24 : index
      %29 = vector.load %arg9[%c0_13, %c24] : memref<8x32xf32, #tpu.memory_space<vmem>>, vector<8x8xf32>
      %30 = vector.broadcast %28 : vector<8x1xf32> to vector<8x8xf32>
      %31 = arith.mulf %29, %30 : vector<8x8xf32>
      %32 = tpu.concatenate %16, %21, %26, %31 in 1 : vector<8x8xf32>, vector<8x8xf32>, vector<8x8xf32>, vector<8x8xf32> -> vector<8x32xf32>
      %33 = arith.truncf %32 : vector<8x32xf32> to vector<8x32xbf16>
      %c0_14 = arith.constant 0 : index
      %c0_15 = arith.constant 0 : index
      %c0_16 = arith.constant 0 : index
      %34 = vector.load %arg6[%c0_14, %c0_15, %c0_16] : memref<1x8x32xbf16, #tpu.memory_space<vmem>>, vector<1x8x32xbf16>
      %35 = vector.shape_cast %34 : vector<1x8x32xbf16> to vector<8x32xbf16>
      %36 = vector.shape_cast %33 : vector<8x32xbf16> to vector<1x8x32xbf16>
      tpu.vector_store %arg6[%c0_14, %c0_15, %c0_16], %36 {strides = array<i32>} : memref<1x8x32xbf16, #tpu.memory_space<vmem>>, vector<1x8x32xbf16>,
    } else {
    }
    return
  }
  func.func @transform_0(%arg0: i32, %arg1: i32, %arg2: i32) -> (i32, i32, i32, i32) {
    %c0_i32 = arith.constant 0 : i32
    %c0_i32_0 = arith.constant 0 : i32
    %c0_i32_1 = arith.constant 0 : i32
    return %c0_i32, %arg0, %arg1, %c0_i32_0 : i32, i32, i32, i32
  }
  func.func @transform_1(%arg0: i32, %arg1: i32, %arg2: i32) -> (i32, i32, i32, i32) {
    %0 = arith.minsi %arg2, %arg1 : i32
    %c1_i32 = arith.constant 1 : i32
    %c0_i32 = arith.constant 0 : i32
    %c0_i32_0 = arith.constant 0 : i32
    return %c1_i32, %arg0, %0, %c0_i32 : i32, i32, i32, i32
  }
  func.func @transform_2(%arg0: i32, %arg1: i32, %arg2: i32) -> (i32, i32, i32, i32) {
    %0 = arith.minsi %arg2, %arg1 : i32
    %c2_i32 = arith.constant 2 : i32
    %c0_i32 = arith.constant 0 : i32
    %c0_i32_0 = arith.constant 0 : i32
    return %c2_i32, %arg0, %0, %c0_i32 : i32, i32, i32, i32
  }
  func.func @transform_3(%arg0: i32, %arg1: i32, %arg2: i32) -> (i32, i32, i32) {
    %c0_i32 = arith.constant 0 : i32
    %c0_i32_0 = arith.constant 0 : i32
    return %arg0, %arg1, %c0_i32 : i32, i32, i32
  }
}

module attributes {stable_mosaic.version = 11 : i64} {
  func.func @_ln_lmhead_kernel(%arg0: i32, %arg1: i32, %arg2: memref<16x32xbf16, #tpu.memory_space<vmem>>, %arg3: memref<1x32xf32, #tpu.memory_space<vmem>>, %arg4: memref<1x32xf32, #tpu.memory_space<vmem>>, %arg5: memref<256x32xbf16, #tpu.memory_space<vmem>>, %arg6: memref<16x256xf32, #tpu.memory_space<vmem>>) attributes {dimension_semantics = [#tpu.dimension_semantics<parallel>, #tpu.dimension_semantics<parallel>], iteration_bounds = array<i64: 1, 1>, scalar_prefetch = 0 : i64, scratch_operands = 0 : i64, tpu.core_type = #tpu.core_type<tc>, window_params = [{transform_indices = @transform_0, window_bounds = array<i64: 16, 32>}, {pipeline_mode = #tpu.pipeline_mode<synchronous>, transform_indices = @transform_1, window_bounds = array<i64: 1, 32>}, {pipeline_mode = #tpu.pipeline_mode<synchronous>, transform_indices = @transform_2, window_bounds = array<i64: 1, 32>}, {transform_indices = @transform_3, window_bounds = array<i64: 256, 32>}, {transform_indices = @transform_4, window_bounds = array<i64: 16, 256>}]} {
    %c0 = arith.constant 0 : index
    %c0_0 = arith.constant 0 : index
    %0 = vector.load %arg2[%c0, %c0_0] : memref<16x32xbf16, #tpu.memory_space<vmem>>, vector<16x32xbf16>
    %1 = arith.extf %0 : vector<16x32xbf16> to vector<16x32xf32>
    %c0_1 = arith.constant 0 : index
    %c0_2 = arith.constant 0 : index
    %2 = vector.load %arg3[%c0_1, %c0_2] : memref<1x32xf32, #tpu.memory_space<vmem>>, vector<1x32xf32>
    %c0_3 = arith.constant 0 : index
    %c0_4 = arith.constant 0 : index
    %3 = vector.load %arg4[%c0_3, %c0_4] : memref<1x32xf32, #tpu.memory_space<vmem>>, vector<1x32xf32>
    %cst = arith.constant dense<0.000000e+00> : vector<16xf32>
    %4 = vector.multi_reduction <add>, %1, %cst [1] : vector<16x32xf32> to vector<16xf32>
    %5 = vector.shape_cast %4 : vector<16xf32> to vector<16x1xf32>
    %cst_5 = arith.constant 3.200000e+01 : f32
    %6 = vector.broadcast %cst_5 : f32 to vector<16x1xf32>
    %7 = arith.divf %5, %6 : vector<16x1xf32>
    %8 = vector.broadcast %7 : vector<16x1xf32> to vector<16x32xf32>
    %9 = arith.subf %1, %8 : vector<16x32xf32>
    %10 = arith.mulf %9, %9 : vector<16x32xf32>
    %cst_6 = arith.constant dense<0.000000e+00> : vector<16xf32>
    %11 = vector.multi_reduction <add>, %10, %cst_6 [1] : vector<16x32xf32> to vector<16xf32>
    %12 = vector.shape_cast %11 : vector<16xf32> to vector<16x1xf32>
    %cst_7 = arith.constant 3.200000e+01 : f32
    %13 = vector.broadcast %cst_7 : f32 to vector<16x1xf32>
    %14 = arith.divf %12, %13 : vector<16x1xf32>
    %15 = vector.broadcast %7 : vector<16x1xf32> to vector<16x32xf32>
    %16 = arith.subf %1, %15 : vector<16x32xf32>
    %cst_8 = arith.constant 9.99999974E-6 : f32
    %17 = vector.broadcast %cst_8 : f32 to vector<16x1xf32>
    %18 = arith.addf %14, %17 : vector<16x1xf32>
    %19 = math.rsqrt %18 : vector<16x1xf32>
    %20 = vector.broadcast %19 : vector<16x1xf32> to vector<16x32xf32>
    %21 = arith.mulf %16, %20 : vector<16x32xf32>
    %22 = vector.broadcast %2 : vector<1x32xf32> to vector<16x32xf32>
    %23 = arith.mulf %21, %22 : vector<16x32xf32>
    %24 = vector.broadcast %3 : vector<1x32xf32> to vector<16x32xf32>
    %25 = arith.addf %23, %24 : vector<16x32xf32>
    %26 = arith.truncf %25 : vector<16x32xf32> to vector<16x32xbf16>
    %c0_9 = arith.constant 0 : index
    %c0_10 = arith.constant 0 : index
    %27 = vector.load %arg5[%c0_9, %c0_10] : memref<256x32xbf16, #tpu.memory_space<vmem>>, vector<256x32xbf16>
    %cst_11 = arith.constant dense<0.000000e+00> : vector<16x256xf32>
    %28 = tpu.matmul %26, %27, %cst_11 {dimension_numbers = #tpu.dot_dimension_numbers<[1], [1], [0], [0], [0, 0, 1, 0], [], []>} : vector<16x32xbf16>, vector<256x32xbf16>, vector<16x256xf32> -> vector<16x256xf32>
    %c0_12 = arith.constant 0 : index
    %c0_13 = arith.constant 0 : index
    %29 = vector.load %arg6[%c0_12, %c0_13] : memref<16x256xf32, #tpu.memory_space<vmem>>, vector<16x256xf32>
    tpu.vector_store %arg6[%c0_12, %c0_13], %28 {strides = array<i32>} : memref<16x256xf32, #tpu.memory_space<vmem>>, vector<16x256xf32>,
    return
  }
  func.func @transform_0(%arg0: i32, %arg1: i32) -> (i32, i32) {
    %c0_i32 = arith.constant 0 : i32
    %c0_i32_0 = arith.constant 0 : i32
    return %arg0, %c0_i32 : i32, i32
  }
  func.func @transform_1(%arg0: i32, %arg1: i32) -> (i32, i32) {
    %c0_i32 = arith.constant 0 : i32
    %c0_i32_0 = arith.constant 0 : i32
    %c0_i32_1 = arith.constant 0 : i32
    return %c0_i32, %c0_i32_0 : i32, i32
  }
  func.func @transform_2(%arg0: i32, %arg1: i32) -> (i32, i32) {
    %c0_i32 = arith.constant 0 : i32
    %c0_i32_0 = arith.constant 0 : i32
    %c0_i32_1 = arith.constant 0 : i32
    return %c0_i32, %c0_i32_0 : i32, i32
  }
  func.func @transform_3(%arg0: i32, %arg1: i32) -> (i32, i32) {
    %c0_i32 = arith.constant 0 : i32
    %c0_i32_0 = arith.constant 0 : i32
    return %arg1, %c0_i32 : i32, i32
  }
  func.func @transform_4(%arg0: i32, %arg1: i32) -> (i32, i32) {
    %c0_i32 = arith.constant 0 : i32
    return %arg0, %arg1 : i32, i32
  }
}

</mosaic_0001>

<llo_original>
// kernel: _lambda_.9
$region0: #{_lambda_.9}
  #allocation0 [shape = 'u32[]', space=smem, size = 0x4, offset = 0x4, fixed_abs, tag = 'smem constant byte address 0x4 - core index']
  #allocation1 [shape = 'u32[144,128]{1,0:T(1,128)}', space=vmem, size = 0x12000, scoped, tag = 'internal scratch']
  %s0 = inlined_call_operand.vmem [shape: bf16[16,32], index: 0, kind: input, shape index: {}]
  %s1 = inlined_call_operand.vmem [shape: f32[1,32], index: 1, kind: input, shape index: {}]
  %s2 = inlined_call_operand.vmem [shape: f32[1,32], index: 2, kind: input, shape index: {}]
  %s3 = inlined_call_operand.vmem [shape: bf16[32,96], index: 3, kind: input, shape index: {}]
  %s4 = inlined_call_operand.vmem [shape: f32[1,96], index: 4, kind: input, shape index: {}]
  %s5 = inlined_call_operand.vmem [shape: bf16[3,16,32], index: 5, kind: output, shape index: {}]
  %s6 = sld [smem:[#allocation0]]
  $region30: #{_lambda_.9} parent=0
    _
  %s8 = ssub.s32 1, %s6
  %s9 = scalar_select 0, %s8, %s6
  // Predicated region
  $region2: #{_lambda_.9} parent=0 // pred_check
    _
  $region3: #{_lambda_.9} parent=0 // pred_check_branch
    %11 = sbr.rel (0) target = $region5
  $region4: #{_lambda_.9} parent=0 // pred_region
    _
  $region5: #{_lambda_.9} parent=0 // pred_fallthru
    _
  // Predicated region
  $region6: #{_lambda_.9} parent=0 // pred_check
    _
  $region7: #{_lambda_.9} parent=0 // pred_check_branch
    %13 = sbr.rel (0) target = $region9
  $region8: #{_lambda_.9} parent=0 // pred_region
    _
  $region9: #{_lambda_.9} parent=0 // pred_fallthru
    _
  // Predicated region
  $region10: #{_lambda_.9} parent=0 // pred_check
    _
  $region11: #{_lambda_.9} parent=0 // pred_check_branch
    %15 = sbr.rel (0) target = $region13
  $region12: #{_lambda_.9} parent=0 // pred_region
    _
  $region13: #{_lambda_.9} parent=0 // pred_fallthru
    _
  // Predicated region
  $region14: #{_lambda_.9} parent=0 // pred_check
    _
  $region15: #{_lambda_.9} parent=0 // pred_check_branch
    %17 = sbr.rel (0) target = $region17
  $region16: #{_lambda_.9} parent=0 // pred_region
    _
  $region17: #{_lambda_.9} parent=0 // pred_fallthru
    _
  // Predicated region
  $region18: #{_lambda_.9} parent=0 // pred_check
    _
  $region19: #{_lambda_.9} parent=0 // pred_check_branch
    %19 = sbr.rel (0) target = $region21
  $region20: #{_lambda_.9} parent=0 // pred_region
    _
  $region21: #{_lambda_.9} parent=0 // pred_fallthru
    _
  %v21 = vld [vmem:[%s0] sm:$0xf]
  %v22 = vld [vmem:[%s0 + $0x4] sm:$0xf]
  %v23 = vunpack.c.l.bf16 %v21
  %v24 = vunpack.c.l.bf16 %v22
  %v25 = vld [vmem:[%s1] sm:$0x1]
  %v26 = vld [vmem:[%s2] sm:$0x1]
  %vm27 = vcmask 261120
  %v28 = vsel %vm27, %v23, 0.0
  %29 = vadd.xlane.f32.xlu0 %v28
  %v30 = vpop.xlane.xlu0 %29
  %v31 = vsel %vm27, %v24, 0.0
  %32 = vadd.xlane.f32.xlu0 %v31
  %v33 = vpop.xlane.xlu0 %32
  %v34 = vrcp.pop 32.0
  %v35 = vmul.f32 %v30, %v34
  %v36 = vmul.f32 %v33, %v34
  %v37 = vsub.f32 %v23, %v35
  %v38 = vsub.f32 %v24, %v36
  %v39 = vmul.f32 %v37, %v37
  %v40 = vmul.f32 %v38, %v38
  %v41 = vsel %vm27, %v39, 0.0
  %42 = vadd.xlane.f32.xlu0 %v41
  %v43 = vpop.xlane.xlu0 %42
  %v44 = vsel %vm27, %v40, 0.0
  %45 = vadd.xlane.f32.xlu0 %v44
  %v46 = vpop.xlane.xlu0 %45
  %v47 = vmul.f32 %v43, %v34
  %v48 = vmul.f32 %v46, %v34
  %v49 = vadd.f32 %v47, 1e-05
  %v50 = vadd.f32 %v48, 1e-05
  %v51 = vrsqrt.pop %v49
  %v52 = vrsqrt.pop %v50
  %v53 = vmul.f32 %v37, %v51
  %v54 = vmul.f32 %v38, %v52
  %v56 = vlaneseq
  %v57 = vshrl.u32 %v56, 7
  %v58 = vsub.s32 0, %v57
  %v59 = vrot.slane %v25, %v58
  %v61 = vmul.f32 %v53, %v59
  %v62 = vmul.f32 %v54, %v59
  %v64 = vlaneseq
  %v65 = vshrl.u32 %v64, 7
  %v66 = vsub.s32 0, %v65
  %v67 = vrot.slane %v26, %v66
  %v69 = vadd.f32 %v61, %v67
  %v70 = vadd.f32 %v62, %v67
  %v71 = vpack.c.bf16 %v70, %v69
  %v72 = vld [vmem:[%s3] sm:$0xf]
  %v73 = vld [vmem:[%s3 + $0x4] sm:$0xf]
  %v74 = vld [vmem:[%s3 + $0x8] sm:$0xf]
  %v75 = vld [vmem:[%s3 + $0xc] sm:$0xf]
  %v76 = vld [vmem:[%s4] sm:$0x1]
  %v78 = vlaneseq
  %v79 = vshrl.u32 %v78, 7
  %v80 = vsub.s32 0, %v79
  %v81 = vrot.slane %v76, %v80
  %v87 = vunpack.c.l.b16 %v72
  %v88 = vunpack.c.l.b16 %v73
  %v89 = vunpack.c.l.b16 %v74
  %v90 = vunpack.c.l.b16 %v75
  %v91 = vpack.c.b16 %v88, %v87
  %v92 = vpack.c.b16 %v90, %v89
  %v96 = vsel %vm27, %v71, 0
  %98 = vmatprep.subr.bf16.mxu0 0
  %99 = vmatpush1.bf16.msra.mxu0 %v91
  %100 = vmatprep.subr.bf16.mxu0 0
  %101 = vmatpush1.bf16.msra.mxu0 %v92
  %102 = vmatprep.subr.bf16.mxu0 0
  %103 = vmatpush1.bf16.msra.mxu0 0
  %104 = vmatprep.subr.bf16.mxu0 0
  %105 = vmatpush1.bf16.msra.mxu0 0
  %106 = vmatprep.subr.bf16.mxu0 0
  %107 = vmatpush1.bf16.msra.mxu0 0
  %108 = vmatprep.subr.bf16.mxu0 0
  %109 = vmatpush1.bf16.msra.mxu0 0
  %110 = vmatprep.subr.bf16.mxu0 0
  %111 = vmatpush1.bf16.msra.mxu0 0
  %112 = vmatprep.subr.bf16.mxu0 0
  %113 = vmatpush1.bf16.msra.mxu0 0
  %114 = vmatprep.subr.bf16.mxu0 0
  %115 = vmatpush1.bf16.msra.mxu0 0
  %116 = vmatprep.subr.bf16.mxu0 0
  %117 = vmatpush1.bf16.msra.mxu0 0
  %118 = vmatprep.subr.bf16.mxu0 0
  %119 = vmatpush1.bf16.msra.mxu0 0
  %120 = vmatprep.subr.bf16.mxu0 0
  %121 = vmatpush1.bf16.msra.mxu0 0
  %122 = vmatprep.subr.bf16.mxu0 0
  %123 = vmatpush1.bf16.msra.mxu0 0
  %124 = vmatprep.subr.bf16.mxu0 0
  %125 = vmatpush1.bf16.msra.mxu0 0
  %126 = vmatprep.subr.bf16.mxu0 0
  %127 = vmatpush1.bf16.msra.mxu0 0
  %128 = vmatprep.subr.bf16.mxu0 0
  %129 = vmatpush1.bf16.msra.mxu0 0
  %130 = vmatprep.mubr.bf16.mxu0 0
  %131 = vmatmul.mubr.bf16.gmra.mrb[0].mxu0 %v96
  %v132 = vpop.f32.mrb[0].mxu0
  %v133 = vadd.f32 %v81, %v132
  %v134 = vpop.f32.mrb[0].mxu0
  %v135 = vpop.f32.mrb[0].mxu0
  %v136 = vadd.f32 %v81, %v135
  %v137 = vpop.f32.mrb[0].mxu0
  %138 = vdwg.mxu0
  %v139 = vpack.c.bf16 %v136, %v133
  %v141 = vunpack.c.l.b16 %v139
  %v142 = vunpack.c.h.b16 %v139
  %v143 = vpack.c.b16 %v141, %v141
  %v144 = vpack.c.b16 %v142, %v142
  %vm147 = vcmask 257024
  %148 = vst.msk [vmem:[%s5] sm:$0xf] %vm147, %v143
  %149 = vst.msk [vmem:[%s5 + $0x4] sm:$0xf] %vm147, %v144
  %150 = vrot.lane.b32.xlu0 %v143, 96
  %v151 = vpop.permute.xlu0 %150
  %152 = vrot.lane.b32.xlu0 %v144, 96
  %v153 = vpop.permute.xlu0 %152
  %s156 = scalar_lea.vmem %s5, 8
  %157 = vst.msk [vmem:[%s156] sm:$0xf] %vm147, %v151
  %158 = vst.msk [vmem:[%s156 + $0x4] sm:$0xf] %vm147, %v153
  %159 = vrot.lane.b32.xlu0 %v143, 64
  %v160 = vpop.permute.xlu0 %159
  %161 = vrot.lane.b32.xlu0 %v144, 64
  %v162 = vpop.permute.xlu0 %161
  %s165 = scalar_lea.vmem %s5, 16
  %166 = vst.msk [vmem:[%s165] sm:$0xf] %vm147, %v160
  %167 = vst.msk [vmem:[%s165 + $0x4] sm:$0xf] %vm147, %v162
  // Predicated region
  $region22: #{_lambda_.9} parent=0 // pred_check
    _
  $region23: #{_lambda_.9} parent=0 // pred_check_branch
    %169 = sbr.rel (0) target = $region25
  $region24: #{_lambda_.9} parent=0 // pred_region
    _
  $region25: #{_lambda_.9} parent=0 // pred_fallthru
    _
  // Predicated region
  $region26: #{_lambda_.9} parent=0 // pred_check
    _
  $region27: #{_lambda_.9} parent=0 // pred_check_branch
    %171 = sbr.rel (0) target = $region29
  $region28: #{_lambda_.9} parent=0 // pred_region
    _
  $region29: #{_lambda_.9} parent=0 // pred_fallthru
    _

// kernel: _lambda_.11
$region0: #{_lambda_.11}
  #allocation0 [shape = 'u32[]', space=smem, size = 0x4, offset = 0x4, fixed_abs, tag = 'smem constant byte address 0x4 - core index']
  #allocation1 [shape = 'u32[144,128]{1,0:T(1,128)}', space=vmem, size = 0x12000, scoped, tag = 'internal scratch']
  %s0 = inlined_call_operand.vmem [shape: bf16[16,32], index: 0, kind: input, shape index: {}]
  %s1 = inlined_call_operand.vmem [shape: bf16[32,32], index: 1, kind: input, shape index: {}]
  %s2 = inlined_call_operand.vmem [shape: f32[1,32], index: 2, kind: input, shape index: {}]
  %s3 = inlined_call_operand.vmem [shape: bf16[16,32], index: 3, kind: input, shape index: {}]
  %s4 = inlined_call_operand.vmem [shape: bf16[16,32], index: 4, kind: output, shape index: {}]
  %s5 = sld [smem:[#allocation0]]
  $region26: #{_lambda_.11} parent=0
    _
  %s7 = ssub.s32 1, %s5
  %s8 = scalar_select 0, %s7, %s5
  // Predicated region
  $region2: #{_lambda_.11} parent=0 // pred_check
    _
  $region3: #{_lambda_.11} parent=0 // pred_check_branch
    %10 = sbr.rel (0) target = $region5
  $region4: #{_lambda_.11} parent=0 // pred_region
    _
  $region5: #{_lambda_.11} parent=0 // pred_fallthru
    _
  // Predicated region
  $region6: #{_lambda_.11} parent=0 // pred_check
    _
  $region7: #{_lambda_.11} parent=0 // pred_check_branch
    %12 = sbr.rel (0) target = $region9
  $region8: #{_lambda_.11} parent=0 // pred_region
    _
  $region9: #{_lambda_.11} parent=0 // pred_fallthru
    _
  // Predicated region
  $region10: #{_lambda_.11} parent=0 // pred_check
    _
  $region11: #{_lambda_.11} parent=0 // pred_check_branch
    %14 = sbr.rel (0) target = $region13
  $region12: #{_lambda_.11} parent=0 // pred_region
    _
  $region13: #{_lambda_.11} parent=0 // pred_fallthru
    _
  // Predicated region
  $region14: #{_lambda_.11} parent=0 // pred_check
    _
  $region15: #{_lambda_.11} parent=0 // pred_check_branch
    %16 = sbr.rel (0) target = $region17
  $region16: #{_lambda_.11} parent=0 // pred_region
    _
  $region17: #{_lambda_.11} parent=0 // pred_fallthru
    _
  %v18 = vld [vmem:[%s0] sm:$0xf]
  %v19 = vld [vmem:[%s0 + $0x4] sm:$0xf]
  %v20 = vld [vmem:[%s1] sm:$0xf]
  %v21 = vld [vmem:[%s1 + $0x4] sm:$0xf]
  %v22 = vld [vmem:[%s1 + $0x8] sm:$0xf]
  %v23 = vld [vmem:[%s1 + $0xc] sm:$0xf]
  %v24 = vld [vmem:[%s2] sm:$0x1]
  %v26 = vlaneseq
  %v27 = vshrl.u32 %v26, 7
  %v28 = vsub.s32 0, %v27
  %v29 = vrot.slane %v24, %v28
  %v33 = vunpack.c.l.b16 %v18
  %v34 = vunpack.c.l.b16 %v19
  %v35 = vpack.c.b16 %v34, %v33
  %v40 = vunpack.c.l.b16 %v20
  %v41 = vunpack.c.l.b16 %v21
  %v42 = vunpack.c.l.b16 %v22
  %v43 = vunpack.c.l.b16 %v23
  %v44 = vpack.c.b16 %v41, %v40
  %v45 = vpack.c.b16 %v43, %v42
  %vm48 = vcmask 261120
  %v50 = vsel %vm48, %v35, 0
  %52 = vmatprep.subr.bf16.mxu0 0
  %53 = vmatpush1.bf16.msra.mxu0 %v44
  %54 = vmatprep.subr.bf16.mxu0 0
  %55 = vmatpush1.bf16.msra.mxu0 %v45
  %56 = vmatprep.subr.bf16.mxu0 0
  %57 = vmatpush1.bf16.msra.mxu0 0
  %58 = vmatprep.subr.bf16.mxu0 0
  %59 = vmatpush1.bf16.msra.mxu0 0
  %60 = vmatprep.subr.bf16.mxu0 0
  %61 = vmatpush1.bf16.msra.mxu0 0
  %62 = vmatprep.subr.bf16.mxu0 0
  %63 = vmatpush1.bf16.msra.mxu0 0
  %64 = vmatprep.subr.bf16.mxu0 0
  %65 = vmatpush1.bf16.msra.mxu0 0
  %66 = vmatprep.subr.bf16.mxu0 0
  %67 = vmatpush1.bf16.msra.mxu0 0
  %68 = vmatprep.subr.bf16.mxu0 0
  %69 = vmatpush1.bf16.msra.mxu0 0
  %70 = vmatprep.subr.bf16.mxu0 0
  %71 = vmatpush1.bf16.msra.mxu0 0
  %72 = vmatprep.subr.bf16.mxu0 0
  %73 = vmatpush1.bf16.msra.mxu0 0
  %74 = vmatprep.subr.bf16.mxu0 0
  %75 = vmatpush1.bf16.msra.mxu0 0
  %76 = vmatprep.subr.bf16.mxu0 0
  %77 = vmatpush1.bf16.msra.mxu0 0
  %78 = vmatprep.subr.bf16.mxu0 0
  %79 = vmatpush1.bf16.msra.mxu0 0
  %80 = vmatprep.subr.bf16.mxu0 0
  %81 = vmatpush1.bf16.msra.mxu0 0
  %82 = vmatprep.subr.bf16.mxu0 0
  %83 = vmatpush1.bf16.msra.mxu0 0
  %84 = vmatprep.mubr.bf16.mxu0 0
  %85 = vmatmul.mubr.bf16.gmra.mrb[0].mxu0 %v50
  %v86 = vpop.f32.mrb[0].mxu0
  %v87 = vadd.f32 %v29, %v86
  %v88 = vpop.f32.mrb[0].mxu0
  %v89 = vpop.f32.mrb[0].mxu0
  %v90 = vadd.f32 %v29, %v89
  %v91 = vpop.f32.mrb[0].mxu0
  %92 = vdwg.mxu0
  %v93 = vld [vmem:[%s3] sm:$0xf]
  %v94 = vld [vmem:[%s3 + $0x4] sm:$0xf]
  %v95 = vunpack.c.l.bf16 %v93
  %v96 = vunpack.c.l.bf16 %v94
  %v97 = vadd.f32 %v87, %v95
  %v98 = vadd.f32 %v90, %v96
  %v99 = vpack.c.bf16 %v98, %v97
  %v101 = vunpack.c.l.b16 %v99
  %v102 = vunpack.c.h.b16 %v99
  %v103 = vpack.c.b16 %v101, %v101
  %v104 = vpack.c.b16 %v102, %v102
  %vm107 = vcmask 257024
  %108 = vst.msk [vmem:[%s4] sm:$0xf] %vm107, %v103
  %109 = vst.msk [vmem:[%s4 + $0x4] sm:$0xf] %vm107, %v104
  // Predicated region
  $region18: #{_lambda_.11} parent=0 // pred_check
    _
  $region19: #{_lambda_.11} parent=0 // pred_check_branch
    %111 = sbr.rel (0) target = $region21
  $region20: #{_lambda_.11} parent=0 // pred_region
    _
  $region21: #{_lambda_.11} parent=0 // pred_fallthru
    _
  // Predicated region
  $region22: #{_lambda_.11} parent=0 // pred_check
    _
  $region23: #{_lambda_.11} parent=0 // pred_check_branch
    %113 = sbr.rel (0) target = $region25
  $region24: #{_lambda_.11} parent=0 // pred_region
    _
  $region25: #{_lambda_.11} parent=0 // pred_fallthru
    _

// kernel: _lambda_.12
$region0: #{_lambda_.12}
  #allocation0 [shape = 'u32[]', space=smem, size = 0x4, offset = 0x4, fixed_abs, tag = 'smem constant byte address 0x4 - core index']
  #allocation1 [shape = 'u32[144,128]{1,0:T(1,128)}', space=vmem, size = 0x12000, scoped, tag = 'internal scratch']
  #allocation2 [shape = 'bf16[16,32]{1,0:T(16,128)(2,1)}', space=vmem, size = 0x1000, scoped, tag = 'scratch operand']
  #allocation3 [shape = 'f32[16,32]{1,0:T(8,128)}', space=vmem, size = 0x2000, scoped, tag = 'scratch operand']
  %s0 = inlined_call_operand.vmem [shape: bf16[16,32], index: 0, kind: input, shape index: {}]
  %s1 = inlined_call_operand.vmem [shape: f32[1,32], index: 1, kind: input, shape index: {}]
  %s2 = inlined_call_operand.vmem [shape: f32[1,32], index: 2, kind: input, shape index: {}]
  %s3 = inlined_call_operand.vmem [shape: bf16[32,128], index: 3, kind: input, shape index: {}]
  %s4 = inlined_call_operand.vmem [shape: f32[1,128], index: 4, kind: input, shape index: {}]
  %s5 = inlined_call_operand.vmem [shape: bf16[128,32], index: 5, kind: input, shape index: {}]
  %s6 = inlined_call_operand.vmem [shape: f32[1,32], index: 6, kind: input, shape index: {}]
  %s7 = inlined_call_operand.vmem [shape: bf16[16,32], index: 7, kind: output, shape index: {}]
  %s8 = sld [smem:[#allocation0]]
  $region46: #{_lambda_.12} parent=0
    _
  %s10 = ssub.s32 1, %s8
  %s11 = scalar_select 0, %s10, %s8
  // Predicated region
  $region2: #{_lambda_.12} parent=0 // pred_check
    _
  $region3: #{_lambda_.12} parent=0 // pred_check_branch
    %13 = sbr.rel (0) target = $region5
  $region4: #{_lambda_.12} parent=0 // pred_region
    _
  $region5: #{_lambda_.12} parent=0 // pred_fallthru
    _
  // Predicated region
  $region6: #{_lambda_.12} parent=0 // pred_check
    _
  $region7: #{_lambda_.12} parent=0 // pred_check_branch
    %15 = sbr.rel (0) target = $region9
  $region8: #{_lambda_.12} parent=0 // pred_region
    _
  $region9: #{_lambda_.12} parent=0 // pred_fallthru
    _
  // Predicated region
  $region10: #{_lambda_.12} parent=0 // pred_check
    _
  $region11: #{_lambda_.12} parent=0 // pred_check_branch
    %17 = sbr.rel (0) target = $region13
  $region12: #{_lambda_.12} parent=0 // pred_region
    _
  $region13: #{_lambda_.12} parent=0 // pred_fallthru
    _
  // Predicated region
  $region14: #{_lambda_.12} parent=0 // pred_check
    _
  $region15: #{_lambda_.12} parent=0 // pred_check_branch
    %19 = sbr.rel (0) target = $region17
  $region16: #{_lambda_.12} parent=0 // pred_region
    _
  $region17: #{_lambda_.12} parent=0 // pred_fallthru
    _
  // Predicated region
  $region18: #{_lambda_.12} parent=0 // pred_check
    _
  $region19: #{_lambda_.12} parent=0 // pred_check_branch
    %21 = sbr.rel (0) target = $region21
  $region20: #{_lambda_.12} parent=0 // pred_region
    _
  $region21: #{_lambda_.12} parent=0 // pred_fallthru
    _
  // Predicated region
  $region22: #{_lambda_.12} parent=0 // pred_check
    _
  $region23: #{_lambda_.12} parent=0 // pred_check_branch
    %23 = sbr.rel (0) target = $region25
  $region24: #{_lambda_.12} parent=0 // pred_region
    _
  $region25: #{_lambda_.12} parent=0 // pred_fallthru
    _
  // Predicated region
  $region26: #{_lambda_.12} parent=0 // pred_check
    _
  $region27: #{_lambda_.12} parent=0 // pred_check_branch
    %25 = sbr.rel (0) target = $region29
  $region28: #{_lambda_.12} parent=0 // pred_region
    _
  $region29: #{_lambda_.12} parent=0 // pred_fallthru
    _
  %p27 = scmp.eq.s32.totalorder 0, 0
  // Predicated region
  $region30: #{_lambda_.12} parent=0 // pred_check
    %p28 = pneg %p27
  $region31: #{_lambda_.12} parent=0 // pred_check_branch
    %30 = sbr.rel (%p28) target = $region33
  $region32: #{_lambda_.12} parent=0 // pred_region
    %v31 = vld [vmem:[%s0] sm:$0xf]
    %v32 = vld [vmem:[%s0 + $0x4] sm:$0xf]
    %v33 = vunpack.c.l.bf16 %v31
    %v34 = vunpack.c.l.bf16 %v32
    %v35 = vld [vmem:[%s1] sm:$0x1]
    %v36 = vld [vmem:[%s2] sm:$0x1]
    %vm37 = vcmask 261120
    %v38 = vsel %vm37, %v33, 0.0
    %39 = vadd.xlane.f32.xlu0 %v38
    %v40 = vpop.xlane.xlu0 %39
    %v41 = vsel %vm37, %v34, 0.0
    %42 = vadd.xlane.f32.xlu0 %v41
    %v43 = vpop.xlane.xlu0 %42
    %v44 = vrcp.pop 32.0
    %v45 = vmul.f32 %v40, %v44
    %v46 = vmul.f32 %v43, %v44
    %v47 = vsub.f32 %v33, %v45
    %v48 = vsub.f32 %v34, %v46
    %v49 = vmul.f32 %v47, %v47
    %v50 = vmul.f32 %v48, %v48
    %v51 = vsel %vm37, %v49, 0.0
    %52 = vadd.xlane.f32.xlu0 %v51
    %v53 = vpop.xlane.xlu0 %52
    %v54 = vsel %vm37, %v50, 0.0
    %55 = vadd.xlane.f32.xlu0 %v54
    %v56 = vpop.xlane.xlu0 %55
    %v57 = vmul.f32 %v53, %v44
    %v58 = vmul.f32 %v56, %v44
    %v59 = vadd.f32 %v57, 1e-05
    %v60 = vadd.f32 %v58, 1e-05
    %v61 = vrsqrt.pop %v59
    %v62 = vrsqrt.pop %v60
    %v63 = vmul.f32 %v47, %v61
    %v64 = vmul.f32 %v48, %v62
    %v66 = vlaneseq
    %v67 = vshrl.u32 %v66, 7
    %v68 = vsub.s32 0, %v67
    %v69 = vrot.slane %v35, %v68
    %v71 = vmul.f32 %v63, %v69
    %v72 = vmul.f32 %v64, %v69
    %v74 = vlaneseq
    %v75 = vshrl.u32 %v74, 7
    %v76 = vsub.s32 0, %v75
    %v77 = vrot.slane %v36, %v76
    %v79 = vadd.f32 %v71, %v77
    %v80 = vadd.f32 %v72, %v77
    %v81 = vpack.c.bf16 %v80, %v79
    %82 = vst.msk [vmem:[#allocation2] sm:$0xff] %vm37, %v81
    %83 = vst.msk [vmem:[#allocation3] sm:$0xff] %vm37, 0.0
    %84 = vst.msk [vmem:[#allocation3 + $0x8] sm:$0xff] %vm37, 0.0
  $region33: #{_lambda_.12} parent=0 // pred_fallthru
    _
  %v85 = vld [vmem:[#allocation2] sm:$0xff]
  %v86 = vld [vmem:[%s3] sm:$0xf]
  %v87 = vld [vmem:[%s3 + $0x4] sm:$0xf]
  %v88 = vld [vmem:[%s3 + $0x8] sm:$0xf]
  %v89 = vld [vmem:[%s3 + $0xc] sm:$0xf]
  %v90 = vld [vmem:[%s4] sm:$0x1]
  %v92 = vlaneseq
  %v93 = vshrl.u32 %v92, 7
  %v94 = vsub.s32 0, %v93
  %v95 = vrot.slane %v90, %v94
  %v101 = vunpack.c.l.b16 %v86
  %v102 = vunpack.c.l.b16 %v87
  %v103 = vunpack.c.l.b16 %v88
  %v104 = vunpack.c.l.b16 %v89
  %v105 = vpack.c.b16 %v102, %v101
  %v106 = vpack.c.b16 %v104, %v103
  %vm109 = vcmask 261120
  %v111 = vsel %vm109, %v85, 0
  %113 = vmatprep.subr.bf16.mxu0 0
  %114 = vmatpush1.bf16.msra.mxu0 %v105
  %115 = vmatprep.subr.bf16.mxu0 0
  %116 = vmatpush1.bf16.msra.mxu0 %v106
  %117 = vmatprep.subr.bf16.mxu0 0
  %118 = vmatpush1.bf16.msra.mxu0 0
  %119 = vmatprep.subr.bf16.mxu0 0
  %120 = vmatpush1.bf16.msra.mxu0 0
  %121 = vmatprep.subr.bf16.mxu0 0
  %122 = vmatpush1.bf16.msra.mxu0 0
  %123 = vmatprep.subr.bf16.mxu0 0
  %124 = vmatpush1.bf16.msra.mxu0 0
  %125 = vmatprep.subr.bf16.mxu0 0
  %126 = vmatpush1.bf16.msra.mxu0 0
  %127 = vmatprep.subr.bf16.mxu0 0
  %128 = vmatpush1.bf16.msra.mxu0 0
  %129 = vmatprep.subr.bf16.mxu0 0
  %130 = vmatpush1.bf16.msra.mxu0 0
  %131 = vmatprep.subr.bf16.mxu0 0
  %132 = vmatpush1.bf16.msra.mxu0 0
  %133 = vmatprep.subr.bf16.mxu0 0
  %134 = vmatpush1.bf16.msra.mxu0 0
  %135 = vmatprep.subr.bf16.mxu0 0
  %136 = vmatpush1.bf16.msra.mxu0 0
  %137 = vmatprep.subr.bf16.mxu0 0
  %138 = vmatpush1.bf16.msra.mxu0 0
  %139 = vmatprep.subr.bf16.mxu0 0
  %140 = vmatpush1.bf16.msra.mxu0 0
  %141 = vmatprep.subr.bf16.mxu0 0
  %142 = vmatpush1.bf16.msra.mxu0 0
  %143 = vmatprep.subr.bf16.mxu0 0
  %144 = vmatpush1.bf16.msra.mxu0 0
  %145 = vmatprep.mubr.bf16.mxu0 0
  %146 = vmatmul.mubr.bf16.gmra.mrb[0].mxu0 %v111
  %v147 = vpop.f32.mrb[0].mxu0
  %v148 = vadd.f32 %v95, %v147
  %v149 = vpop.f32.mrb[0].mxu0
  %v150 = vpop.f32.mrb[0].mxu0
  %v151 = vadd.f32 %v95, %v150
  %v152 = vpop.f32.mrb[0].mxu0
  %153 = vdwg.mxu0
  %v154 = vmul.f32 %v148, 0.5
  %v155 = vmul.f32 %v151, 0.5
  %v156 = vmul.f32 %v148, 0.044715
  %v157 = vmul.f32 %v151, 0.044715
  %v158 = vmul.f32 %v156, %v148
  %v159 = vmul.f32 %v157, %v151
  %v160 = vmul.f32 %v158, %v148
  %v161 = vmul.f32 %v159, %v151
  %v162 = vadd.f32 %v148, %v160
  %v163 = vadd.f32 %v151, %v161
  %v164 = vmul.f32 %v162, 0.7978846
  %v165 = vmul.f32 %v163, 0.7978846
  %v166 = vtanh.pop %v164
  %v167 = vtanh.pop %v165
  %v168 = vadd.f32 %v166, 1.0
  %v169 = vadd.f32 %v167, 1.0
  %v170 = vmul.f32 %v154, %v168
  %v171 = vmul.f32 %v155, %v169
  %v172 = vld [vmem:[#allocation3] sm:$0xff]
  %v173 = vld [vmem:[#allocation3 + $0x8] sm:$0xff]
  %v174 = vpack.c.bf16 %v171, %v170
  %v175 = vld [vmem:[%s5] sm:$0xf]
  %v176 = vld [vmem:[%s5 + $0x4] sm:$0xf]
  %v177 = vld [vmem:[%s5 + $0x8] sm:$0xf]
  %v178 = vld [vmem:[%s5 + $0xc] sm:$0xf]
  %v179 = vld [vmem:[%s5 + $0x10] sm:$0xf]
  %v180 = vld [vmem:[%s5 + $0x14] sm:$0xf]
  %v181 = vld [vmem:[%s5 + $0x18] sm:$0xf]
  %v182 = vld [vmem:[%s5 + $0x1c] sm:$0xf]
  %v183 = vld [vmem:[%s5 + $0x20] sm:$0xf]
  %v184 = vld [vmem:[%s5 + $0x24] sm:$0xf]
  %v185 = vld [vmem:[%s5 + $0x28] sm:$0xf]
  %v186 = vld [vmem:[%s5 + $0x2c] sm:$0xf]
  %v187 = vld [vmem:[%s5 + $0x30] sm:$0xf]
  %v188 = vld [vmem:[%s5 + $0x34] sm:$0xf]
  %v189 = vld [vmem:[%s5 + $0x38] sm:$0xf]
  %v190 = vld [vmem:[%s5 + $0x3c] sm:$0xf]
  %v207 = vunpack.c.l.b16 %v175
  %v208 = vunpack.c.l.b16 %v176
  %v209 = vunpack.c.l.b16 %v177
  %v210 = vunpack.c.l.b16 %v178
  %v211 = vunpack.c.l.b16 %v179
  %v212 = vunpack.c.l.b16 %v180
  %v213 = vunpack.c.l.b16 %v181
  %v214 = vunpack.c.l.b16 %v182
  %v215 = vunpack.c.l.b16 %v183
  %v216 = vunpack.c.l.b16 %v184
  %v217 = vunpack.c.l.b16 %v185
  %v218 = vunpack.c.l.b16 %v186
  %v219 = vunpack.c.l.b16 %v187
  %v220 = vunpack.c.l.b16 %v188
  %v221 = vunpack.c.l.b16 %v189
  %v222 = vunpack.c.l.b16 %v190
  %v223 = vpack.c.b16 %v208, %v207
  %v224 = vpack.c.b16 %v210, %v209
  %v225 = vpack.c.b16 %v212, %v211
  %v226 = vpack.c.b16 %v214, %v213
  %v227 = vpack.c.b16 %v216, %v215
  %v228 = vpack.c.b16 %v218, %v217
  %v229 = vpack.c.b16 %v220, %v219
  %v230 = vpack.c.b16 %v222, %v221
  %239 = vmatprep.subr.bf16.mxu0 0
  %240 = vmatpush1.bf16.msra.mxu0 %v223
  %241 = vmatprep.subr.bf16.mxu0 0
  %242 = vmatpush1.bf16.msra.mxu0 %v224
  %243 = vmatprep.subr.bf16.mxu0 0
  %244 = vmatpush1.bf16.msra.mxu0 %v225
  %245 = vmatprep.subr.bf16.mxu0 0
  %246 = vmatpush1.bf16.msra.mxu0 %v226
  %247 = vmatprep.subr.bf16.mxu0 0
  %248 = vmatpush1.bf16.msra.mxu0 %v227
  %249 = vmatprep.subr.bf16.mxu0 0
  %250 = vmatpush1.bf16.msra.mxu0 %v228
  %251 = vmatprep.subr.bf16.mxu0 0
  %252 = vmatpush1.bf16.msra.mxu0 %v229
  %253 = vmatprep.subr.bf16.mxu0 0
  %254 = vmatpush1.bf16.msra.mxu0 %v230
  %255 = vmatprep.subr.bf16.mxu0 0
  %256 = vmatpush1.bf16.msra.mxu0 0
  %257 = vmatprep.subr.bf16.mxu0 0
  %258 = vmatpush1.bf16.msra.mxu0 0
  %259 = vmatprep.subr.bf16.mxu0 0
  %260 = vmatpush1.bf16.msra.mxu0 0
  %261 = vmatprep.subr.bf16.mxu0 0
  %262 = vmatpush1.bf16.msra.mxu0 0
  %263 = vmatprep.subr.bf16.mxu0 0
  %264 = vmatpush1.bf16.msra.mxu0 0
  %265 = vmatprep.subr.bf16.mxu0 0
  %266 = vmatpush1.bf16.msra.mxu0 0
  %267 = vmatprep.subr.bf16.mxu0 0
  %268 = vmatpush1.bf16.msra.mxu0 0
  %269 = vmatprep.subr.bf16.mxu0 0
  %270 = vmatpush1.bf16.msra.mxu0 0
  %271 = vmatprep.mubr.bf16.mxu0 0
  %272 = vmatmul.mubr.bf16.gmra.mrb[0].mxu0 %v174
  %v273 = vpop.f32.mrb[0].mxu0
  %v274 = vadd.f32 0.0, %v273
  %v275 = vpop.f32.mrb[0].mxu0
  %v276 = vpop.f32.mrb[0].mxu0
  %v277 = vadd.f32 0.0, %v276
  %v278 = vpop.f32.mrb[0].mxu0
  %279 = vdwg.mxu0
  %v280 = vadd.f32 %v172, %v274
  %v281 = vadd.f32 %v173, %v277
  %282 = vst.msk [vmem:[#allocation3] sm:$0xff] %vm109, %v280
  %283 = vst.msk [vmem:[#allocation3 + $0x8] sm:$0xff] %vm109, %v281
  // Predicated region
  $region34: #{_lambda_.12} parent=0 // pred_check
    %p284 = pneg %p27
  $region35: #{_lambda_.12} parent=0 // pred_check_branch
    %286 = sbr.rel (%p284) target = $region37
  $region36: #{_lambda_.12} parent=0 // pred_region
    %v287 = vld [vmem:[%s0] sm:$0xf]
    %v288 = vld [vmem:[%s0 + $0x4] sm:$0xf]
    %v289 = vunpack.c.l.bf16 %v287
    %v290 = vunpack.c.l.bf16 %v288
    %v291 = vld [vmem:[#allocation3] sm:$0xff]
    %v292 = vld [vmem:[#allocation3 + $0x8] sm:$0xff]
    %v293 = vadd.f32 %v289, %v291
    %v294 = vadd.f32 %v290, %v292
    %v295 = vld [vmem:[%s6] sm:$0x1]
    %v297 = vlaneseq
    %v298 = vshrl.u32 %v297, 7
    %v299 = vsub.s32 0, %v298
    %v300 = vrot.slane %v295, %v299
    %v302 = vadd.f32 %v293, %v300
    %v303 = vadd.f32 %v294, %v300
    %v304 = vpack.c.bf16 %v303, %v302
    %v306 = vunpack.c.l.b16 %v304
    %v307 = vunpack.c.h.b16 %v304
    %v308 = vpack.c.b16 %v306, %v306
    %v309 = vpack.c.b16 %v307, %v307
    %vm312 = vcmask 257024
    %313 = vst.msk [vmem:[%s7] sm:$0xf] %vm312, %v308
    %314 = vst.msk [vmem:[%s7 + $0x4] sm:$0xf] %vm312, %v309
  $region37: #{_lambda_.12} parent=0 // pred_fallthru
    _
  // Predicated region
  $region38: #{_lambda_.12} parent=0 // pred_check
    _
  $region39: #{_lambda_.12} parent=0 // pred_check_branch
    %316 = sbr.rel (0) target = $region41
  $region40: #{_lambda_.12} parent=0 // pred_region
    _
  $region41: #{_lambda_.12} parent=0 // pred_fallthru
    _
  // Predicated region
  $region42: #{_lambda_.12} parent=0 // pred_check
    _
  $region43: #{_lambda_.12} parent=0 // pred_check_branch
    %318 = sbr.rel (0) target = $region45
  $region44: #{_lambda_.12} parent=0 // pred_region
    _
  $region45: #{_lambda_.12} parent=0 // pred_fallthru
    _

// kernel: _lambda_.10
$region0: #{_lambda_.10}
  #allocation0 [shape = 'u32[]', space=smem, size = 0x4, offset = 0x4, fixed_abs, tag = 'smem constant byte address 0x4 - core index']
  #allocation1 [shape = 'u32[144,128]{1,0:T(1,128)}', space=vmem, size = 0x12000, scoped, tag = 'internal scratch']
  #allocation2 [shape = 'f32[8,4]{1,0:T(8,128)}', space=vmem, size = 0x1000, scoped, tag = 'scratch operand']
  #allocation3 [shape = 'f32[8,4]{1,0:T(8,128)}', space=vmem, size = 0x1000, scoped, tag = 'scratch operand']
  #allocation4 [shape = 'f32[8,32]{1,0:T(8,128)}', space=vmem, size = 0x1000, scoped, tag = 'scratch operand']
  %s0 = inlined_call_operand.vmem [shape: bf16[3,2,8,32], index: 0, kind: input, shape index: {}, may-alias: {0,1,2}]
  %s1 = inlined_call_operand.vmem [shape: bf16[3,2,8,32], index: 1, kind: input, shape index: {}, may-alias: {0,1,2}]
  %s2 = inlined_call_operand.vmem [shape: bf16[3,2,8,32], index: 2, kind: input, shape index: {}, may-alias: {0,1,2}]
  %s3 = inlined_call_operand.vmem [shape: bf16[2,8,32], index: 3, kind: output, shape index: {}]
  %s4 = sld [smem:[#allocation0]]
  $region61: #{_lambda_.10} parent=0
    _
  %s6 = ssub.s32 1, %s4
  %s7 = scalar_select 0, %s6, %s4
  loop: start=0, step=1, limit=4
  $region2: #{_lambda_.10} parent=0 // loop_pre_header
    _
  $region3: #{_lambda_.10} parent=0 // loop_header
    %s9 = sphi 0, %s13
    %p10 = scmp.ge.s32.totalorder %s9, 4
    %s16 = sphi 0, %s35
    %s17 = sphi 0, %s31
    %s18 = sphi 0, %s27
    %s19 = sphi 0, %s16
    %s20 = sphi 0, %s17
    %s21 = sphi 0, %s18
    %s22 = sphi 0, %s19
    %s23 = sphi 0, %s20
    %s24 = sphi 0, %s21
    %s40 = sphi 0, %s42
    %s43 = sphi 0, %s40
    %s44 = sphi 0, %s43
    %s60 = sphi 0, %s44
    %s72 = sphi 0, %s74
    %s75 = sphi 0, %s72
    %s76 = sphi 0, %s75
    %s92 = sphi 0, %s76
    %s104 = sphi 0, %s106
    %s107 = sphi 0, %s104
    %s108 = sphi 0, %s107
    %s124 = sphi 0, %s108
    %s132 = sphi 0, %s134
    %s135 = sphi 0, %s132
    %s136 = sphi 0, %s135
    %s152 = sphi 0, %s136
  $region4: #{_lambda_.10} parent=0 // loop_header_branch
    %12 = sbr.rel (%p10) target = $region8
  $region5: #{_lambda_.10} parent=0 // loop_body
    %s14 = ssub.s32 %s9, 1
    %s15 = ssub.s32 %s9, 2
    %s25 = sadd.s32 1, %s18
    %p26 = scmp.ge.s32.totalorder %s25, 1
    %s27 = scalar_select %p26, 0, %s25
    %s28 = sadd.s32 1, %s17
    %s29 = scalar_select %p26, %s28, %s17
    %p30 = scmp.ge.s32.totalorder %s29, 1
    %s31 = scalar_select %p30, 0, %s29
    %s32 = sadd.s32 1, %s16
    %s33 = scalar_select %p30, %s32, %s16
    %p34 = scmp.ge.s32.totalorder %s33, 2
    %s35 = scalar_select %p34, 0, %s33
    %s36 = ssub.s32 %s16, %s35
    %s37 = ssub.s32 %s17, %s31
    %s38 = sor.u32 %s36, %s37
    %p39 = scmp.eq.s32.totalorder %s38, 0
    %s41 = sadd.s32 %s40, 1
    %s42 = scalar_select %p39, %s40, %s41
    %p45 = pneg %p39
    %p46 = scmp.eq.s32.totalorder %s9, 1
    %p47 = por %p45, %p46
    %p48 = scmp.ne.s32.totalorder %s40, %s43
    %p49 = scmp.eq.s32.totalorder %s9, 0
    %p50 = por %p48, %p49
    %p51 = scmp.ne.s32.totalorder %s40, %s43
    %p52 = scmp.eq.s32.totalorder %s14, 1
    %p53 = por %p51, %p52
    %p54 = scmp.ne.s32.totalorder %s43, %s44
    %p55 = scmp.eq.s32.totalorder %s14, 0
    %p56 = por %p54, %p55
    %p57 = scmp.ne.s32.totalorder %s43, %s44
    %p58 = scmp.eq.s32.totalorder %s15, 1
    %p59 = por %p57, %p58
    %p61 = scmp.ne.s32.totalorder %s44, %s60
    %p62 = scmp.eq.s32.totalorder %s15, 0
    %p63 = por %p61, %p62
    %p64 = scmp.lt.s32.totalorder %s18, %s17
    %s65 = scalar_select %p64, %s18, %s17
    %p66 = scmp.lt.s32.totalorder %s27, %s31
    %s67 = scalar_select %p66, %s27, %s31
    %s68 = ssub.s32 %s16, %s35
    %s69 = ssub.s32 %s65, %s67
    %s70 = sor.u32 %s68, %s69
    %p71 = scmp.eq.s32.totalorder %s70, 0
    %s73 = sadd.s32 %s72, 1
    %s74 = scalar_select %p71, %s72, %s73
    %p77 = pneg %p71
    %p78 = scmp.eq.s32.totalorder %s9, 1
    %p79 = por %p77, %p78
    %p80 = scmp.ne.s32.totalorder %s72, %s75
    %p81 = scmp.eq.s32.totalorder %s9, 0
    %p82 = por %p80, %p81
    %p83 = scmp.ne.s32.totalorder %s72, %s75
    %p84 = scmp.eq.s32.totalorder %s14, 1
    %p85 = por %p83, %p84
    %p86 = scmp.ne.s32.totalorder %s75, %s76
    %p87 = scmp.eq.s32.totalorder %s14, 0
    %p88 = por %p86, %p87
    %p89 = scmp.ne.s32.totalorder %s75, %s76
    %p90 = scmp.eq.s32.totalorder %s15, 1
    %p91 = por %p89, %p90
    %p93 = scmp.ne.s32.totalorder %s76, %s92
    %p94 = scmp.eq.s32.totalorder %s15, 0
    %p95 = por %p93, %p94
    %p96 = scmp.lt.s32.totalorder %s18, %s17
    %s97 = scalar_select %p96, %s18, %s17
    %p98 = scmp.lt.s32.totalorder %s27, %s31
    %s99 = scalar_select %p98, %s27, %s31
    %s100 = ssub.s32 %s16, %s35
    %s101 = ssub.s32 %s97, %s99
    %s102 = sor.u32 %s100, %s101
    %p103 = scmp.eq.s32.totalorder %s102, 0
    %s105 = sadd.s32 %s104, 1
    %s106 = scalar_select %p103, %s104, %s105
    %p109 = pneg %p103
    %p110 = scmp.eq.s32.totalorder %s9, 1
    %p111 = por %p109, %p110
    %p112 = scmp.ne.s32.totalorder %s104, %s107
    %p113 = scmp.eq.s32.totalorder %s9, 0
    %p114 = por %p112, %p113
    %p115 = scmp.ne.s32.totalorder %s104, %s107
    %p116 = scmp.eq.s32.totalorder %s14, 1
    %p117 = por %p115, %p116
    %p118 = scmp.ne.s32.totalorder %s107, %s108
    %p119 = scmp.eq.s32.totalorder %s14, 0
    %p120 = por %p118, %p119
    %p121 = scmp.ne.s32.totalorder %s107, %s108
    %p122 = scmp.eq.s32.totalorder %s15, 1
    %p123 = por %p121, %p122
    %p125 = scmp.ne.s32.totalorder %s108, %s124
    %p126 = scmp.eq.s32.totalorder %s15, 0
    %p127 = por %p125, %p126
    %s128 = ssub.s32 %s16, %s35
    %s129 = ssub.s32 %s17, %s31
    %s130 = sor.u32 %s128, %s129
    %p131 = scmp.eq.s32.totalorder %s130, 0
    %s133 = sadd.s32 %s132, 1
    %s134 = scalar_select %p131, %s132, %s133
    %p137 = pneg %p131
    %p138 = scmp.eq.s32.totalorder %s9, 1
    %p139 = por %p137, %p138
    %p140 = scmp.ne.s32.totalorder %s132, %s135
    %p141 = scmp.eq.s32.totalorder %s9, 0
    %p142 = por %p140, %p141
    %p143 = scmp.ne.s32.totalorder %s132, %s135
    %p144 = scmp.eq.s32.totalorder %s14, 1
    %p145 = por %p143, %p144
    %p146 = scmp.ne.s32.totalorder %s135, %s136
    %p147 = scmp.eq.s32.totalorder %s14, 0
    %p148 = por %p146, %p147
    %p149 = scmp.ne.s32.totalorder %s135, %s136
    %p150 = scmp.eq.s32.totalorder %s15, 1
    %p151 = por %p149, %p150
    %p153 = scmp.ne.s32.totalorder %s136, %s152
    %p154 = scmp.eq.s32.totalorder %s15, 0
    %p155 = por %p153, %p154
    %p156 = scmp.le.s32.totalorder 1, %s9
    %p157 = scmp.lt.s32.totalorder %s9, 3
    %p158 = pnand %p156, %p157
    %p159 = pneg %p158
    // Predicated region
    $region9: #{_lambda_.10} parent=5 // pred_check
      _
    $region10: #{_lambda_.10} parent=5 // pred_check_branch
      %161 = sbr.rel (%p158) target = $region12
    $region11: #{_lambda_.10} parent=5 // pred_region
      %s162 = ssub.s32 %s9, 1
    $region12: #{_lambda_.10} parent=5 // pred_fallthru
      _
    %p163 = scmp.lt.s32.totalorder %s9, 2
    // Predicated region
    $region13: #{_lambda_.10} parent=5 // pred_check
      %p164 = pneg %p163
    $region14: #{_lambda_.10} parent=5 // pred_check_branch
      %166 = sbr.rel (%p164) target = $region16
    $region15: #{_lambda_.10} parent=5 // pred_region
      // Predicated region
      $region17: #{_lambda_.10} parent=15 // pred_check
        %p167 = pneg %p50
      $region18: #{_lambda_.10} parent=15 // pred_check_branch
        %169 = sbr.rel (%p167) target = $region20
      $region19: #{_lambda_.10} parent=15 // pred_region
        %p170 = scmp.lt.s32.totalorder %s16, 1
        %s171 = scalar_select %p170, %s16, 1
        %p172 = scmp.lt.s32.totalorder %s17, 0
        %s173 = scalar_select %p172, %s17, 0
        %s174 = sadd.s32 %s173, %s171
        %s175 = smul.addr %s174, 4
        %s176 = scalar_lea.vmem %s0, %s175
      $region20: #{_lambda_.10} parent=15 // pred_fallthru
        _
      // Predicated region
      $region21: #{_lambda_.10} parent=15 // pred_check
        %p177 = pneg %p82
      $region22: #{_lambda_.10} parent=15 // pred_check_branch
        %179 = sbr.rel (%p177) target = $region24
      $region23: #{_lambda_.10} parent=15 // pred_region
        %p180 = scmp.lt.s32.totalorder %s18, %s17
        %s181 = scalar_select %p180, %s18, %s17
        %p182 = scmp.lt.s32.totalorder %s16, 1
        %s183 = scalar_select %p182, %s16, 1
        %p184 = scmp.lt.s32.totalorder %s181, 0
        %s185 = scalar_select %p184, %s181, 0
        %s186 = sadd.s32 %s185, %s183
        %s187 = sadd.s32 %s186, 2
        %s188 = smul.addr %s187, 4
        %s189 = scalar_lea.vmem %s1, %s188
        %p190 = scmp.lt.s32.totalorder %s18, %s17
        %s191 = scalar_select %p190, %s18, %s17
      $region24: #{_lambda_.10} parent=15 // pred_fallthru
        _
      // Predicated region
      $region25: #{_lambda_.10} parent=15 // pred_check
        %p192 = pneg %p114
      $region26: #{_lambda_.10} parent=15 // pred_check_branch
        %194 = sbr.rel (%p192) target = $region28
      $region27: #{_lambda_.10} parent=15 // pred_region
        %p195 = scmp.lt.s32.totalorder %s18, %s17
        %s196 = scalar_select %p195, %s18, %s17
        %p197 = scmp.lt.s32.totalorder %s16, 1
        %s198 = scalar_select %p197, %s16, 1
        %p199 = scmp.lt.s32.totalorder %s196, 0
        %s200 = scalar_select %p199, %s196, 0
        %s201 = sadd.s32 %s200, %s198
        %s202 = sadd.s32 %s201, 4
        %s203 = smul.addr %s202, 4
        %s204 = scalar_lea.vmem %s2, %s203
        %p205 = scmp.lt.s32.totalorder %s18, %s17
        %s206 = scalar_select %p205, %s18, %s17
      $region28: #{_lambda_.10} parent=15 // pred_fallthru
        _
    $region16: #{_lambda_.10} parent=5 // pred_fallthru
      _
    %p207 = scmp.le.s32.totalorder 1, %s9
    %p208 = scmp.lt.s32.totalorder %s9, 3
    %p209 = pnand %p207, %p208
    %p210 = pneg %p209
    // Predicated region
    $region29: #{_lambda_.10} parent=5 // pred_check
      _
    $region30: #{_lambda_.10} parent=5 // pred_check_branch
      %212 = sbr.rel (%p209) target = $region32
    $region31: #{_lambda_.10} parent=5 // pred_region
      %s213 = ssub.s32 %s9, 1
      %p214 = scmp.lt.s32.totalorder %s19, 1
      %s215 = scalar_select %p214, %s19, 1
      %p216 = scmp.lt.s32.totalorder %s20, 0
      %s217 = scalar_select %p216, %s20, 0
      %s218 = sadd.s32 %s217, %s215
      %s219 = smul.addr %s218, 4
      %s220 = scalar_lea.vmem %s0, %s219
      %p221 = pneg %p56
      %p222 = pneg %p53
      %p223 = scmp.lt.s32.totalorder %s21, %s20
      %s224 = scalar_select %p223, %s21, %s20
      %p225 = scmp.lt.s32.totalorder %s19, 1
      %s226 = scalar_select %p225, %s19, 1
      %p227 = scmp.lt.s32.totalorder %s224, 0
      %s228 = scalar_select %p227, %s224, 0
      %s229 = sadd.s32 %s228, %s226
      %s230 = sadd.s32 %s229, 2
      %s231 = smul.addr %s230, 4
      %s232 = scalar_lea.vmem %s1, %s231
      %p233 = pneg %p88
      %p234 = pneg %p85
      %p235 = scmp.lt.s32.totalorder %s21, %s20
      %s236 = scalar_select %p235, %s21, %s20
      %p237 = scmp.lt.s32.totalorder %s19, 1
      %s238 = scalar_select %p237, %s19, 1
      %p239 = scmp.lt.s32.totalorder %s236, 0
      %s240 = scalar_select %p239, %s236, 0
      %s241 = sadd.s32 %s240, %s238
      %s242 = sadd.s32 %s241, 4
      %s243 = smul.addr %s242, 4
      %s244 = scalar_lea.vmem %s2, %s243
      %p245 = pneg %p120
      %p246 = pneg %p117
      %p247 = pneg %p148
      %p248 = pneg %p145
      %p249 = scmp.lt.s32.totalorder %s19, 1
      %s250 = scalar_select %p249, %s19, 1
      %p251 = scmp.lt.s32.totalorder %s20, 0
      %s252 = scalar_select %p251, %s20, 0
      %s253 = sadd.s32 %s252, %s250
      %s254 = smul.addr %s253, 4
      %s255 = scalar_lea.vmem %s3, %s254
      %p256 = scmp.lt.s32.totalorder %s19, 1
      %s257 = scalar_select %p256, %s19, 1
      %p258 = scmp.lt.s32.totalorder %s20, 0
      %s259 = scalar_select %p258, %s20, 0
      %s260 = sadd.s32 %s259, %s257
      %s261 = smul.addr %s260, 4
      %s262 = scalar_lea.vmem %s0, %s261
      %p263 = scmp.lt.s32.totalorder %s21, %s20
      %s264 = scalar_select %p263, %s21, %s20
      %p265 = scmp.lt.s32.totalorder %s19, 1
      %s266 = scalar_select %p265, %s19, 1
      %p267 = scmp.lt.s32.totalorder %s264, 0
      %s268 = scalar_select %p267, %s264, 0
      %s269 = sadd.s32 %s268, %s266
      %s270 = sadd.s32 %s269, 2
      %s271 = smul.addr %s270, 4
      %s272 = scalar_lea.vmem %s1, %s271
      %p273 = scmp.lt.s32.totalorder %s21, %s20
      %s274 = scalar_select %p273, %s21, %s20
      %p275 = scmp.lt.s32.totalorder %s21, %s20
      %s276 = scalar_select %p275, %s21, %s20
      %p277 = scmp.lt.s32.totalorder %s19, 1
      %s278 = scalar_select %p277, %s19, 1
      %p279 = scmp.lt.s32.totalorder %s276, 0
      %s280 = scalar_select %p279, %s276, 0
      %s281 = sadd.s32 %s280, %s278
      %s282 = sadd.s32 %s281, 4
      %s283 = smul.addr %s282, 4
      %s284 = scalar_lea.vmem %s2, %s283
      %p285 = scmp.lt.s32.totalorder %s21, %s20
      %s286 = scalar_select %p285, %s21, %s20
      %p287 = scmp.lt.s32.totalorder %s19, 1
      %s288 = scalar_select %p287, %s19, 1
      %p289 = scmp.lt.s32.totalorder %s20, 0
      %s290 = scalar_select %p289, %s20, 0
      %s291 = sadd.s32 %s290, %s288
      %s292 = smul.addr %s291, 4
      %s293 = scalar_lea.vmem %s3, %s292
      %p296 = scmp.eq.s32.totalorder %s21, 0
      // Predicated region
      $region33: #{_lambda_.10} parent=31 // pred_check
        %p297 = pneg %p296
      $region34: #{_lambda_.10} parent=31 // pred_check_branch
        %299 = sbr.rel (%p297) target = $region36
      $region35: #{_lambda_.10} parent=31 // pred_region
        %vm300 = vcmask 31744
        %301 = vst.msk [vmem:[#allocation2] sm:$0xff] %vm300, -1e+30
        %302 = vst.msk [vmem:[#allocation3] sm:$0xff] %vm300, 0.0
        %vm303 = vcmask 261120
        %304 = vst.msk [vmem:[#allocation4] sm:$0xff] %vm303, 0.0
      $region36: #{_lambda_.10} parent=31 // pred_fallthru
        _
      %p305 = scmp.lt.s32.totalorder %s21, %s20
      // Predicated region
      $region37: #{_lambda_.10} parent=31 // pred_check
        %p306 = pneg %p305
      $region38: #{_lambda_.10} parent=31 // pred_check_branch
        %308 = sbr.rel (%p306) target = $region40
      $region39: #{_lambda_.10} parent=31 // pred_region
        %v309 = vld [vmem:[%s262] sm:$0xf]
        %v310 = vmul.bf16 %v309, 1052065461
        %v311 = vld [vmem:[%s272] sm:$0xf]
        %v312 = vld [vmem:[%s284] sm:$0xf]
        %vm313 = vcmask 64512
        %v315 = vsel %vm313, %v310, 0
        %v318 = vsel %vm313, %v311, 0
        %320 = vmatprep.subr.bf16.mxu0 0
        %321 = vmatpush1.bf16.xpose.msra.mxu0 %v318
        %322 = vmatprep.subr.bf16.mxu0 0
        %323 = vmatpush1.bf16.xpose.msra.mxu0 0
        %324 = vmatprep.subr.bf16.mxu0 0
        %325 = vmatpush1.bf16.xpose.msra.mxu0 0
        %326 = vmatprep.subr.bf16.mxu0 0
        %327 = vmatpush1.bf16.xpose.msra.mxu0 0
        %328 = vmatprep.subr.bf16.mxu0 0
        %329 = vmatpush1.bf16.xpose.msra.mxu0 0
        %330 = vmatprep.subr.bf16.mxu0 0
        %331 = vmatpush1.bf16.xpose.msra.mxu0 0
        %332 = vmatprep.subr.bf16.mxu0 0
        %333 = vmatpush1.bf16.xpose.msra.mxu0 0
        %334 = vmatprep.subr.bf16.mxu0 0
        %335 = vmatpush1.bf16.xpose.msra.mxu0 0
        %336 = vmatprep.subr.bf16.mxu0 0
        %337 = vmatpush1.bf16.xpose.msra.mxu0 0
        %338 = vmatprep.subr.bf16.mxu0 0
        %339 = vmatpush1.bf16.xpose.msra.mxu0 0
        %340 = vmatprep.subr.bf16.mxu0 0
        %341 = vmatpush1.bf16.xpose.msra.mxu0 0
        %342 = vmatprep.subr.bf16.mxu0 0
        %343 = vmatpush1.bf16.xpose.msra.mxu0 0
        %344 = vmatprep.subr.bf16.mxu0 0
        %345 = vmatpush1.bf16.xpose.msra.mxu0 0
        %346 = vmatprep.subr.bf16.mxu0 0
        %347 = vmatpush1.bf16.xpose.msra.mxu0 0
        %348 = vmatprep.subr.bf16.mxu0 0
        %349 = vmatpush1.bf16.xpose.msra.mxu0 0
        %350 = vmatprep.subr.bf16.mxu0 0
        %351 = vmatpush1.bf16.xpose.msra.mxu0 0
        %352 = vmatprep.mubr.bf16.mxu0 0
        %353 = vmatmul.mubr.bf16.gmra.mrb[0].mxu0 %v315
        %v354 = vpop.f32.mrb[0].mxu0
        %v355 = vadd.f32 0.0, %v354
        %v356 = vpop.f32.mrb[0].mxu0
        %v357 = vpop.f32.mrb[0].mxu0
        %v358 = vpop.f32.mrb[0].mxu0
        %359 = vdwg.mxu0
        %v360 = vld [vmem:[#allocation2] sm:$0xff]
        %v361 = vsel %vm313, %v355, -inf
        %362 = vmax.xlane.f32.xlu0 %v361
        %v363 = vpop.xlane.xlu0 %362
        %v364 = vmax.f32 %v360, %v363
        %v365 = vsub.f32 %v360, %v364
        %v366 = vmul.f32 %v365, 1.442695
        %v367 = vpow.pop %v366
        %369 = vset.pattern.permute.xlu0 0
        %370 = vperm.xlu0 %369, %v364
        %v371 = vpop.permute.xlu0 %370
        %v373 = vsub.f32 %v355, %v371
        %v374 = vmul.f32 %v373, 1.442695
        %v375 = vpow.pop %v374
        %v376 = vld [vmem:[#allocation3] sm:$0xff]
        %v377 = vmul.f32 %v367, %v376
        %v378 = vsel %vm313, %v375, 0.0
        %379 = vadd.xlane.f32.xlu0 %v378
        %v380 = vpop.xlane.xlu0 %379
        %v381 = vadd.f32 %v377, %v380
        %vm382 = vcmask 7168
        %383 = vst.msk [vmem:[#allocation3] sm:$0xff] %vm382, %v381
        %v384 = vld [vmem:[#allocation4] sm:$0xff]
        %386 = vset.pattern.permute.xlu0 0
        %387 = vperm.xlu0 %386, %v367
        %v388 = vpop.permute.xlu0 %387
        %v390 = vmul.f32 %v388, %v384
        %v391 = vpack.c.bf16 %v375, %v375
        %v393 = vsel %vm313, %v391, 0
        %vm395 = vcmask 1043456
        %v397 = vsel %vm395, %v312, 0
        %399 = vmatprep.subr.bf16.mxu0 0
        %400 = vmatpush1.bf16.msra.mxu0 %v397
        %401 = vmatprep.subr.bf16.mxu0 0
        %402 = vmatpush1.bf16.msra.mxu0 0
        %403 = vmatprep.subr.bf16.mxu0 0
        %404 = vmatpush1.bf16.msra.mxu0 0
        %405 = vmatprep.subr.bf16.mxu0 0
        %406 = vmatpush1.bf16.msra.mxu0 0
        %407 = vmatprep.subr.bf16.mxu0 0
        %408 = vmatpush1.bf16.msra.mxu0 0
        %409 = vmatprep.subr.bf16.mxu0 0
        %410 = vmatpush1.bf16.msra.mxu0 0
        %411 = vmatprep.subr.bf16.mxu0 0
        %412 = vmatpush1.bf16.msra.mxu0 0
        %413 = vmatprep.subr.bf16.mxu0 0
        %414 = vmatpush1.bf16.msra.mxu0 0
        %415 = vmatprep.subr.bf16.mxu0 0
        %416 = vmatpush1.bf16.msra.mxu0 0
        %417 = vmatprep.subr.bf16.mxu0 0
        %418 = vmatpush1.bf16.msra.mxu0 0
        %419 = vmatprep.subr.bf16.mxu0 0
        %420 = vmatpush1.bf16.msra.mxu0 0
        %421 = vmatprep.subr.bf16.mxu0 0
        %422 = vmatpush1.bf16.msra.mxu0 0
        %423 = vmatprep.subr.bf16.mxu0 0
        %424 = vmatpush1.bf16.msra.mxu0 0
        %425 = vmatprep.subr.bf16.mxu0 0
        %426 = vmatpush1.bf16.msra.mxu0 0
        %427 = vmatprep.subr.bf16.mxu0 0
        %428 = vmatpush1.bf16.msra.mxu0 0
        %429 = vmatprep.subr.bf16.mxu0 0
        %430 = vmatpush1.bf16.msra.mxu0 0
        %431 = vmatprep.mubr.bf16.mxu0 0
        %432 = vmatmul.mubr.bf16.gmra.mrb[0].mxu0 %v393
        %v433 = vpop.f32.mrb[0].mxu0
        %v434 = vadd.f32 0.0, %v433
        %v435 = vpop.f32.mrb[0].mxu0
        %v436 = vpop.f32.mrb[0].mxu0
        %v437 = vpop.f32.mrb[0].mxu0
        %438 = vdwg.mxu0
        %v439 = vadd.f32 %v390, %v434
        %440 = vst.msk [vmem:[#allocation4] sm:$0xff] %vm313, %v439
        %441 = vst.msk [vmem:[#allocation2] sm:$0xff] %vm382, %v364
        %v443 = vunpack.c.l.b16 %v310
        %v444 = vpack.c.b16 %v443, %v443
        %445 = vrot.lane.b32.xlu0 %v444, 120
        %v446 = vpop.permute.xlu0 %445
        %v448 = vunpack.c.l.b16 %v311
        %v449 = vpack.c.b16 %v448, %v448
        %450 = vrot.lane.b32.xlu0 %v449, 120
        %v451 = vpop.permute.xlu0 %450
        %v453 = vsel %vm313, %v446, 0
        %v456 = vsel %vm313, %v451, 0
        %458 = vmatprep.subr.bf16.mxu0 0
        %459 = vmatpush1.bf16.xpose.msra.mxu0 %v456
        %460 = vmatprep.subr.bf16.mxu0 0
        %461 = vmatpush1.bf16.xpose.msra.mxu0 0
        %462 = vmatprep.subr.bf16.mxu0 0
        %463 = vmatpush1.bf16.xpose.msra.mxu0 0
        %464 = vmatprep.subr.bf16.mxu0 0
        %465 = vmatpush1.bf16.xpose.msra.mxu0 0
        %466 = vmatprep.subr.bf16.mxu0 0
        %467 = vmatpush1.bf16.xpose.msra.mxu0 0
        %468 = vmatprep.subr.bf16.mxu0 0
        %469 = vmatpush1.bf16.xpose.msra.mxu0 0
        %470 = vmatprep.subr.bf16.mxu0 0
        %471 = vmatpush1.bf16.xpose.msra.mxu0 0
        %472 = vmatprep.subr.bf16.mxu0 0
        %473 = vmatpush1.bf16.xpose.msra.mxu0 0
        %474 = vmatprep.subr.bf16.mxu0 0
        %475 = vmatpush1.bf16.xpose.msra.mxu0 0
        %476 = vmatprep.subr.bf16.mxu0 0
        %477 = vmatpush1.bf16.xpose.msra.mxu0 0
        %478 = vmatprep.subr.bf16.mxu0 0
        %479 = vmatpush1.bf16.xpose.msra.mxu0 0
        %480 = vmatprep.subr.bf16.mxu0 0
        %481 = vmatpush1.bf16.xpose.msra.mxu0 0
        %482 = vmatprep.subr.bf16.mxu0 0
        %483 = vmatpush1.bf16.xpose.msra.mxu0 0
        %484 = vmatprep.subr.bf16.mxu0 0
        %485 = vmatpush1.bf16.xpose.msra.mxu0 0
        %486 = vmatprep.subr.bf16.mxu0 0
        %487 = vmatpush1.bf16.xpose.msra.mxu0 0
        %488 = vmatprep.subr.bf16.mxu0 0
        %489 = vmatpush1.bf16.xpose.msra.mxu0 0
        %490 = vmatprep.mubr.bf16.mxu0 0
        %491 = vmatmul.mubr.bf16.gmra.mrb[0].mxu0 %v453
        %v492 = vpop.f32.mrb[0].mxu0
        %v493 = vadd.f32 0.0, %v492
        %v494 = vpop.f32.mrb[0].mxu0
        %v495 = vpop.f32.mrb[0].mxu0
        %v496 = vpop.f32.mrb[0].mxu0
        %497 = vdwg.mxu0
        %v498 = vld [vmem:[#allocation2] sm:$0xff]
        %v499 = vsel %vm313, %v493, -inf
        %500 = vmax.xlane.f32.xlu0 %v499
        %v501 = vpop.xlane.xlu0 %500
        %v502 = vmax.f32 %v498, %v501
        %v503 = vsub.f32 %v498, %v502
        %v504 = vmul.f32 %v503, 1.442695
        %v505 = vpow.pop %v504
        %507 = vset.pattern.permute.xlu0 1
        %508 = vperm.xlu0 %507, %v502
        %v509 = vpop.permute.xlu0 %508
        %v511 = vsub.f32 %v493, %v509
        %v512 = vmul.f32 %v511, 1.442695
        %v513 = vpow.pop %v512
        %v514 = vld [vmem:[#allocation3] sm:$0xff]
        %v515 = vmul.f32 %v505, %v514
        %v516 = vsel %vm313, %v513, 0.0
        %517 = vadd.xlane.f32.xlu0 %v516
        %v518 = vpop.xlane.xlu0 %517
        %v519 = vadd.f32 %v515, %v518
        %vm520 = vcmask 15368
        %521 = vst.msk [vmem:[#allocation3] sm:$0xff] %vm520, %v519
        %v522 = vld [vmem:[#allocation4] sm:$0xff]
        %524 = vset.pattern.permute.xlu0 1
        %525 = vperm.xlu0 %524, %v505
        %v526 = vpop.permute.xlu0 %525
        %v528 = vmul.f32 %v526, %v522
        %v529 = vpack.c.bf16 %v513, %v513
        %v531 = vunpack.c.l.b16 %v312
        %v532 = vpack.c.b16 %v531, %v531
        %533 = vrot.lane.b32.xlu0 %v532, 120
        %v534 = vpop.permute.xlu0 %533
        %v536 = vsel %vm313, %v529, 0
        %v539 = vsel %vm395, %v534, 0
        %541 = vmatprep.subr.bf16.mxu0 0
        %542 = vmatpush1.bf16.msra.mxu0 %v539
        %543 = vmatprep.subr.bf16.mxu0 0
        %544 = vmatpush1.bf16.msra.mxu0 0
        %545 = vmatprep.subr.bf16.mxu0 0
        %546 = vmatpush1.bf16.msra.mxu0 0
        %547 = vmatprep.subr.bf16.mxu0 0
        %548 = vmatpush1.bf16.msra.mxu0 0
        %549 = vmatprep.subr.bf16.mxu0 0
        %550 = vmatpush1.bf16.msra.mxu0 0
        %551 = vmatprep.subr.bf16.mxu0 0
        %552 = vmatpush1.bf16.msra.mxu0 0
        %553 = vmatprep.subr.bf16.mxu0 0
        %554 = vmatpush1.bf16.msra.mxu0 0
        %555 = vmatprep.subr.bf16.mxu0 0
        %556 = vmatpush1.bf16.msra.mxu0 0
        %557 = vmatprep.subr.bf16.mxu0 0
        %558 = vmatpush1.bf16.msra.mxu0 0
        %559 = vmatprep.subr.bf16.mxu0 0
        %560 = vmatpush1.bf16.msra.mxu0 0
        %561 = vmatprep.subr.bf16.mxu0 0
        %562 = vmatpush1.bf16.msra.mxu0 0
        %563 = vmatprep.subr.bf16.mxu0 0
        %564 = vmatpush1.bf16.msra.mxu0 0
        %565 = vmatprep.subr.bf16.mxu0 0
        %566 = vmatpush1.bf16.msra.mxu0 0
        %567 = vmatprep.subr.bf16.mxu0 0
        %568 = vmatpush1.bf16.msra.mxu0 0
        %569 = vmatprep.subr.bf16.mxu0 0
        %570 = vmatpush1.bf16.msra.mxu0 0
        %571 = vmatprep.subr.bf16.mxu0 0
        %572 = vmatpush1.bf16.msra.mxu0 0
        %573 = vmatprep.mubr.bf16.mxu0 0
        %574 = vmatmul.mubr.bf16.gmra.mrb[0].mxu0 %v536
        %v575 = vpop.f32.mrb[0].mxu0
        %v576 = vadd.f32 0.0, %v575
        %v577 = vpop.f32.mrb[0].mxu0
        %v578 = vpop.f32.mrb[0].mxu0
        %v579 = vpop.f32.mrb[0].mxu0
        %580 = vdwg.mxu0
        %582 = vrot.lane.b32.xlu0 %v576, 8
        %v583 = vpop.permute.xlu0 %582
        %v585 = vadd.f32 %v528, %v583
        %vm586 = vcmask 130112
        %587 = vst.msk [vmem:[#allocation4] sm:$0xff] %vm586, %v585
        %588 = vst.msk [vmem:[#allocation2] sm:$0xff] %vm520, %v502
        %589 = vrot.lane.b32.xlu0 %v444, 112
        %v590 = vpop.permute.xlu0 %589
        %591 = vrot.lane.b32.xlu0 %v449, 112
        %v592 = vpop.permute.xlu0 %591
        %v594 = vsel %vm313, %v590, 0
        %v597 = vsel %vm313, %v592, 0
        %599 = vmatprep.subr.bf16.mxu0 0
        %600 = vmatpush1.bf16.xpose.msra.mxu0 %v597
        %601 = vmatprep.subr.bf16.mxu0 0
        %602 = vmatpush1.bf16.xpose.msra.mxu0 0
        %603 = vmatprep.subr.bf16.mxu0 0
        %604 = vmatpush1.bf16.xpose.msra.mxu0 0
        %605 = vmatprep.subr.bf16.mxu0 0
        %606 = vmatpush1.bf16.xpose.msra.mxu0 0
        %607 = vmatprep.subr.bf16.mxu0 0
        %608 = vmatpush1.bf16.xpose.msra.mxu0 0
        %609 = vmatprep.subr.bf16.mxu0 0
        %610 = vmatpush1.bf16.xpose.msra.mxu0 0
        %611 = vmatprep.subr.bf16.mxu0 0
        %612 = vmatpush1.bf16.xpose.msra.mxu0 0
        %613 = vmatprep.subr.bf16.mxu0 0
        %614 = vmatpush1.bf16.xpose.msra.mxu0 0
        %615 = vmatprep.subr.bf16.mxu0 0
        %616 = vmatpush1.bf16.xpose.msra.mxu0 0
        %617 = vmatprep.subr.bf16.mxu0 0
        %618 = vmatpush1.bf16.xpose.msra.mxu0 0
        %619 = vmatprep.subr.bf16.mxu0 0
        %620 = vmatpush1.bf16.xpose.msra.mxu0 0
        %621 = vmatprep.subr.bf16.mxu0 0
        %622 = vmatpush1.bf16.xpose.msra.mxu0 0
        %623 = vmatprep.subr.bf16.mxu0 0
        %624 = vmatpush1.bf16.xpose.msra.mxu0 0
        %625 = vmatprep.subr.bf16.mxu0 0
        %626 = vmatpush1.bf16.xpose.msra.mxu0 0
        %627 = vmatprep.subr.bf16.mxu0 0
        %628 = vmatpush1.bf16.xpose.msra.mxu0 0
        %629 = vmatprep.subr.bf16.mxu0 0
        %630 = vmatpush1.bf16.xpose.msra.mxu0 0
        %631 = vmatprep.mubr.bf16.mxu0 0
        %632 = vmatmul.mubr.bf16.gmra.mrb[0].mxu0 %v594
        %v633 = vpop.f32.mrb[0].mxu0
        %v634 = vadd.f32 0.0, %v633
        %v635 = vpop.f32.mrb[0].mxu0
        %v636 = vpop.f32.mrb[0].mxu0
        %v637 = vpop.f32.mrb[0].mxu0
        %638 = vdwg.mxu0
        %v639 = vld [vmem:[#allocation2] sm:$0xff]
        %v640 = vsel %vm313, %v634, -inf
        %641 = vmax.xlane.f32.xlu0 %v640
        %v642 = vpop.xlane.xlu0 %641
        %v643 = vmax.f32 %v639, %v642
        %v644 = vsub.f32 %v639, %v643
        %v645 = vmul.f32 %v644, 1.442695
        %v646 = vpow.pop %v645
        %648 = vset.pattern.permute.xlu0 2
        %649 = vperm.xlu0 %648, %v643
        %v650 = vpop.permute.xlu0 %649
        %v652 = vsub.f32 %v634, %v650
        %v653 = vmul.f32 %v652, 1.442695
        %v654 = vpow.pop %v653
        %v655 = vld [vmem:[#allocation3] sm:$0xff]
        %v656 = vmul.f32 %v646, %v655
        %v657 = vsel %vm313, %v654, 0.0
        %658 = vadd.xlane.f32.xlu0 %v657
        %v659 = vpop.xlane.xlu0 %658
        %v660 = vadd.f32 %v656, %v659
        %vm661 = vcmask 23568
        %662 = vst.msk [vmem:[#allocation3] sm:$0xff] %vm661, %v660
        %v663 = vld [vmem:[#allocation4] sm:$0xff]
        %665 = vset.pattern.permute.xlu0 2
        %666 = vperm.xlu0 %665, %v646
        %v667 = vpop.permute.xlu0 %666
        %v669 = vmul.f32 %v667, %v663
        %v670 = vpack.c.bf16 %v654, %v654
        %671 = vrot.lane.b32.xlu0 %v532, 112
        %v672 = vpop.permute.xlu0 %671
        %v674 = vsel %vm313, %v670, 0
        %v677 = vsel %vm395, %v672, 0
        %679 = vmatprep.subr.bf16.mxu0 0
        %680 = vmatpush1.bf16.msra.mxu0 %v677
        %681 = vmatprep.subr.bf16.mxu0 0
        %682 = vmatpush1.bf16.msra.mxu0 0
        %683 = vmatprep.subr.bf16.mxu0 0
        %684 = vmatpush1.bf16.msra.mxu0 0
        %685 = vmatprep.subr.bf16.mxu0 0
        %686 = vmatpush1.bf16.msra.mxu0 0
        %687 = vmatprep.subr.bf16.mxu0 0
        %688 = vmatpush1.bf16.msra.mxu0 0
        %689 = vmatprep.subr.bf16.mxu0 0
        %690 = vmatpush1.bf16.msra.mxu0 0
        %691 = vmatprep.subr.bf16.mxu0 0
        %692 = vmatpush1.bf16.msra.mxu0 0
        %693 = vmatprep.subr.bf16.mxu0 0
        %694 = vmatpush1.bf16.msra.mxu0 0
        %695 = vmatprep.subr.bf16.mxu0 0
        %696 = vmatpush1.bf16.msra.mxu0 0
        %697 = vmatprep.subr.bf16.mxu0 0
        %698 = vmatpush1.bf16.msra.mxu0 0
        %699 = vmatprep.subr.bf16.mxu0 0
        %700 = vmatpush1.bf16.msra.mxu0 0
        %701 = vmatprep.subr.bf16.mxu0 0
        %702 = vmatpush1.bf16.msra.mxu0 0
        %703 = vmatprep.subr.bf16.mxu0 0
        %704 = vmatpush1.bf16.msra.mxu0 0
        %705 = vmatprep.subr.bf16.mxu0 0
        %706 = vmatpush1.bf16.msra.mxu0 0
        %707 = vmatprep.subr.bf16.mxu0 0
        %708 = vmatpush1.bf16.msra.mxu0 0
        %709 = vmatprep.subr.bf16.mxu0 0
        %710 = vmatpush1.bf16.msra.mxu0 0
        %711 = vmatprep.mubr.bf16.mxu0 0
        %712 = vmatmul.mubr.bf16.gmra.mrb[0].mxu0 %v674
        %v713 = vpop.f32.mrb[0].mxu0
        %v714 = vadd.f32 0.0, %v713
        %v715 = vpop.f32.mrb[0].mxu0
        %v716 = vpop.f32.mrb[0].mxu0
        %v717 = vpop.f32.mrb[0].mxu0
        %718 = vdwg.mxu0
        %720 = vrot.lane.b32.xlu0 %v714, 16
        %v721 = vpop.permute.xlu0 %720
        %v723 = vadd.f32 %v669, %v721
        %vm724 = vcmask 195712
        %725 = vst.msk [vmem:[#allocation4] sm:$0xff] %vm724, %v723
        %726 = vst.msk [vmem:[#allocation2] sm:$0xff] %vm661, %v643
        %727 = vrot.lane.b32.xlu0 %v444, 104
        %v728 = vpop.permute.xlu0 %727
        %729 = vrot.lane.b32.xlu0 %v449, 104
        %v730 = vpop.permute.xlu0 %729
        %v732 = vsel %vm313, %v728, 0
        %v735 = vsel %vm313, %v730, 0
        %737 = vmatprep.subr.bf16.mxu0 0
        %738 = vmatpush1.bf16.xpose.msra.mxu0 %v735
        %739 = vmatprep.subr.bf16.mxu0 0
        %740 = vmatpush1.bf16.xpose.msra.mxu0 0
        %741 = vmatprep.subr.bf16.mxu0 0
        %742 = vmatpush1.bf16.xpose.msra.mxu0 0
        %743 = vmatprep.subr.bf16.mxu0 0
        %744 = vmatpush1.bf16.xpose.msra.mxu0 0
        %745 = vmatprep.subr.bf16.mxu0 0
        %746 = vmatpush1.bf16.xpose.msra.mxu0 0
        %747 = vmatprep.subr.bf16.mxu0 0
        %748 = vmatpush1.bf16.xpose.msra.mxu0 0
        %749 = vmatprep.subr.bf16.mxu0 0
        %750 = vmatpush1.bf16.xpose.msra.mxu0 0
        %751 = vmatprep.subr.bf16.mxu0 0
        %752 = vmatpush1.bf16.xpose.msra.mxu0 0
        %753 = vmatprep.subr.bf16.mxu0 0
        %754 = vmatpush1.bf16.xpose.msra.mxu0 0
        %755 = vmatprep.subr.bf16.mxu0 0
        %756 = vmatpush1.bf16.xpose.msra.mxu0 0
        %757 = vmatprep.subr.bf16.mxu0 0
        %758 = vmatpush1.bf16.xpose.msra.mxu0 0
        %759 = vmatprep.subr.bf16.mxu0 0
        %760 = vmatpush1.bf16.xpose.msra.mxu0 0
        %761 = vmatprep.subr.bf16.mxu0 0
        %762 = vmatpush1.bf16.xpose.msra.mxu0 0
        %763 = vmatprep.subr.bf16.mxu0 0
        %764 = vmatpush1.bf16.xpose.msra.mxu0 0
        %765 = vmatprep.subr.bf16.mxu0 0
        %766 = vmatpush1.bf16.xpose.msra.mxu0 0
        %767 = vmatprep.subr.bf16.mxu0 0
        %768 = vmatpush1.bf16.xpose.msra.mxu0 0
        %769 = vmatprep.mubr.bf16.mxu0 0
        %770 = vmatmul.mubr.bf16.gmra.mrb[0].mxu0 %v732
        %v771 = vpop.f32.mrb[0].mxu0
        %v772 = vadd.f32 0.0, %v771
        %v773 = vpop.f32.mrb[0].mxu0
        %v774 = vpop.f32.mrb[0].mxu0
        %v775 = vpop.f32.mrb[0].mxu0
        %776 = vdwg.mxu0
        %v777 = vld [vmem:[#allocation2] sm:$0xff]
        %v778 = vsel %vm313, %v772, -inf
        %779 = vmax.xlane.f32.xlu0 %v778
        %v780 = vpop.xlane.xlu0 %779
        %v781 = vmax.f32 %v777, %v780
        %v782 = vsub.f32 %v777, %v781
        %v783 = vmul.f32 %v782, 1.442695
        %v784 = vpow.pop %v783
        %786 = vset.pattern.permute.xlu0 3
        %787 = vperm.xlu0 %786, %v781
        %v788 = vpop.permute.xlu0 %787
        %v790 = vsub.f32 %v772, %v788
        %v791 = vmul.f32 %v790, 1.442695
        %v792 = vpow.pop %v791
        %v793 = vld [vmem:[#allocation3] sm:$0xff]
        %v794 = vmul.f32 %v784, %v793
        %v795 = vsel %vm313, %v792, 0.0
        %796 = vadd.xlane.f32.xlu0 %v795
        %v797 = vpop.xlane.xlu0 %796
        %v798 = vadd.f32 %v794, %v797
        %vm799 = vcmask 31768
        %800 = vst.msk [vmem:[#allocation3] sm:$0xff] %vm799, %v798
        %v801 = vld [vmem:[#allocation4] sm:$0xff]
        %803 = vset.pattern.permute.xlu0 3
        %804 = vperm.xlu0 %803, %v784
        %v805 = vpop.permute.xlu0 %804
        %v807 = vmul.f32 %v805, %v801
        %v808 = vpack.c.bf16 %v792, %v792
        %809 = vrot.lane.b32.xlu0 %v532, 104
        %v810 = vpop.permute.xlu0 %809
        %v812 = vsel %vm313, %v808, 0
        %v815 = vsel %vm395, %v810, 0
        %817 = vmatprep.subr.bf16.mxu0 0
        %818 = vmatpush1.bf16.msra.mxu0 %v815
        %819 = vmatprep.subr.bf16.mxu0 0
        %820 = vmatpush1.bf16.msra.mxu0 0
        %821 = vmatprep.subr.bf16.mxu0 0
        %822 = vmatpush1.bf16.msra.mxu0 0
        %823 = vmatprep.subr.bf16.mxu0 0
        %824 = vmatpush1.bf16.msra.mxu0 0
        %825 = vmatprep.subr.bf16.mxu0 0
        %826 = vmatpush1.bf16.msra.mxu0 0
        %827 = vmatprep.subr.bf16.mxu0 0
        %828 = vmatpush1.bf16.msra.mxu0 0
        %829 = vmatprep.subr.bf16.mxu0 0
        %830 = vmatpush1.bf16.msra.mxu0 0
        %831 = vmatprep.subr.bf16.mxu0 0
        %832 = vmatpush1.bf16.msra.mxu0 0
        %833 = vmatprep.subr.bf16.mxu0 0
        %834 = vmatpush1.bf16.msra.mxu0 0
        %835 = vmatprep.subr.bf16.mxu0 0
        %836 = vmatpush1.bf16.msra.mxu0 0
        %837 = vmatprep.subr.bf16.mxu0 0
        %838 = vmatpush1.bf16.msra.mxu0 0
        %839 = vmatprep.subr.bf16.mxu0 0
        %840 = vmatpush1.bf16.msra.mxu0 0
        %841 = vmatprep.subr.bf16.mxu0 0
        %842 = vmatpush1.bf16.msra.mxu0 0
        %843 = vmatprep.subr.bf16.mxu0 0
        %844 = vmatpush1.bf16.msra.mxu0 0
        %845 = vmatprep.subr.bf16.mxu0 0
        %846 = vmatpush1.bf16.msra.mxu0 0
        %847 = vmatprep.subr.bf16.mxu0 0
        %848 = vmatpush1.bf16.msra.mxu0 0
        %849 = vmatprep.mubr.bf16.mxu0 0
        %850 = vmatmul.mubr.bf16.gmra.mrb[0].mxu0 %v812
        %v851 = vpop.f32.mrb[0].mxu0
        %v852 = vadd.f32 0.0, %v851
        %v853 = vpop.f32.mrb[0].mxu0
        %v854 = vpop.f32.mrb[0].mxu0
        %v855 = vpop.f32.mrb[0].mxu0
        %856 = vdwg.mxu0
        %858 = vrot.lane.b32.xlu0 %v852, 24
        %v859 = vpop.permute.xlu0 %858
        %v861 = vadd.f32 %v807, %v859
        %vm862 = vcmask 261312
        %863 = vst.msk [vmem:[#allocation4] sm:$0xff] %vm862, %v861
        %864 = vst.msk [vmem:[#allocation2] sm:$0xff] %vm799, %v781
      $region40: #{_lambda_.10} parent=31 // pred_fallthru
        _
      %p865 = scmp.eq.s32.totalorder %s21, %s20
      // Predicated region
      $region41: #{_lambda_.10} parent=31 // pred_check
        %p866 = pneg %p865
      $region42: #{_lambda_.10} parent=31 // pred_check_branch
        %868 = sbr.rel (%p866) target = $region44
      $region43: #{_lambda_.10} parent=31 // pred_region
        %v869 = vld [vmem:[%s262] sm:$0xf]
        %v870 = vmul.bf16 %v869, 1052065461
        %v871 = vld [vmem:[%s272] sm:$0xf]
        %v872 = vld [vmem:[%s284] sm:$0xf]
        %v873 = vlaneseq
        %v874 = vshrl.u32 %v873, 7
        %v875 = vlaneseq
        %v876 = vand.u32 %v875, 127
        %vm877 = vcmp.le.s32.totalorder %v876, %v874
        %v878 = vsel %vm877, 0.0, -1e+30
        %vm879 = vcmask 64512
        %v881 = vsel %vm879, %v870, 0
        %v884 = vsel %vm879, %v871, 0
        %886 = vmatprep.subr.bf16.mxu0 0
        %887 = vmatpush1.bf16.xpose.msra.mxu0 %v884
        %888 = vmatprep.subr.bf16.mxu0 0
        %889 = vmatpush1.bf16.xpose.msra.mxu0 0
        %890 = vmatprep.subr.bf16.mxu0 0
        %891 = vmatpush1.bf16.xpose.msra.mxu0 0
        %892 = vmatprep.subr.bf16.mxu0 0
        %893 = vmatpush1.bf16.xpose.msra.mxu0 0
        %894 = vmatprep.subr.bf16.mxu0 0
        %895 = vmatpush1.bf16.xpose.msra.mxu0 0
        %896 = vmatprep.subr.bf16.mxu0 0
        %897 = vmatpush1.bf16.xpose.msra.mxu0 0
        %898 = vmatprep.subr.bf16.mxu0 0
        %899 = vmatpush1.bf16.xpose.msra.mxu0 0
        %900 = vmatprep.subr.bf16.mxu0 0
        %901 = vmatpush1.bf16.xpose.msra.mxu0 0
        %902 = vmatprep.subr.bf16.mxu0 0
        %903 = vmatpush1.bf16.xpose.msra.mxu0 0
        %904 = vmatprep.subr.bf16.mxu0 0
        %905 = vmatpush1.bf16.xpose.msra.mxu0 0
        %906 = vmatprep.subr.bf16.mxu0 0
        %907 = vmatpush1.bf16.xpose.msra.mxu0 0
        %908 = vmatprep.subr.bf16.mxu0 0
        %909 = vmatpush1.bf16.xpose.msra.mxu0 0
        %910 = vmatprep.subr.bf16.mxu0 0
        %911 = vmatpush1.bf16.xpose.msra.mxu0 0
        %912 = vmatprep.subr.bf16.mxu0 0
        %913 = vmatpush1.bf16.xpose.msra.mxu0 0
        %914 = vmatprep.subr.bf16.mxu0 0
        %915 = vmatpush1.bf16.xpose.msra.mxu0 0
        %916 = vmatprep.subr.bf16.mxu0 0
        %917 = vmatpush1.bf16.xpose.msra.mxu0 0
        %918 = vmatprep.mubr.bf16.mxu0 0
        %919 = vmatmul.mubr.bf16.gmra.mrb[0].mxu0 %v881
        %v920 = vpop.f32.mrb[0].mxu0
        %v921 = vadd.f32 %v878, %v920
        %v922 = vpop.f32.mrb[0].mxu0
        %v923 = vpop.f32.mrb[0].mxu0
        %v924 = vpop.f32.mrb[0].mxu0
        %925 = vdwg.mxu0
        %v926 = vld [vmem:[#allocation2] sm:$0xff]
        %v927 = vsel %vm879, %v921, -inf
        %928 = vmax.xlane.f32.xlu0 %v927
        %v929 = vpop.xlane.xlu0 %928
        %v930 = vmax.f32 %v926, %v929
        %v931 = vsub.f32 %v926, %v930
        %v932 = vmul.f32 %v931, 1.442695
        %v933 = vpow.pop %v932
        %935 = vset.pattern.permute.xlu0 0
        %936 = vperm.xlu0 %935, %v930
        %v937 = vpop.permute.xlu0 %936
        %v939 = vsub.f32 %v921, %v937
        %v940 = vmul.f32 %v939, 1.442695
        %v941 = vpow.pop %v940
        %v942 = vld [vmem:[#allocation3] sm:$0xff]
        %v943 = vmul.f32 %v933, %v942
        %v944 = vsel %vm879, %v941, 0.0
        %945 = vadd.xlane.f32.xlu0 %v944
        %v946 = vpop.xlane.xlu0 %945
        %v947 = vadd.f32 %v943, %v946
        %vm948 = vcmask 7168
        %949 = vst.msk [vmem:[#allocation3] sm:$0xff] %vm948, %v947
        %v950 = vld [vmem:[#allocation4] sm:$0xff]
        %952 = vset.pattern.permute.xlu0 0
        %953 = vperm.xlu0 %952, %v933
        %v954 = vpop.permute.xlu0 %953
        %v956 = vmul.f32 %v954, %v950
        %v957 = vpack.c.bf16 %v941, %v941
        %v959 = vsel %vm879, %v957, 0
        %vm961 = vcmask 1043456
        %v963 = vsel %vm961, %v872, 0
        %965 = vmatprep.subr.bf16.mxu0 0
        %966 = vmatpush1.bf16.msra.mxu0 %v963
        %967 = vmatprep.subr.bf16.mxu0 0
        %968 = vmatpush1.bf16.msra.mxu0 0
        %969 = vmatprep.subr.bf16.mxu0 0
        %970 = vmatpush1.bf16.msra.mxu0 0
        %971 = vmatprep.subr.bf16.mxu0 0
        %972 = vmatpush1.bf16.msra.mxu0 0
        %973 = vmatprep.subr.bf16.mxu0 0
        %974 = vmatpush1.bf16.msra.mxu0 0
        %975 = vmatprep.subr.bf16.mxu0 0
        %976 = vmatpush1.bf16.msra.mxu0 0
        %977 = vmatprep.subr.bf16.mxu0 0
        %978 = vmatpush1.bf16.msra.mxu0 0
        %979 = vmatprep.subr.bf16.mxu0 0
        %980 = vmatpush1.bf16.msra.mxu0 0
        %981 = vmatprep.subr.bf16.mxu0 0
        %982 = vmatpush1.bf16.msra.mxu0 0
        %983 = vmatprep.subr.bf16.mxu0 0
        %984 = vmatpush1.bf16.msra.mxu0 0
        %985 = vmatprep.subr.bf16.mxu0 0
        %986 = vmatpush1.bf16.msra.mxu0 0
        %987 = vmatprep.subr.bf16.mxu0 0
        %988 = vmatpush1.bf16.msra.mxu0 0
        %989 = vmatprep.subr.bf16.mxu0 0
        %990 = vmatpush1.bf16.msra.mxu0 0
        %991 = vmatprep.subr.bf16.mxu0 0
        %992 = vmatpush1.bf16.msra.mxu0 0
        %993 = vmatprep.subr.bf16.mxu0 0
        %994 = vmatpush1.bf16.msra.mxu0 0
        %995 = vmatprep.subr.bf16.mxu0 0
        %996 = vmatpush1.bf16.msra.mxu0 0
        %997 = vmatprep.mubr.bf16.mxu0 0
        %998 = vmatmul.mubr.bf16.gmra.mrb[0].mxu0 %v959
        %v999 = vpop.f32.mrb[0].mxu0
        %v1000 = vadd.f32 0.0, %v999
        %v1001 = vpop.f32.mrb[0].mxu0
        %v1002 = vpop.f32.mrb[0].mxu0
        %v1003 = vpop.f32.mrb[0].mxu0
        %1004 = vdwg.mxu0
        %v1005 = vadd.f32 %v956, %v1000
        %1006 = vst.msk [vmem:[#allocation4] sm:$0xff] %vm879, %v1005
        %1007 = vst.msk [vmem:[#allocation2] sm:$0xff] %vm948, %v930
        %v1009 = vunpack.c.l.b16 %v870
        %v1010 = vpack.c.b16 %v1009, %v1009
        %1011 = vrot.lane.b32.xlu0 %v1010, 120
        %v1012 = vpop.permute.xlu0 %1011
        %v1014 = vunpack.c.l.b16 %v871
        %v1015 = vpack.c.b16 %v1014, %v1014
        %1016 = vrot.lane.b32.xlu0 %v1015, 120
        %v1017 = vpop.permute.xlu0 %1016
        %v1019 = vsel %vm879, %v1012, 0
        %v1022 = vsel %vm879, %v1017, 0
        %1024 = vmatprep.subr.bf16.mxu0 0
        %1025 = vmatpush1.bf16.xpose.msra.mxu0 %v1022
        %1026 = vmatprep.subr.bf16.mxu0 0
        %1027 = vmatpush1.bf16.xpose.msra.mxu0 0
        %1028 = vmatprep.subr.bf16.mxu0 0
        %1029 = vmatpush1.bf16.xpose.msra.mxu0 0
        %1030 = vmatprep.subr.bf16.mxu0 0
        %1031 = vmatpush1.bf16.xpose.msra.mxu0 0
        %1032 = vmatprep.subr.bf16.mxu0 0
        %1033 = vmatpush1.bf16.xpose.msra.mxu0 0
        %1034 = vmatprep.subr.bf16.mxu0 0
        %1035 = vmatpush1.bf16.xpose.msra.mxu0 0
        %1036 = vmatprep.subr.bf16.mxu0 0
        %1037 = vmatpush1.bf16.xpose.msra.mxu0 0
        %1038 = vmatprep.subr.bf16.mxu0 0
        %1039 = vmatpush1.bf16.xpose.msra.mxu0 0
        %1040 = vmatprep.subr.bf16.mxu0 0
        %1041 = vmatpush1.bf16.xpose.msra.mxu0 0
        %1042 = vmatprep.subr.bf16.mxu0 0
        %1043 = vmatpush1.bf16.xpose.msra.mxu0 0
        %1044 = vmatprep.subr.bf16.mxu0 0
        %1045 = vmatpush1.bf16.xpose.msra.mxu0 0
        %1046 = vmatprep.subr.bf16.mxu0 0
        %1047 = vmatpush1.bf16.xpose.msra.mxu0 0
        %1048 = vmatprep.subr.bf16.mxu0 0
        %1049 = vmatpush1.bf16.xpose.msra.mxu0 0
        %1050 = vmatprep.subr.bf16.mxu0 0
        %1051 = vmatpush1.bf16.xpose.msra.mxu0 0
        %1052 = vmatprep.subr.bf16.mxu0 0
        %1053 = vmatpush1.bf16.xpose.msra.mxu0 0
        %1054 = vmatprep.subr.bf16.mxu0 0
        %1055 = vmatpush1.bf16.xpose.msra.mxu0 0
        %1056 = vmatprep.mubr.bf16.mxu0 0
        %1057 = vmatmul.mubr.bf16.gmra.mrb[0].mxu0 %v1019
        %v1058 = vpop.f32.mrb[0].mxu0
        %v1059 = vadd.f32 %v878, %v1058
        %v1060 = vpop.f32.mrb[0].mxu0
        %v1061 = vpop.f32.mrb[0].mxu0
        %v1062 = vpop.f32.mrb[0].mxu0
        %1063 = vdwg.mxu0
        %v1064 = vld [vmem:[#allocation2] sm:$0xff]
        %v1065 = vsel %vm879, %v1059, -inf
        %1066 = vmax.xlane.f32.xlu0 %v1065
        %v1067 = vpop.xlane.xlu0 %1066
        %v1068 = vmax.f32 %v1064, %v1067
        %v1069 = vsub.f32 %v1064, %v1068
        %v1070 = vmul.f32 %v1069, 1.442695
        %v1071 = vpow.pop %v1070
        %1073 = vset.pattern.permute.xlu0 1
        %1074 = vperm.xlu0 %1073, %v1068
        %v1075 = vpop.permute.xlu0 %1074
        %v1077 = vsub.f32 %v1059, %v1075
        %v1078 = vmul.f32 %v1077, 1.442695
        %v1079 = vpow.pop %v1078
        %v1080 = vld [vmem:[#allocation3] sm:$0xff]
        %v1081 = vmul.f32 %v1071, %v1080
        %v1082 = vsel %vm879, %v1079, 0.0
        %1083 = vadd.xlane.f32.xlu0 %v1082
        %v1084 = vpop.xlane.xlu0 %1083
        %v1085 = vadd.f32 %v1081, %v1084
        %vm1086 = vcmask 15368
        %1087 = vst.msk [vmem:[#allocation3] sm:$0xff] %vm1086, %v1085
        %v1088 = vld [vmem:[#allocation4] sm:$0xff]
        %1090 = vset.pattern.permute.xlu0 1
        %1091 = vperm.xlu0 %1090, %v1071
        %v1092 = vpop.permute.xlu0 %1091
        %v1094 = vmul.f32 %v1092, %v1088
        %v1095 = vpack.c.bf16 %v1079, %v1079
        %v1097 = vunpack.c.l.b16 %v872
        %v1098 = vpack.c.b16 %v1097, %v1097
        %1099 = vrot.lane.b32.xlu0 %v1098, 120
        %v1100 = vpop.permute.xlu0 %1099
        %v1102 = vsel %vm879, %v1095, 0
        %v1105 = vsel %vm961, %v1100, 0
        %1107 = vmatprep.subr.bf16.mxu0 0
        %1108 = vmatpush1.bf16.msra.mxu0 %v1105
        %1109 = vmatprep.subr.bf16.mxu0 0
        %1110 = vmatpush1.bf16.msra.mxu0 0
        %1111 = vmatprep.subr.bf16.mxu0 0
        %1112 = vmatpush1.bf16.msra.mxu0 0
        %1113 = vmatprep.subr.bf16.mxu0 0
        %1114 = vmatpush1.bf16.msra.mxu0 0
        %1115 = vmatprep.subr.bf16.mxu0 0
        %1116 = vmatpush1.bf16.msra.mxu0 0
        %1117 = vmatprep.subr.bf16.mxu0 0
        %1118 = vmatpush1.bf16.msra.mxu0 0
        %1119 = vmatprep.subr.bf16.mxu0 0
        %1120 = vmatpush1.bf16.msra.mxu0 0
        %1121 = vmatprep.subr.bf16.mxu0 0
        %1122 = vmatpush1.bf16.msra.mxu0 0
        %1123 = vmatprep.subr.bf16.mxu0 0
        %1124 = vmatpush1.bf16.msra.mxu0 0
        %1125 = vmatprep.subr.bf16.mxu0 0
        %1126 = vmatpush1.bf16.msra.mxu0 0
        %1127 = vmatprep.subr.bf16.mxu0 0
        %1128 = vmatpush1.bf16.msra.mxu0 0
        %1129 = vmatprep.subr.bf16.mxu0 0
        %1130 = vmatpush1.bf16.msra.mxu0 0
        %1131 = vmatprep.subr.bf16.mxu0 0
        %1132 = vmatpush1.bf16.msra.mxu0 0
        %1133 = vmatprep.subr.bf16.mxu0 0
        %1134 = vmatpush1.bf16.msra.mxu0 0
        %1135 = vmatprep.subr.bf16.mxu0 0
        %1136 = vmatpush1.bf16.msra.mxu0 0
        %1137 = vmatprep.subr.bf16.mxu0 0
        %1138 = vmatpush1.bf16.msra.mxu0 0
        %1139 = vmatprep.mubr.bf16.mxu0 0
        %1140 = vmatmul.mubr.bf16.gmra.mrb[0].mxu0 %v1102
        %v1141 = vpop.f32.mrb[0].mxu0
        %v1142 = vadd.f32 0.0, %v1141
        %v1143 = vpop.f32.mrb[0].mxu0
        %v1144 = vpop.f32.mrb[0].mxu0
        %v1145 = vpop.f32.mrb[0].mxu0
        %1146 = vdwg.mxu0
        %1148 = vrot.lane.b32.xlu0 %v1142, 8
        %v1149 = vpop.permute.xlu0 %1148
        %v1151 = vadd.f32 %v1094, %v1149
        %vm1152 = vcmask 130112
        %1153 = vst.msk [vmem:[#allocation4] sm:$0xff] %vm1152, %v1151
        %1154 = vst.msk [vmem:[#allocation2] sm:$0xff] %vm1086, %v1068
        %1155 = vrot.lane.b32.xlu0 %v1010, 112
        %v1156 = vpop.permute.xlu0 %1155
        %1157 = vrot.lane.b32.xlu0 %v1015, 112
        %v1158 = vpop.permute.xlu0 %1157
        %v1160 = vsel %vm879, %v1156, 0
        %v1163 = vsel %vm879, %v1158, 0
        %1165 = vmatprep.subr.bf16.mxu0 0
        %1166 = vmatpush1.bf16.xpose.msra.mxu0 %v1163
        %1167 = vmatprep.subr.bf16.mxu0 0
        %1168 = vmatpush1.bf16.xpose.msra.mxu0 0
        %1169 = vmatprep.subr.bf16.mxu0 0
        %1170 = vmatpush1.bf16.xpose.msra.mxu0 0
        %1171 = vmatprep.subr.bf16.mxu0 0
        %1172 = vmatpush1.bf16.xpose.msra.mxu0 0
        %1173 = vmatprep.subr.bf16.mxu0 0
        %1174 = vmatpush1.bf16.xpose.msra.mxu0 0
        %1175 = vmatprep.subr.bf16.mxu0 0
        %1176 = vmatpush1.bf16.xpose.msra.mxu0 0
        %1177 = vmatprep.subr.bf16.mxu0 0
        %1178 = vmatpush1.bf16.xpose.msra.mxu0 0
        %1179 = vmatprep.subr.bf16.mxu0 0
        %1180 = vmatpush1.bf16.xpose.msra.mxu0 0
        %1181 = vmatprep.subr.bf16.mxu0 0
        %1182 = vmatpush1.bf16.xpose.msra.mxu0 0
        %1183 = vmatprep.subr.bf16.mxu0 0
        %1184 = vmatpush1.bf16.xpose.msra.mxu0 0
        %1185 = vmatprep.subr.bf16.mxu0 0
        %1186 = vmatpush1.bf16.xpose.msra.mxu0 0
        %1187 = vmatprep.subr.bf16.mxu0 0
        %1188 = vmatpush1.bf16.xpose.msra.mxu0 0
        %1189 = vmatprep.subr.bf16.mxu0 0
        %1190 = vmatpush1.bf16.xpose.msra.mxu0 0
        %1191 = vmatprep.subr.bf16.mxu0 0
        %1192 = vmatpush1.bf16.xpose.msra.mxu0 0
        %1193 = vmatprep.subr.bf16.mxu0 0
        %1194 = vmatpush1.bf16.xpose.msra.mxu0 0
        %1195 = vmatprep.subr.bf16.mxu0 0
        %1196 = vmatpush1.bf16.xpose.msra.mxu0 0
        %1197 = vmatprep.mubr.bf16.mxu0 0
        %1198 = vmatmul.mubr.bf16.gmra.mrb[0].mxu0 %v1160
        %v1199 = vpop.f32.mrb[0].mxu0
        %v1200 = vadd.f32 %v878, %v1199
        %v1201 = vpop.f32.mrb[0].mxu0
        %v1202 = vpop.f32.mrb[0].mxu0
        %v1203 = vpop.f32.mrb[0].mxu0
        %1204 = vdwg.mxu0
        %v1205 = vld [vmem:[#allocation2] sm:$0xff]
        %v1206 = vsel %vm879, %v1200, -inf
        %1207 = vmax.xlane.f32.xlu0 %v1206
        %v1208 = vpop.xlane.xlu0 %1207
        %v1209 = vmax.f32 %v1205, %v1208
        %v1210 = vsub.f32 %v1205, %v1209
        %v1211 = vmul.f32 %v1210, 1.442695
        %v1212 = vpow.pop %v1211
        %1214 = vset.pattern.permute.xlu0 2
        %1215 = vperm.xlu0 %1214, %v1209
        %v1216 = vpop.permute.xlu0 %1215
        %v1218 = vsub.f32 %v1200, %v1216
        %v1219 = vmul.f32 %v1218, 1.442695
        %v1220 = vpow.pop %v1219
        %v1221 = vld [vmem:[#allocation3] sm:$0xff]
        %v1222 = vmul.f32 %v1212, %v1221
        %v1223 = vsel %vm879, %v1220, 0.0
        %1224 = vadd.xlane.f32.xlu0 %v1223
        %v1225 = vpop.xlane.xlu0 %1224
        %v1226 = vadd.f32 %v1222, %v1225
        %vm1227 = vcmask 23568
        %1228 = vst.msk [vmem:[#allocation3] sm:$0xff] %vm1227, %v1226
        %v1229 = vld [vmem:[#allocation4] sm:$0xff]
        %1231 = vset.pattern.permute.xlu0 2
        %1232 = vperm.xlu0 %1231, %v1212
        %v1233 = vpop.permute.xlu0 %1232
        %v1235 = vmul.f32 %v1233, %v1229
        %v1236 = vpack.c.bf16 %v1220, %v1220
        %1237 = vrot.lane.b32.xlu0 %v1098, 112
        %v1238 = vpop.permute.xlu0 %1237
        %v1240 = vsel %vm879, %v1236, 0
        %v1243 = vsel %vm961, %v1238, 0
        %1245 = vmatprep.subr.bf16.mxu0 0
        %1246 = vmatpush1.bf16.msra.mxu0 %v1243
        %1247 = vmatprep.subr.bf16.mxu0 0
        %1248 = vmatpush1.bf16.msra.mxu0 0
        %1249 = vmatprep.subr.bf16.mxu0 0
        %1250 = vmatpush1.bf16.msra.mxu0 0
        %1251 = vmatprep.subr.bf16.mxu0 0
        %1252 = vmatpush1.bf16.msra.mxu0 0
        %1253 = vmatprep.subr.bf16.mxu0 0
        %1254 = vmatpush1.bf16.msra.mxu0 0
        %1255 = vmatprep.subr.bf16.mxu0 0
        %1256 = vmatpush1.bf16.msra.mxu0 0
        %1257 = vmatprep.subr.bf16.mxu0 0
        %1258 = vmatpush1.bf16.msra.mxu0 0
        %1259 = vmatprep.subr.bf16.mxu0 0
        %1260 = vmatpush1.bf16.msra.mxu0 0
        %1261 = vmatprep.subr.bf16.mxu0 0
        %1262 = vmatpush1.bf16.msra.mxu0 0
        %1263 = vmatprep.subr.bf16.mxu0 0
        %1264 = vmatpush1.bf16.msra.mxu0 0
        %1265 = vmatprep.subr.bf16.mxu0 0
        %1266 = vmatpush1.bf16.msra.mxu0 0
        %1267 = vmatprep.subr.bf16.mxu0 0
        %1268 = vmatpush1.bf16.msra.mxu0 0
        %1269 = vmatprep.subr.bf16.mxu0 0
        %1270 = vmatpush1.bf16.msra.mxu0 0
        %1271 = vmatprep.subr.bf16.mxu0 0
        %1272 = vmatpush1.bf16.msra.mxu0 0
        %1273 = vmatprep.subr.bf16.mxu0 0
        %1274 = vmatpush1.bf16.msra.mxu0 0
        %1275 = vmatprep.subr.bf16.mxu0 0
        %1276 = vmatpush1.bf16.msra.mxu0 0
        %1277 = vmatprep.mubr.bf16.mxu0 0
        %1278 = vmatmul.mubr.bf16.gmra.mrb[0].mxu0 %v1240
        %v1279 = vpop.f32.mrb[0].mxu0
        %v1280 = vadd.f32 0.0, %v1279
        %v1281 = vpop.f32.mrb[0].mxu0
        %v1282 = vpop.f32.mrb[0].mxu0
        %v1283 = vpop.f32.mrb[0].mxu0
        %1284 = vdwg.mxu0
        %1286 = vrot.lane.b32.xlu0 %v1280, 16
        %v1287 = vpop.permute.xlu0 %1286
        %v1289 = vadd.f32 %v1235, %v1287
        %vm1290 = vcmask 195712
        %1291 = vst.msk [vmem:[#allocation4] sm:$0xff] %vm1290, %v1289
        %1292 = vst.msk [vmem:[#allocation2] sm:$0xff] %vm1227, %v1209
        %1293 = vrot.lane.b32.xlu0 %v1010, 104
        %v1294 = vpop.permute.xlu0 %1293
        %1295 = vrot.lane.b32.xlu0 %v1015, 104
        %v1296 = vpop.permute.xlu0 %1295
        %v1298 = vsel %vm879, %v1294, 0
        %v1301 = vsel %vm879, %v1296, 0
        %1303 = vmatprep.subr.bf16.mxu0 0
        %1304 = vmatpush1.bf16.xpose.msra.mxu0 %v1301
        %1305 = vmatprep.subr.bf16.mxu0 0
        %1306 = vmatpush1.bf16.xpose.msra.mxu0 0
        %1307 = vmatprep.subr.bf16.mxu0 0
        %1308 = vmatpush1.bf16.xpose.msra.mxu0 0
        %1309 = vmatprep.subr.bf16.mxu0 0
        %1310 = vmatpush1.bf16.xpose.msra.mxu0 0
        %1311 = vmatprep.subr.bf16.mxu0 0
        %1312 = vmatpush1.bf16.xpose.msra.mxu0 0
        %1313 = vmatprep.subr.bf16.mxu0 0
        %1314 = vmatpush1.bf16.xpose.msra.mxu0 0
        %1315 = vmatprep.subr.bf16.mxu0 0
        %1316 = vmatpush1.bf16.xpose.msra.mxu0 0
        %1317 = vmatprep.subr.bf16.mxu0 0
        %1318 = vmatpush1.bf16.xpose.msra.mxu0 0
        %1319 = vmatprep.subr.bf16.mxu0 0
        %1320 = vmatpush1.bf16.xpose.msra.mxu0 0
        %1321 = vmatprep.subr.bf16.mxu0 0
        %1322 = vmatpush1.bf16.xpose.msra.mxu0 0
        %1323 = vmatprep.subr.bf16.mxu0 0
        %1324 = vmatpush1.bf16.xpose.msra.mxu0 0
        %1325 = vmatprep.subr.bf16.mxu0 0
        %1326 = vmatpush1.bf16.xpose.msra.mxu0 0
        %1327 = vmatprep.subr.bf16.mxu0 0
        %1328 = vmatpush1.bf16.xpose.msra.mxu0 0
        %1329 = vmatprep.subr.bf16.mxu0 0
        %1330 = vmatpush1.bf16.xpose.msra.mxu0 0
        %1331 = vmatprep.subr.bf16.mxu0 0
        %1332 = vmatpush1.bf16.xpose.msra.mxu0 0
        %1333 = vmatprep.subr.bf16.mxu0 0
        %1334 = vmatpush1.bf16.xpose.msra.mxu0 0
        %1335 = vmatprep.mubr.bf16.mxu0 0
        %1336 = vmatmul.mubr.bf16.gmra.mrb[0].mxu0 %v1298
        %v1337 = vpop.f32.mrb[0].mxu0
        %v1338 = vadd.f32 %v878, %v1337
        %v1339 = vpop.f32.mrb[0].mxu0
        %v1340 = vpop.f32.mrb[0].mxu0
        %v1341 = vpop.f32.mrb[0].mxu0
        %1342 = vdwg.mxu0
        %v1343 = vld [vmem:[#allocation2] sm:$0xff]
        %v1344 = vsel %vm879, %v1338, -inf
        %1345 = vmax.xlane.f32.xlu0 %v1344
        %v1346 = vpop.xlane.xlu0 %1345
        %v1347 = vmax.f32 %v1343, %v1346
        %v1348 = vsub.f32 %v1343, %v1347
        %v1349 = vmul.f32 %v1348, 1.442695
        %v1350 = vpow.pop %v1349
        %1352 = vset.pattern.permute.xlu0 3
        %1353 = vperm.xlu0 %1352, %v1347
        %v1354 = vpop.permute.xlu0 %1353
        %v1356 = vsub.f32 %v1338, %v1354
        %v1357 = vmul.f32 %v1356, 1.442695
        %v1358 = vpow.pop %v1357
        %v1359 = vld [vmem:[#allocation3] sm:$0xff]
        %v1360 = vmul.f32 %v1350, %v1359
        %v1361 = vsel %vm879, %v1358, 0.0
        %1362 = vadd.xlane.f32.xlu0 %v1361
        %v1363 = vpop.xlane.xlu0 %1362
        %v1364 = vadd.f32 %v1360, %v1363
        %vm1365 = vcmask 31768
        %1366 = vst.msk [vmem:[#allocation3] sm:$0xff] %vm1365, %v1364
        %v1367 = vld [vmem:[#allocation4] sm:$0xff]
        %1369 = vset.pattern.permute.xlu0 3
        %1370 = vperm.xlu0 %1369, %v1350
        %v1371 = vpop.permute.xlu0 %1370
        %v1373 = vmul.f32 %v1371, %v1367
        %v1374 = vpack.c.bf16 %v1358, %v1358
        %1375 = vrot.lane.b32.xlu0 %v1098, 104
        %v1376 = vpop.permute.xlu0 %1375
        %v1378 = vsel %vm879, %v1374, 0
        %v1381 = vsel %vm961, %v1376, 0
        %1383 = vmatprep.subr.bf16.mxu0 0
        %1384 = vmatpush1.bf16.msra.mxu0 %v1381
        %1385 = vmatprep.subr.bf16.mxu0 0
        %1386 = vmatpush1.bf16.msra.mxu0 0
        %1387 = vmatprep.subr.bf16.mxu0 0
        %1388 = vmatpush1.bf16.msra.mxu0 0
        %1389 = vmatprep.subr.bf16.mxu0 0
        %1390 = vmatpush1.bf16.msra.mxu0 0
        %1391 = vmatprep.subr.bf16.mxu0 0
        %1392 = vmatpush1.bf16.msra.mxu0 0
        %1393 = vmatprep.subr.bf16.mxu0 0
        %1394 = vmatpush1.bf16.msra.mxu0 0
        %1395 = vmatprep.subr.bf16.mxu0 0
        %1396 = vmatpush1.bf16.msra.mxu0 0
        %1397 = vmatprep.subr.bf16.mxu0 0
        %1398 = vmatpush1.bf16.msra.mxu0 0
        %1399 = vmatprep.subr.bf16.mxu0 0
        %1400 = vmatpush1.bf16.msra.mxu0 0
        %1401 = vmatprep.subr.bf16.mxu0 0
        %1402 = vmatpush1.bf16.msra.mxu0 0
        %1403 = vmatprep.subr.bf16.mxu0 0
        %1404 = vmatpush1.bf16.msra.mxu0 0
        %1405 = vmatprep.subr.bf16.mxu0 0
        %1406 = vmatpush1.bf16.msra.mxu0 0
        %1407 = vmatprep.subr.bf16.mxu0 0
        %1408 = vmatpush1.bf16.msra.mxu0 0
        %1409 = vmatprep.subr.bf16.mxu0 0
        %1410 = vmatpush1.bf16.msra.mxu0 0
        %1411 = vmatprep.subr.bf16.mxu0 0
        %1412 = vmatpush1.bf16.msra.mxu0 0
        %1413 = vmatprep.subr.bf16.mxu0 0
        %1414 = vmatpush1.bf16.msra.mxu0 0
        %1415 = vmatprep.mubr.bf16.mxu0 0
        %1416 = vmatmul.mubr.bf16.gmra.mrb[0].mxu0 %v1378
        %v1417 = vpop.f32.mrb[0].mxu0
        %v1418 = vadd.f32 0.0, %v1417
        %v1419 = vpop.f32.mrb[0].mxu0
        %v1420 = vpop.f32.mrb[0].mxu0
        %v1421 = vpop.f32.mrb[0].mxu0
        %1422 = vdwg.mxu0
        %1424 = vrot.lane.b32.xlu0 %v1418, 24
        %v1425 = vpop.permute.xlu0 %1424
        %v1427 = vadd.f32 %v1373, %v1425
        %vm1428 = vcmask 261312
        %1429 = vst.msk [vmem:[#allocation4] sm:$0xff] %vm1428, %v1427
        %1430 = vst.msk [vmem:[#allocation2] sm:$0xff] %vm1365, %v1347
      $region44: #{_lambda_.10} parent=31 // pred_fallthru
        _
      // Predicated region
      $region45: #{_lambda_.10} parent=31 // pred_check
        %p1431 = pneg %p296
      $region46: #{_lambda_.10} parent=31 // pred_check_branch
        %1433 = sbr.rel (%p1431) target = $region48
      $region47: #{_lambda_.10} parent=31 // pred_region
        %v1434 = vld [vmem:[#allocation3] sm:$0xff]
        %v1435 = vrcp.pop %v1434
        %v1436 = vld [vmem:[#allocation4] sm:$0xff]
        %1438 = vset.pattern.permute.xlu0 0
        %1439 = vperm.xlu0 %1438, %v1435
        %v1440 = vpop.permute.xlu0 %1439
        %v1442 = vmul.f32 %v1436, %v1440
        %1443 = vset.pattern.permute.xlu0 1
        %1444 = vperm.xlu0 %1443, %v1435
        %v1445 = vpop.permute.xlu0 %1444
        %v1447 = vmul.f32 %v1436, %v1445
        %1448 = vset.pattern.permute.xlu0 2
        %1449 = vperm.xlu0 %1448, %v1435
        %v1450 = vpop.permute.xlu0 %1449
        %v1452 = vmul.f32 %v1436, %v1450
        %1453 = vset.pattern.permute.xlu0 3
        %1454 = vperm.xlu0 %1453, %v1435
        %v1455 = vpop.permute.xlu0 %1454
        %v1457 = vmul.f32 %v1436, %v1455
        %vm1458 = vcmask 64512
        %v1459 = vsel %vm1458, %v1442, %v1447
        %vm1460 = vcmask 130048
        %v1461 = vsel %vm1460, %v1459, %v1452
        %vm1462 = vcmask 195584
        %v1463 = vsel %vm1462, %v1461, %v1457
        %v1464 = vpack.c.bf16 %v1463, %v1463
        %vm1465 = vcmask 257024
        %1466 = vst.msk [vmem:[%s293] sm:$0xf] %vm1465, %v1464
      $region48: #{_lambda_.10} parent=31 // pred_fallthru
        _
      %p1467 = scmp.lt.s32.totalorder %s19, 1
      %s1468 = scalar_select %p1467, %s19, 1
      %p1469 = scmp.lt.s32.totalorder %s20, 0
      %s1470 = scalar_select %p1469, %s20, 0
      %s1471 = sadd.s32 %s1470, %s1468
      %s1472 = smul.addr %s1471, 4
      %s1473 = scalar_lea.vmem %s3, %s1472
      // Predicated region
      $region49: #{_lambda_.10} parent=31 // pred_check
        %p1474 = pneg %p145
      $region50: #{_lambda_.10} parent=31 // pred_check_branch
        %1476 = sbr.rel (%p1474) target = $region52
      $region51: #{_lambda_.10} parent=31 // pred_region
        _
      $region52: #{_lambda_.10} parent=31 // pred_fallthru
        _
    $region32: #{_lambda_.10} parent=5 // pred_fallthru
      _
    %p1477 = scmp.le.s32.totalorder 2, %s9
    // Predicated region
    $region53: #{_lambda_.10} parent=5 // pred_check
      %p1478 = pneg %p1477
    $region54: #{_lambda_.10} parent=5 // pred_check_branch
      %1480 = sbr.rel (%p1478) target = $region56
    $region55: #{_lambda_.10} parent=5 // pred_region
      %s1481 = ssub.s32 %s9, 2
      // Predicated region
      $region57: #{_lambda_.10} parent=55 // pred_check
        %p1482 = pneg %p151
      $region58: #{_lambda_.10} parent=55 // pred_check_branch
        %1484 = sbr.rel (%p1482) target = $region60
      $region59: #{_lambda_.10} parent=55 // pred_region
        %p1485 = scmp.lt.s32.totalorder %s22, 1
        %s1486 = scalar_select %p1485, %s22, 1
        %p1487 = scmp.lt.s32.totalorder %s23, 0
        %s1488 = scalar_select %p1487, %s23, 0
        %s1489 = sadd.s32 %s1488, %s1486
        %s1490 = smul.addr %s1489, 4
        %s1491 = scalar_lea.vmem %s3, %s1490
      $region60: #{_lambda_.10} parent=55 // pred_fallthru
        _
    $region56: #{_lambda_.10} parent=5 // pred_fallthru
      _
  $region6: #{_lambda_.10} parent=0 // loop_footer
    %s13 = sadd.s32 1, %s9
  $region7: #{_lambda_.10} parent=0 // loop_footer_branch
    %8 = sbr.rel target = $region3
  $region8: #{_lambda_.10} parent=0 // loop_exit
    _

// kernel: _lambda_.17
$region0: #{_lambda_.17}
  #allocation0 [shape = 'u32[]', space=smem, size = 0x4, offset = 0x4, fixed_abs, tag = 'smem constant byte address 0x4 - core index']
  #allocation1 [shape = 'u32[144,128]{1,0:T(1,128)}', space=vmem, size = 0x12000, scoped, tag = 'internal scratch']
  %s0 = inlined_call_operand.vmem [shape: bf16[16,32], index: 0, kind: input, shape index: {}]
  %s1 = inlined_call_operand.vmem [shape: f32[1,32], index: 1, kind: input, shape index: {}]
  %s2 = inlined_call_operand.vmem [shape: f32[1,32], index: 2, kind: input, shape index: {}]
  %s3 = inlined_call_operand.vmem [shape: bf16[256,32], index: 3, kind: input, shape index: {}]
  %s4 = inlined_call_operand.hbm [shape: f32[16,256], index: 4, kind: output, shape index: {}]
  %s5 = sld [smem:[#allocation0]]
  $region26: #{_lambda_.17} parent=0
    _
  %s7 = ssub.s32 1, %s5
  %s8 = scalar_select 0, %s7, %s5
  $region1: #{_lambda_.17} parent=0
    #allocation2 [shape = 'u8[16384]{0}', space=vmem, size = 0x4000, scoped, tag = 'output window, operand 0, single buffered']
    #allocation3 [shape = 's32[1]{0}', space=sflag, size = 0x4, scoped, tag = 'scoped memory for _lambda_.17']
    %9 = vsyncpa [#allocation3], 0
    // Predicated region
    $region2: #{_lambda_.17} parent=1 // pred_check
      _
    $region3: #{_lambda_.17} parent=1 // pred_check_branch
      %11 = sbr.rel (0) target = $region5
    $region4: #{_lambda_.17} parent=1 // pred_region
      _
    $region5: #{_lambda_.17} parent=1 // pred_fallthru
      _
    // Predicated region
    $region6: #{_lambda_.17} parent=1 // pred_check
      _
    $region7: #{_lambda_.17} parent=1 // pred_check_branch
      %13 = sbr.rel (0) target = $region9
    $region8: #{_lambda_.17} parent=1 // pred_region
      _
    $region9: #{_lambda_.17} parent=1 // pred_fallthru
      _
    // Predicated region
    $region10: #{_lambda_.17} parent=1 // pred_check
      _
    $region11: #{_lambda_.17} parent=1 // pred_check_branch
      %15 = sbr.rel (0) target = $region13
    $region12: #{_lambda_.17} parent=1 // pred_region
      _
    $region13: #{_lambda_.17} parent=1 // pred_fallthru
      _
    // Predicated region
    $region14: #{_lambda_.17} parent=1 // pred_check
      _
    $region15: #{_lambda_.17} parent=1 // pred_check_branch
      %17 = sbr.rel (0) target = $region17
    $region16: #{_lambda_.17} parent=1 // pred_region
      _
    $region17: #{_lambda_.17} parent=1 // pred_fallthru
      _
    %v19 = vld [vmem:[%s0] sm:$0xf]
    %v20 = vld [vmem:[%s0 + $0x4] sm:$0xf]
    %v21 = vunpack.c.l.bf16 %v19
    %v22 = vunpack.c.l.bf16 %v20
    %v23 = vld [vmem:[%s1] sm:$0x1]
    %v24 = vld [vmem:[%s2] sm:$0x1]
    %vm25 = vcmask 261120
    %v26 = vsel %vm25, %v21, 0.0
    %27 = vadd.xlane.f32.xlu0 %v26
    %v28 = vpop.xlane.xlu0 %27
    %v29 = vsel %vm25, %v22, 0.0
    %30 = vadd.xlane.f32.xlu0 %v29
    %v31 = vpop.xlane.xlu0 %30
    %v32 = vrcp.pop 32.0
    %v33 = vmul.f32 %v28, %v32
    %v34 = vmul.f32 %v31, %v32
    %v35 = vsub.f32 %v21, %v33
    %v36 = vsub.f32 %v22, %v34
    %v37 = vmul.f32 %v35, %v35
    %v38 = vmul.f32 %v36, %v36
    %v39 = vsel %vm25, %v37, 0.0
    %40 = vadd.xlane.f32.xlu0 %v39
    %v41 = vpop.xlane.xlu0 %40
    %v42 = vsel %vm25, %v38, 0.0
    %43 = vadd.xlane.f32.xlu0 %v42
    %v44 = vpop.xlane.xlu0 %43
    %v45 = vmul.f32 %v41, %v32
    %v46 = vmul.f32 %v44, %v32
    %v47 = vadd.f32 %v45, 1e-05
    %v48 = vadd.f32 %v46, 1e-05
    %v49 = vrsqrt.pop %v47
    %v50 = vrsqrt.pop %v48
    %v51 = vmul.f32 %v35, %v49
    %v52 = vmul.f32 %v36, %v50
    %v54 = vlaneseq
    %v55 = vshrl.u32 %v54, 7
    %v56 = vsub.s32 0, %v55
    %v57 = vrot.slane %v23, %v56
    %v59 = vmul.f32 %v51, %v57
    %v60 = vmul.f32 %v52, %v57
    %v62 = vlaneseq
    %v63 = vshrl.u32 %v62, 7
    %v64 = vsub.s32 0, %v63
    %v65 = vrot.slane %v24, %v64
    %v67 = vadd.f32 %v59, %v65
    %v68 = vadd.f32 %v60, %v65
    %v69 = vpack.c.bf16 %v68, %v67
    %v70 = vld [vmem:[%s3] sm:$0xf]
    %v71 = vld [vmem:[%s3 + $0x4] sm:$0xf]
    %v72 = vld [vmem:[%s3 + $0x8] sm:$0xf]
    %v73 = vld [vmem:[%s3 + $0xc] sm:$0xf]
    %v74 = vld [vmem:[%s3 + $0x10] sm:$0xf]
    %v75 = vld [vmem:[%s3 + $0x14] sm:$0xf]
    %v76 = vld [vmem:[%s3 + $0x18] sm:$0xf]
    %v77 = vld [vmem:[%s3 + $0x1c] sm:$0xf]
    %v78 = vld [vmem:[%s3 + $0x20] sm:$0xf]
    %v79 = vld [vmem:[%s3 + $0x24] sm:$0xf]
    %v80 = vld [vmem:[%s3 + $0x28] sm:$0xf]
    %v81 = vld [vmem:[%s3 + $0x2c] sm:$0xf]
    %v82 = vld [vmem:[%s3 + $0x30] sm:$0xf]
    %v83 = vld [vmem:[%s3 + $0x34] sm:$0xf]
    %v84 = vld [vmem:[%s3 + $0x38] sm:$0xf]
    %v85 = vld [vmem:[%s3 + $0x3c] sm:$0xf]
    %v86 = vld [vmem:[%s3 + $0x40] sm:$0xf]
    %v87 = vld [vmem:[%s3 + $0x44] sm:$0xf]
    %v88 = vld [vmem:[%s3 + $0x48] sm:$0xf]
    %v89 = vld [vmem:[%s3 + $0x4c] sm:$0xf]
    %v90 = vld [vmem:[%s3 + $0x50] sm:$0xf]
    %v91 = vld [vmem:[%s3 + $0x54] sm:$0xf]
    %v92 = vld [vmem:[%s3 + $0x58] sm:$0xf]
    %v93 = vld [vmem:[%s3 + $0x5c] sm:$0xf]
    %v94 = vld [vmem:[%s3 + $0x60] sm:$0xf]
    %v95 = vld [vmem:[%s3 + $0x64] sm:$0xf]
    %v96 = vld [vmem:[%s3 + $0x68] sm:$0xf]
    %v97 = vld [vmem:[%s3 + $0x6c] sm:$0xf]
    %v98 = vld [vmem:[%s3 + $0x70] sm:$0xf]
    %v99 = vld [vmem:[%s3 + $0x74] sm:$0xf]
    %v100 = vld [vmem:[%s3 + $0x78] sm:$0xf]
    %v101 = vld [vmem:[%s3 + $0x7c] sm:$0xf]
    %v134 = vunpack.c.l.b16 %v70
    %v135 = vunpack.c.l.b16 %v71
    %v136 = vunpack.c.l.b16 %v72
    %v137 = vunpack.c.l.b16 %v73
    %v138 = vunpack.c.l.b16 %v74
    %v139 = vunpack.c.l.b16 %v75
    %v140 = vunpack.c.l.b16 %v76
    %v141 = vunpack.c.l.b16 %v77
    %v142 = vunpack.c.l.b16 %v78
    %v143 = vunpack.c.l.b16 %v79
    %v144 = vunpack.c.l.b16 %v80
    %v145 = vunpack.c.l.b16 %v81
    %v146 = vunpack.c.l.b16 %v82
    %v147 = vunpack.c.l.b16 %v83
    %v148 = vunpack.c.l.b16 %v84
    %v149 = vunpack.c.l.b16 %v85
    %v150 = vunpack.c.l.b16 %v86
    %v151 = vunpack.c.l.b16 %v87
    %v152 = vunpack.c.l.b16 %v88
    %v153 = vunpack.c.l.b16 %v89
    %v154 = vunpack.c.l.b16 %v90
    %v155 = vunpack.c.l.b16 %v91
    %v156 = vunpack.c.l.b16 %v92
    %v157 = vunpack.c.l.b16 %v93
    %v158 = vunpack.c.l.b16 %v94
    %v159 = vunpack.c.l.b16 %v95
    %v160 = vunpack.c.l.b16 %v96
    %v161 = vunpack.c.l.b16 %v97
    %v162 = vunpack.c.l.b16 %v98
    %v163 = vunpack.c.l.b16 %v99
    %v164 = vunpack.c.l.b16 %v100
    %v165 = vunpack.c.l.b16 %v101
    %v166 = vpack.c.b16 %v135, %v134
    %v167 = vpack.c.b16 %v137, %v136
    %v168 = vpack.c.b16 %v139, %v138
    %v169 = vpack.c.b16 %v141, %v140
    %v170 = vpack.c.b16 %v143, %v142
    %v171 = vpack.c.b16 %v145, %v144
    %v172 = vpack.c.b16 %v147, %v146
    %v173 = vpack.c.b16 %v149, %v148
    %v174 = vpack.c.b16 %v151, %v150
    %v175 = vpack.c.b16 %v153, %v152
    %v176 = vpack.c.b16 %v155, %v154
    %v177 = vpack.c.b16 %v157, %v156
    %v178 = vpack.c.b16 %v159, %v158
    %v179 = vpack.c.b16 %v161, %v160
    %v180 = vpack.c.b16 %v163, %v162
    %v181 = vpack.c.b16 %v165, %v164
    %v183 = vsel %vm25, %v69, 0
    %v186 = vsel %vm25, %v166, 0
    %v189 = vsel %vm25, %v167, 0
    %v192 = vsel %vm25, %v168, 0
    %v195 = vsel %vm25, %v169, 0
    %v198 = vsel %vm25, %v170, 0
    %v201 = vsel %vm25, %v171, 0
    %v204 = vsel %vm25, %v172, 0
    %v207 = vsel %vm25, %v173, 0
    %v210 = vsel %vm25, %v174, 0
    %v213 = vsel %vm25, %v175, 0
    %v216 = vsel %vm25, %v176, 0
    %v219 = vsel %vm25, %v177, 0
    %v222 = vsel %vm25, %v178, 0
    %v225 = vsel %vm25, %v179, 0
    %v228 = vsel %vm25, %v180, 0
    %v231 = vsel %vm25, %v181, 0
    %233 = vmatprep.subr.bf16.mxu0 0
    %234 = vmatpush1.bf16.xpose.msra.mxu0 %v186
    %235 = vmatprep.subr.bf16.mxu0 0
    %236 = vmatpush1.bf16.xpose.msra.mxu0 %v189
    %237 = vmatprep.subr.bf16.mxu0 0
    %238 = vmatpush1.bf16.xpose.msra.mxu0 %v192
    %239 = vmatprep.subr.bf16.mxu0 0
    %240 = vmatpush1.bf16.xpose.msra.mxu0 %v195
    %241 = vmatprep.subr.bf16.mxu0 0
    %242 = vmatpush1.bf16.xpose.msra.mxu0 %v198
    %243 = vmatprep.subr.bf16.mxu0 0
    %244 = vmatpush1.bf16.xpose.msra.mxu0 %v201
    %245 = vmatprep.subr.bf16.mxu0 0
    %246 = vmatpush1.bf16.xpose.msra.mxu0 %v204
    %247 = vmatprep.subr.bf16.mxu0 0
    %248 = vmatpush1.bf16.xpose.msra.mxu0 %v207
    %249 = vmatprep.subr.bf16.mxu0 0
    %250 = vmatpush1.bf16.xpose.msra.mxu0 %v210
    %251 = vmatprep.subr.bf16.mxu0 0
    %252 = vmatpush1.bf16.xpose.msra.mxu0 %v213
    %253 = vmatprep.subr.bf16.mxu0 0
    %254 = vmatpush1.bf16.xpose.msra.mxu0 %v216
    %255 = vmatprep.subr.bf16.mxu0 0
    %256 = vmatpush1.bf16.xpose.msra.mxu0 %v219
    %257 = vmatprep.subr.bf16.mxu0 0
    %258 = vmatpush1.bf16.xpose.msra.mxu0 %v222
    %259 = vmatprep.subr.bf16.mxu0 0
    %260 = vmatpush1.bf16.xpose.msra.mxu0 %v225
    %261 = vmatprep.subr.bf16.mxu0 0
    %262 = vmatpush1.bf16.xpose.msra.mxu0 %v228
    %263 = vmatprep.subr.bf16.mxu0 0
    %264 = vmatpush1.bf16.xpose.msra.mxu0 %v231
    %265 = vmatprep.mubr.bf16.mxu0 0
    %266 = vmatmul.mubr.bf16.gmra.mrb[0].mxu0 %v183
    %v267 = vpop.f32.mrb[0].mxu0
    %v268 = vadd.f32 0.0, %v267
    %v269 = vpop.f32.mrb[0].mxu0
    %v270 = vadd.f32 0.0, %v269
    %v271 = vpop.f32.mrb[0].mxu0
    %v272 = vadd.f32 0.0, %v271
    %v273 = vpop.f32.mrb[0].mxu0
    %v274 = vadd.f32 0.0, %v273
    %275 = vdwg.mxu0
    %276 = vst [vmem:[#allocation2] sm:$0xff] %v268
    %277 = vst [vmem:[#allocation2 + $0x8] sm:$0xff] %v270
    %278 = vst [vmem:[#allocation2 + $0x10] sm:$0xff] %v272
    %279 = vst [vmem:[#allocation2 + $0x18] sm:$0xff] %v274
    // Predicated region
    $region18: #{_lambda_.17} parent=1 // pred_check
      _
    $region19: #{_lambda_.17} parent=1 // pred_check_branch
      %281 = sbr.rel (0) target = $region21
    $region20: #{_lambda_.17} parent=1 // pred_region
      %s283 = ssub.s32 512, 512
      %284 = vsyncadd [#allocation3], %s283
      %s285 = sshll.u32 [#allocation2], 4
      %s286 = int_to_ptr.vmem [resolvable:$true] %s285
      %291 = dma.vmem_to_hbm [thread:$0]  %s286, 512, %s4, [#allocation3], 256, 256, 16
    $region21: #{_lambda_.17} parent=1 // pred_fallthru
      _
    // Predicated region
    $region22: #{_lambda_.17} parent=1 // pred_check
      _
    $region23: #{_lambda_.17} parent=1 // pred_check_branch
      %293 = sbr.rel (0) target = $region25
    $region24: #{_lambda_.17} parent=1 // pred_region
      %294 = dma.done [#allocation3], 512
    $region25: #{_lambda_.17} parent=1 // pred_fallthru
      _
    %295 = vsyncpa [#allocation3], 1

</llo_original>
